<compile_context>
chip_gen: v7x
topology: tpu7x:2x2x1
jax: 0.10.0
libtpu: 0.0.40
codegen_flags: <defaults>
</compile_context>

<pallas_src>
import functools

import jax
import jax.numpy as jnp
from jax import lax
from jax.experimental import pallas as pl
from jax.experimental.pallas import tpu as pltpu


def _bottleneck_kernel(x_ref, w1_ref, s1_ref, b1_ref,
                       w2_ref, s2_ref, b2_ref,
                       w3_ref, s3_ref, b3_ref,
                       o_ref, h1p_ref,
                       *, W, Wp, P, d, TH, T):
    """Fused bottleneck for one (image, row-tile) grid step.

    x_ref   : (H*Wp, Cin)  f32   width-padded flat NHWC image (resident per n)
    w1_ref  : (Cin, P)     bf16
    w2_ref  : (9, P, P)    bf16  one matmul matrix per 3x3 tap (HWIO order)
    w3_ref  : (P, Cout)    bf16
    s*/b*   : (1, C)       f32   folded BatchNorm scale / bias
    o_ref   : (TH*Wp, Cout) f32  output row tile (width-padded grid)
    h1p_ref : ((H+2d)*Wp + Wp, P) f32  zero-padded h1 scratch (persists over t)
    """
    t = pl.program_id(1)
    chunk = TH * Wp                           # rows handled per grid step

    # ---- Stage 1 (once per image): conv1(1x1) + bn1 + relu into the padded
    # h1 scratch.  Chunked to bound live vector-register pressure.
    @pl.when(t == 0)
    def _stage1():
        h1p_ref[...] = jnp.zeros_like(h1p_ref)          # conv2 zero padding
        # columns >= W of the width-padded row layout are padding -> force 0
        col = lax.broadcasted_iota(jnp.int32, (chunk, 1), 0) % Wp
        keep = col < W
        w1 = w1_ref[...]
        s1 = s1_ref[...]
        b1 = b1_ref[...]
        for c in range(T):
            xs = x_ref[c * chunk:(c + 1) * chunk, :]
            h1 = jnp.dot(xs.astype(jnp.bfloat16), w1,
                         preferred_element_type=jnp.float32)
            h1 = jnp.maximum(h1 * s1 + b1, 0.0)
            h1 = jnp.where(keep, h1, 0.0)
            lo = d * Wp + d + c * chunk                 # shift into padded grid
            h1p_ref[lo:lo + chunk, :] = h1

    # ---- Stage 2 + 3 for this row tile:
    # 3x3 dilated conv == 9 accumulated MXU matmuls over shifted contiguous
    # slices of the padded h1 scratch, then bn2+relu, conv3(1x1), bn3,
    # residual add, relu.
    base = pl.multiple_of(t * chunk, 8)
    acc = jnp.zeros((chunk, P), jnp.float32)
    for k in range(9):
        kh, kw = divmod(k, 3)
        off = base + (kh * d) * Wp + kw * d
        tap = h1p_ref[pl.ds(off, chunk), :]
        acc = acc + jnp.dot(tap.astype(jnp.bfloat16), w2_ref[k],
                            preferred_element_type=jnp.float32)
    h2 = jnp.maximum(acc * s2_ref[...] + b2_ref[...], 0.0)
    h3 = jnp.dot(h2.astype(jnp.bfloat16), w3_ref[...],
                 preferred_element_type=jnp.float32)
    h3 = h3 * s3_ref[...] + b3_ref[...]
    res = x_ref[pl.ds(base, chunk), :]                  # identity residual, f32
    o_ref[...] = jnp.maximum(h3 + res, 0.0).astype(o_ref.dtype)


def bottleneck_forward(x_nchw, params, *, stride=1, dilation=1,
                       block_rows=None):
    """Bottleneck forward, NCHW in / NCHW out, matching the torch module."""
    # TODO(synk): stride>1 / downsample branch not implemented (identity path).
    assert stride == 1
    N, Cin, H, W = x_nchw.shape
    P = params["w1"].shape[1]
    Cout = params["w3"].shape[1]
    assert Cin == Cout                         # identity residual
    d = int(dilation)
    Wp = W + 2 * d
    Hp = H + 2 * d
    HWp = H * Wp

    # Pick the row tile: TH output rows per grid step; TH*Wp must be
    # sublane-aligned (multiple of 8) unless it equals the full dim.
    if block_rows is None:
        block_rows = max(1, 4096 // Wp)        # ~4K pixel-rows per tile
    TH = 0
    for cand in range(1, H + 1):
        if H % cand == 0 and cand <= block_rows and (cand * Wp) % 8 == 0:
            TH = cand
    if TH == 0:
        TH = H                                 # fall back: single row tile
    T = H // TH
    chunk = TH * Wp

    # NCHW -> width-padded flat NHWC (pad/reshape fuse with the transpose).
    x = jnp.transpose(x_nchw, (0, 2, 3, 1)).astype(jnp.float32)
    x = jnp.pad(x, ((0, 0), (0, 0), (0, 2 * d), (0, 0)))
    x = x.reshape(N, HWp, Cin)

    # bf16 matmul operands (f32 accumulation inside the kernel).
    w1 = params["w1"].astype(jnp.bfloat16)
    w2 = params["w2"].astype(jnp.bfloat16)
    w3 = params["w3"].astype(jnp.bfloat16)

    kernel = functools.partial(_bottleneck_kernel,
                               W=W, Wp=Wp, P=P, d=d, TH=TH, T=T)

    wbytes = 2 * (Cin * P + 9 * P * P + P * Cout)
    cost = pl.CostEstimate(
        flops=2 * N * HWp * (Cin * P + 9 * P * P + P * Cout),
        transcendentals=0,
        bytes_accessed=int(4 * N * HWp * (Cin + Cout) + wbytes
                           + 4 * (4 * P + 2 * Cout)),
    )

    const2 = lambda n, t: (0, 0)
    out_flat = pl.pallas_call(
        kernel,
        out_shape=jax.ShapeDtypeStruct((N, HWp, Cout), jnp.float32),
        grid=(N, T),
        in_specs=[
            pl.BlockSpec((None, HWp, Cin), lambda n, t: (n, 0, 0)),  # x
            pl.BlockSpec((Cin, P), const2),                          # w1
            pl.BlockSpec((1, P), const2),                            # s1
            pl.BlockSpec((1, P), const2),                            # b1
            pl.BlockSpec((9, P, P), lambda n, t: (0, 0, 0)),         # w2
            pl.BlockSpec((1, P), const2),                            # s2
            pl.BlockSpec((1, P), const2),                            # b2
            pl.BlockSpec((P, Cout), const2),                         # w3
            pl.BlockSpec((1, Cout), const2),                         # s3
            pl.BlockSpec((1, Cout), const2),                         # b3
        ],
        out_specs=pl.BlockSpec((None, chunk, Cout), lambda n, t: (n, t, 0)),
        scratch_shapes=[pltpu.VMEM((Hp * Wp + Wp, P), jnp.float32)],
        compiler_params=pltpu.CompilerParams(
            dimension_semantics=("parallel", "arbitrary"),
            vmem_limit_bytes=64 * 1024 * 1024),
        cost_estimate=cost,
    )(x, w1, params["s1"], params["b1"], w2, params["s2"], params["b2"],
      w3, params["s3"], params["b3"])

    # Drop the width padding and go back to NCHW.
    out = out_flat.reshape(N, H, Wp, Cout)[:, :, :W, :]
    return jnp.transpose(out, (0, 3, 1, 2))


def _fold_bn(gamma, beta, mean, var, eps=1e-5):
    scale = gamma / jnp.sqrt(var + eps)
    bias = beta - mean * scale
    return scale[None, :], bias[None, :]


def init_params(key, inplanes, planes):
    expansion = 4
    ks = jax.random.split(key, 15)

    def bn(k0, k1, k2, k3, c):
        gamma = jax.random.uniform(k0, (c,), jnp.float32, 0.5, 1.5)
        beta = 0.1 * jax.random.normal(k1, (c,), jnp.float32)
        mean = 0.1 * jax.random.normal(k2, (c,), jnp.float32)
        var = jax.random.uniform(k3, (c,), jnp.float32, 0.5, 1.5)
        return _fold_bn(gamma, beta, mean, var)

    w1 = 0.1 * jax.random.normal(ks[0], (inplanes, planes), jnp.float32)
    s1, b1 = bn(ks[1], ks[2], ks[3], ks[4], planes)
    w2_hwio = 0.1 * jax.random.normal(ks[5], (3, 3, planes, planes), jnp.float32)
    s2, b2 = bn(ks[6], ks[7], ks[8], ks[9], planes)
    w3 = 0.1 * jax.random.normal(ks[10], (planes, planes * expansion), jnp.float32)
    s3, b3 = bn(ks[11], ks[12], ks[13], ks[14], planes * expansion)
    return dict(w1=w1, s1=s1, b1=b1,
                w2=w2_hwio.reshape(9, planes, planes), w2_hwio=w2_hwio,
                s2=s2, b2=b2, w3=w3, s3=s3, b3=b3)


def bottleneck_reference(x_nchw, params, *, stride=1, dilation=1):
    """Plain-JAX f32 reference of the torch forward (eval-mode BN)."""
    x = jnp.transpose(x_nchw, (0, 2, 3, 1)).astype(jnp.float32)
    h = jnp.einsum("nhwc,cd->nhwd", x, params["w1"])
    h = jnp.maximum(h * params["s1"][0] + params["b1"][0], 0.0)
    h = lax.conv_general_dilated(
        h, params["w2_hwio"], window_strides=(stride, stride),
        padding=[(dilation, dilation), (dilation, dilation)],
        rhs_dilation=(dilation, dilation),
        dimension_numbers=("NHWC", "HWIO", "NHWC"))
    h = jnp.maximum(h * params["s2"][0] + params["b2"][0], 0.0)
    h = jnp.einsum("nhwc,cd->nhwd", h, params["w3"])
    h = h * params["s3"][0] + params["b3"][0]
    h = jnp.maximum(h + x, 0.0)
    return jnp.transpose(h, (0, 3, 1, 2))


if __name__ == "__main__":
    key = jax.random.PRNGKey(0)
    kx, kp = jax.random.split(key)

    inplanes, planes = 16, 4      # inplanes == planes*expansion (downsample=None)
    N, H, W = 2, 16, 16
    x = jax.random.normal(kx, (N, inplanes, H, W), jnp.float32)
    params = init_params(kp, inplanes, planes)

    # block_rows=8 -> 2 row tiles per image, so the row-tiled grid path is
    # actually exercised (grid = (2, 2)).
    fwd = jax.jit(functools.partial(bottleneck_forward,
                                    stride=1, dilation=1, block_rows=8))
    out = jax.block_until_ready(fwd(x, params))

    ref = bottleneck_reference(x, params, stride=1, dilation=1)
    assert out.shape == (N, planes * 4, H, W)
    err = float(jnp.max(jnp.abs(out - ref)))
    # bf16 MXU operands vs. an all-f32 reference: allow a small absolute slack.
    if err < 5e-2:
        print("KERNEL_OK")
    else:
        print(f"MAX_ERR={err}")
</pallas_src>

<mosaic_0001>
module attributes {stable_mosaic.version = 11 : i64} {
  func.func @_bottleneck_kernel(%arg0: i32, %arg1: i32, %arg2: memref<1x288x16xf32, #tpu.memory_space<vmem>>, %arg3: memref<16x4xbf16, #tpu.memory_space<vmem>>, %arg4: memref<1x4xf32, #tpu.memory_space<vmem>>, %arg5: memref<1x4xf32, #tpu.memory_space<vmem>>, %arg6: memref<9x4x4xbf16, #tpu.memory_space<vmem>>, %arg7: memref<1x4xf32, #tpu.memory_space<vmem>>, %arg8: memref<1x4xf32, #tpu.memory_space<vmem>>, %arg9: memref<4x16xbf16, #tpu.memory_space<vmem>>, %arg10: memref<1x16xf32, #tpu.memory_space<vmem>>, %arg11: memref<1x16xf32, #tpu.memory_space<vmem>>, %arg12: memref<1x144x16xf32, #tpu.memory_space<vmem>>, %arg13: memref<342x4xf32, #tpu.memory_space<vmem>>) attributes {dimension_semantics = [#tpu.dimension_semantics<parallel>, #tpu.dimension_semantics<arbitrary>], iteration_bounds = array<i64: 2, 2>, scalar_prefetch = 0 : i64, scratch_operands = 1 : i64, tpu.core_type = #tpu.core_type<tc>, window_params = [{transform_indices = @transform_0, window_bounds = array<i64: 1, 288, 16>}, {pipeline_mode = #tpu.pipeline_mode<synchronous>, transform_indices = @transform_1, window_bounds = array<i64: 16, 4>}, {pipeline_mode = #tpu.pipeline_mode<synchronous>, transform_indices = @transform_2, window_bounds = array<i64: 1, 4>}, {pipeline_mode = #tpu.pipeline_mode<synchronous>, transform_indices = @transform_3, window_bounds = array<i64: 1, 4>}, {pipeline_mode = #tpu.pipeline_mode<synchronous>, transform_indices = @transform_4, window_bounds = array<i64: 9, 4, 4>}, {pipeline_mode = #tpu.pipeline_mode<synchronous>, transform_indices = @transform_5, window_bounds = array<i64: 1, 4>}, {pipeline_mode = #tpu.pipeline_mode<synchronous>, transform_indices = @transform_6, window_bounds = array<i64: 1, 4>}, {pipeline_mode = #tpu.pipeline_mode<synchronous>, transform_indices = @transform_7, window_bounds = array<i64: 4, 16>}, {pipeline_mode = #tpu.pipeline_mode<synchronous>, transform_indices = @transform_8, window_bounds = array<i64: 1, 16>}, {pipeline_mode = #tpu.pipeline_mode<synchronous>, transform_indices = @transform_9, window_bounds = array<i64: 1, 16>}, {transform_indices = @transform_10, window_bounds = array<i64: 1, 144, 16>}]} {
    %c0_i32 = arith.constant 0 : i32
    %0 = arith.cmpi eq, %arg1, %c0_i32 : i32
    %1 = arith.extui %0 : i1 to i32
    %c0_i32_0 = arith.constant 0 : i32
    %2 = arith.cmpi ne, %1, %c0_i32_0 : i32
    scf.if %2 {
      %cst_69 = arith.constant 0.000000e+00 : f32
      %113 = vector.broadcast %cst_69 : f32 to vector<342x4xf32>
      %c0_70 = arith.constant 0 : index
      %c0_71 = arith.constant 0 : index
      %114 = vector.load %arg13[%c0_70, %c0_71] : memref<342x4xf32, #tpu.memory_space<vmem>>, vector<342x4xf32>
      tpu.vector_store %arg13[%c0_70, %c0_71], %113 {strides = array<i32>} : memref<342x4xf32, #tpu.memory_space<vmem>>, vector<342x4xf32>,
      %115 = tpu.iota {dimensions = array<i32: 0>} : vector<144x1xi32>
      %c18_i32_72 = arith.constant 18 : i32
      %c0_i32_73 = arith.constant 0 : i32
      %116 = arith.cmpi eq, %c18_i32_72, %c0_i32_73 : i32
      %c1_i32_74 = arith.constant 1 : i32
      %117 = arith.select %116, %c1_i32_74, %c18_i32_72 : i32
      %118 = vector.broadcast %117 : i32 to vector<144x1xi32>
      %119 = arith.remsi %115, %118 : vector<144x1xi32>
      %c0_i32_75 = arith.constant 0 : i32
      %120 = vector.broadcast %c0_i32_75 : i32 to vector<144x1xi32>
      %121 = arith.cmpi ne, %119, %120 : vector<144x1xi32>
      %c0_i32_76 = arith.constant 0 : i32
      %122 = vector.broadcast %c0_i32_76 : i32 to vector<144x1xi32>
      %123 = arith.cmpi slt, %119, %122 : vector<144x1xi32>
      %c0_i32_77 = arith.constant 0 : i32
      %124 = arith.cmpi slt, %117, %c0_i32_77 : i32
      %125 = vector.broadcast %124 : i1 to vector<144x1xi1>
      %126 = vector.broadcast %125 : vector<144x1xi1> to vector<144x1xi1>
      %127 = arith.xori %123, %126 : vector<144x1xi1>
      %128 = arith.andi %127, %121 : vector<144x1xi1>
      %129 = vector.broadcast %117 : i32 to vector<144x1xi32>
      %130 = arith.addi %119, %129 : vector<144x1xi32>
      %131 = arith.select %128, %130, %119 : vector<144x1xi1>, vector<144x1xi32>
      %c16_i32 = arith.constant 16 : i32
      %132 = vector.broadcast %c16_i32 : i32 to vector<144x1xi32>
      %133 = arith.cmpi slt, %131, %132 : vector<144x1xi32>
      %c0_78 = arith.constant 0 : index
      %c0_79 = arith.constant 0 : index
      %134 = vector.load %arg3[%c0_78, %c0_79] : memref<16x4xbf16, #tpu.memory_space<vmem>>, vector<16x4xbf16>
      %c0_80 = arith.constant 0 : index
      %c0_81 = arith.constant 0 : index
      %135 = vector.load %arg4[%c0_80, %c0_81] : memref<1x4xf32, #tpu.memory_space<vmem>>, vector<1x4xf32>
      %c0_82 = arith.constant 0 : index
      %c0_83 = arith.constant 0 : index
      %136 = vector.load %arg5[%c0_82, %c0_83] : memref<1x4xf32, #tpu.memory_space<vmem>>, vector<1x4xf32>
      %c0_84 = arith.constant 0 : index
      %c0_85 = arith.constant 0 : index
      %c0_86 = arith.constant 0 : index
      %137 = vector.load %arg2[%c0_84, %c0_85, %c0_86] : memref<1x288x16xf32, #tpu.memory_space<vmem>>, vector<1x144x16xf32>
      %138 = vector.shape_cast %137 : vector<1x144x16xf32> to vector<144x16xf32>
      %139 = arith.truncf %138 : vector<144x16xf32> to vector<144x16xbf16>
      %cst_87 = arith.constant dense<0.000000e+00> : vector<144x4xf32>
      %140 = tpu.matmul %139, %134, %cst_87 {dimension_numbers = #tpu.dot_dimension_numbers<[1], [0], [0], [1], [0, 0, 1, 1], [], []>} : vector<144x16xbf16>, vector<16x4xbf16>, vector<144x4xf32> -> vector<144x4xf32>
      %141 = vector.broadcast %135 : vector<1x4xf32> to vector<144x4xf32>
      %142 = arith.mulf %140, %141 : vector<144x4xf32>
      %143 = vector.broadcast %136 : vector<1x4xf32> to vector<144x4xf32>
      %144 = arith.addf %142, %143 : vector<144x4xf32>
      %cst_88 = arith.constant 0.000000e+00 : f32
      %145 = vector.broadcast %cst_88 : f32 to vector<144x4xf32>
      %146 = arith.maximumf %144, %145 : vector<144x4xf32>
      %cst_89 = arith.constant 0.000000e+00 : f32
      %147 = vector.shape_cast %133 : vector<144x1xi1> to vector<144x1xi1>
      %148 = vector.broadcast %147 : vector<144x1xi1> to vector<144x4xi1>
      %149 = vector.broadcast %cst_89 : f32 to vector<144x4xf32>
      %150 = arith.select %148, %146, %149 : vector<144x4xi1>, vector<144x4xf32>
      %c19 = arith.constant 19 : index
      %c0_90 = arith.constant 0 : index
      %151 = vector.load %arg13[%c19, %c0_90] : memref<342x4xf32, #tpu.memory_space<vmem>>, vector<144x4xf32>
      tpu.vector_store %arg13[%c19, %c0_90], %150 {strides = array<i32>} : memref<342x4xf32, #tpu.memory_space<vmem>>, vector<144x4xf32>,
      %c0_91 = arith.constant 0 : index
      %c144 = arith.constant 144 : index
      %c0_92 = arith.constant 0 : index
      %152 = vector.load %arg2[%c0_91, %c144, %c0_92] : memref<1x288x16xf32, #tpu.memory_space<vmem>>, vector<1x144x16xf32>
      %153 = vector.shape_cast %152 : vector<1x144x16xf32> to vector<144x16xf32>
      %154 = arith.truncf %153 : vector<144x16xf32> to vector<144x16xbf16>
      %cst_93 = arith.constant dense<0.000000e+00> : vector<144x4xf32>
      %155 = tpu.matmul %154, %134, %cst_93 {dimension_numbers = #tpu.dot_dimension_numbers<[1], [0], [0], [1], [0, 0, 1, 1], [], []>} : vector<144x16xbf16>, vector<16x4xbf16>, vector<144x4xf32> -> vector<144x4xf32>
      %156 = vector.broadcast %135 : vector<1x4xf32> to vector<144x4xf32>
      %157 = arith.mulf %155, %156 : vector<144x4xf32>
      %158 = vector.broadcast %136 : vector<1x4xf32> to vector<144x4xf32>
      %159 = arith.addf %157, %158 : vector<144x4xf32>
      %cst_94 = arith.constant 0.000000e+00 : f32
      %160 = vector.broadcast %cst_94 : f32 to vector<144x4xf32>
      %161 = arith.maximumf %159, %160 : vector<144x4xf32>
      %cst_95 = arith.constant 0.000000e+00 : f32
      %162 = vector.shape_cast %133 : vector<144x1xi1> to vector<144x1xi1>
      %163 = vector.broadcast %162 : vector<144x1xi1> to vector<144x4xi1>
      %164 = vector.broadcast %cst_95 : f32 to vector<144x4xf32>
      %165 = arith.select %163, %161, %164 : vector<144x4xi1>, vector<144x4xf32>
      %c163 = arith.constant 163 : index
      %c0_96 = arith.constant 0 : index
      %166 = vector.load %arg13[%c163, %c0_96] : memref<342x4xf32, #tpu.memory_space<vmem>>, vector<144x4xf32>
      tpu.vector_store %arg13[%c163, %c0_96], %165 {strides = array<i32>} : memref<342x4xf32, #tpu.memory_space<vmem>>, vector<144x4xf32>,
    } else {
    }
    %c144_i32 = arith.constant 144 : i32
    %3 = arith.muli %arg1, %c144_i32 : i32
    %4 = tpu.assume_multiple %3, 8 : i32
    %cst = arith.constant 0.000000e+00 : f32
    %5 = vector.broadcast %cst : f32 to vector<144x4xf32>
    %c0_i32_1 = arith.constant 0 : i32
    %6 = arith.addi %4, %c0_i32_1 : i32
    %c0_i32_2 = arith.constant 0 : i32
    %7 = arith.addi %6, %c0_i32_2 : i32
    %8 = arith.index_cast %7 : i32 to index
    %c0 = arith.constant 0 : index
    %9 = vector.load %arg13[%8, %c0] : memref<342x4xf32, #tpu.memory_space<vmem>>, vector<144x4xf32>
    %10 = arith.truncf %9 : vector<144x4xf32> to vector<144x4xbf16>
    %c0_3 = arith.constant 0 : index
    %c0_4 = arith.constant 0 : index
    %c0_5 = arith.constant 0 : index
    %11 = vector.load %arg6[%c0_3, %c0_4, %c0_5] : memref<9x4x4xbf16, #tpu.memory_space<vmem>>, vector<1x4x4xbf16>
    %12 = vector.shape_cast %11 : vector<1x4x4xbf16> to vector<4x4xbf16>
    %cst_6 = arith.constant dense<0.000000e+00> : vector<144x4xf32>
    %13 = tpu.matmul %10, %12, %cst_6 {dimension_numbers = #tpu.dot_dimension_numbers<[1], [0], [0], [1], [0, 0, 1, 1], [], []>} : vector<144x4xbf16>, vector<4x4xbf16>, vector<144x4xf32> -> vector<144x4xf32>
    %14 = arith.addf %5, %13 : vector<144x4xf32>
    %c0_i32_7 = arith.constant 0 : i32
    %15 = arith.addi %4, %c0_i32_7 : i32
    %c1_i32 = arith.constant 1 : i32
    %16 = arith.addi %15, %c1_i32 : i32
    %17 = arith.index_cast %16 : i32 to index
    %c0_8 = arith.constant 0 : index
    %18 = vector.load %arg13[%17, %c0_8] : memref<342x4xf32, #tpu.memory_space<vmem>>, vector<144x4xf32>
    %19 = arith.truncf %18 : vector<144x4xf32> to vector<144x4xbf16>
    %c1 = arith.constant 1 : index
    %c0_9 = arith.constant 0 : index
    %c0_10 = arith.constant 0 : index
    %20 = vector.load %arg6[%c1, %c0_9, %c0_10] : memref<9x4x4xbf16, #tpu.memory_space<vmem>>, vector<1x4x4xbf16>
    %21 = vector.shape_cast %20 : vector<1x4x4xbf16> to vector<4x4xbf16>
    %cst_11 = arith.constant dense<0.000000e+00> : vector<144x4xf32>
    %22 = tpu.matmul %19, %21, %cst_11 {dimension_numbers = #tpu.dot_dimension_numbers<[1], [0], [0], [1], [0, 0, 1, 1], [], []>} : vector<144x4xbf16>, vector<4x4xbf16>, vector<144x4xf32> -> vector<144x4xf32>
    %23 = arith.addf %14, %22 : vector<144x4xf32>
    %c0_i32_12 = arith.constant 0 : i32
    %24 = arith.addi %4, %c0_i32_12 : i32
    %c2_i32 = arith.constant 2 : i32
    %25 = arith.addi %24, %c2_i32 : i32
    %26 = arith.index_cast %25 : i32 to index
    %c0_13 = arith.constant 0 : index
    %27 = vector.load %arg13[%26, %c0_13] : memref<342x4xf32, #tpu.memory_space<vmem>>, vector<144x4xf32>
    %28 = arith.truncf %27 : vector<144x4xf32> to vector<144x4xbf16>
    %c2 = arith.constant 2 : index
    %c0_14 = arith.constant 0 : index
    %c0_15 = arith.constant 0 : index
    %29 = vector.load %arg6[%c2, %c0_14, %c0_15] : memref<9x4x4xbf16, #tpu.memory_space<vmem>>, vector<1x4x4xbf16>
    %30 = vector.shape_cast %29 : vector<1x4x4xbf16> to vector<4x4xbf16>
    %cst_16 = arith.constant dense<0.000000e+00> : vector<144x4xf32>
    %31 = tpu.matmul %28, %30, %cst_16 {dimension_numbers = #tpu.dot_dimension_numbers<[1], [0], [0], [1], [0, 0, 1, 1], [], []>} : vector<144x4xbf16>, vector<4x4xbf16>, vector<144x4xf32> -> vector<144x4xf32>
    %32 = arith.addf %23, %31 : vector<144x4xf32>
    %c18_i32 = arith.constant 18 : i32
    %33 = arith.addi %4, %c18_i32 : i32
    %c0_i32_17 = arith.constant 0 : i32
    %34 = arith.addi %33, %c0_i32_17 : i32
    %35 = arith.index_cast %34 : i32 to index
    %c0_18 = arith.constant 0 : index
    %36 = vector.load %arg13[%35, %c0_18] : memref<342x4xf32, #tpu.memory_space<vmem>>, vector<144x4xf32>
    %37 = arith.truncf %36 : vector<144x4xf32> to vector<144x4xbf16>
    %c3 = arith.constant 3 : index
    %c0_19 = arith.constant 0 : index
    %c0_20 = arith.constant 0 : index
    %38 = vector.load %arg6[%c3, %c0_19, %c0_20] : memref<9x4x4xbf16, #tpu.memory_space<vmem>>, vector<1x4x4xbf16>
    %39 = vector.shape_cast %38 : vector<1x4x4xbf16> to vector<4x4xbf16>
    %cst_21 = arith.constant dense<0.000000e+00> : vector<144x4xf32>
    %40 = tpu.matmul %37, %39, %cst_21 {dimension_numbers = #tpu.dot_dimension_numbers<[1], [0], [0], [1], [0, 0, 1, 1], [], []>} : vector<144x4xbf16>, vector<4x4xbf16>, vector<144x4xf32> -> vector<144x4xf32>
    %41 = arith.addf %32, %40 : vector<144x4xf32>
    %c18_i32_22 = arith.constant 18 : i32
    %42 = arith.addi %4, %c18_i32_22 : i32
    %c1_i32_23 = arith.constant 1 : i32
    %43 = arith.addi %42, %c1_i32_23 : i32
    %44 = arith.index_cast %43 : i32 to index
    %c0_24 = arith.constant 0 : index
    %45 = vector.load %arg13[%44, %c0_24] : memref<342x4xf32, #tpu.memory_space<vmem>>, vector<144x4xf32>
    %46 = arith.truncf %45 : vector<144x4xf32> to vector<144x4xbf16>
    %c4 = arith.constant 4 : index
    %c0_25 = arith.constant 0 : index
    %c0_26 = arith.constant 0 : index
    %47 = vector.load %arg6[%c4, %c0_25, %c0_26] : memref<9x4x4xbf16, #tpu.memory_space<vmem>>, vector<1x4x4xbf16>
    %48 = vector.shape_cast %47 : vector<1x4x4xbf16> to vector<4x4xbf16>
    %cst_27 = arith.constant dense<0.000000e+00> : vector<144x4xf32>
    %49 = tpu.matmul %46, %48, %cst_27 {dimension_numbers = #tpu.dot_dimension_numbers<[1], [0], [0], [1], [0, 0, 1, 1], [], []>} : vector<144x4xbf16>, vector<4x4xbf16>, vector<144x4xf32> -> vector<144x4xf32>
    %50 = arith.addf %41, %49 : vector<144x4xf32>
    %c18_i32_28 = arith.constant 18 : i32
    %51 = arith.addi %4, %c18_i32_28 : i32
    %c2_i32_29 = arith.constant 2 : i32
    %52 = arith.addi %51, %c2_i32_29 : i32
    %53 = arith.index_cast %52 : i32 to index
    %c0_30 = arith.constant 0 : index
    %54 = vector.load %arg13[%53, %c0_30] : memref<342x4xf32, #tpu.memory_space<vmem>>, vector<144x4xf32>
    %55 = arith.truncf %54 : vector<144x4xf32> to vector<144x4xbf16>
    %c5 = arith.constant 5 : index
    %c0_31 = arith.constant 0 : index
    %c0_32 = arith.constant 0 : index
    %56 = vector.load %arg6[%c5, %c0_31, %c0_32] : memref<9x4x4xbf16, #tpu.memory_space<vmem>>, vector<1x4x4xbf16>
    %57 = vector.shape_cast %56 : vector<1x4x4xbf16> to vector<4x4xbf16>
    %cst_33 = arith.constant dense<0.000000e+00> : vector<144x4xf32>
    %58 = tpu.matmul %55, %57, %cst_33 {dimension_numbers = #tpu.dot_dimension_numbers<[1], [0], [0], [1], [0, 0, 1, 1], [], []>} : vector<144x4xbf16>, vector<4x4xbf16>, vector<144x4xf32> -> vector<144x4xf32>
    %59 = arith.addf %50, %58 : vector<144x4xf32>
    %c36_i32 = arith.constant 36 : i32
    %60 = arith.addi %4, %c36_i32 : i32
    %c0_i32_34 = arith.constant 0 : i32
    %61 = arith.addi %60, %c0_i32_34 : i32
    %62 = arith.index_cast %61 : i32 to index
    %c0_35 = arith.constant 0 : index
    %63 = vector.load %arg13[%62, %c0_35] : memref<342x4xf32, #tpu.memory_space<vmem>>, vector<144x4xf32>
    %64 = arith.truncf %63 : vector<144x4xf32> to vector<144x4xbf16>
    %c6 = arith.constant 6 : index
    %c0_36 = arith.constant 0 : index
    %c0_37 = arith.constant 0 : index
    %65 = vector.load %arg6[%c6, %c0_36, %c0_37] : memref<9x4x4xbf16, #tpu.memory_space<vmem>>, vector<1x4x4xbf16>
    %66 = vector.shape_cast %65 : vector<1x4x4xbf16> to vector<4x4xbf16>
    %cst_38 = arith.constant dense<0.000000e+00> : vector<144x4xf32>
    %67 = tpu.matmul %64, %66, %cst_38 {dimension_numbers = #tpu.dot_dimension_numbers<[1], [0], [0], [1], [0, 0, 1, 1], [], []>} : vector<144x4xbf16>, vector<4x4xbf16>, vector<144x4xf32> -> vector<144x4xf32>
    %68 = arith.addf %59, %67 : vector<144x4xf32>
    %c36_i32_39 = arith.constant 36 : i32
    %69 = arith.addi %4, %c36_i32_39 : i32
    %c1_i32_40 = arith.constant 1 : i32
    %70 = arith.addi %69, %c1_i32_40 : i32
    %71 = arith.index_cast %70 : i32 to index
    %c0_41 = arith.constant 0 : index
    %72 = vector.load %arg13[%71, %c0_41] : memref<342x4xf32, #tpu.memory_space<vmem>>, vector<144x4xf32>
    %73 = arith.truncf %72 : vector<144x4xf32> to vector<144x4xbf16>
    %c7 = arith.constant 7 : index
    %c0_42 = arith.constant 0 : index
    %c0_43 = arith.constant 0 : index
    %74 = vector.load %arg6[%c7, %c0_42, %c0_43] : memref<9x4x4xbf16, #tpu.memory_space<vmem>>, vector<1x4x4xbf16>
    %75 = vector.shape_cast %74 : vector<1x4x4xbf16> to vector<4x4xbf16>
    %cst_44 = arith.constant dense<0.000000e+00> : vector<144x4xf32>
    %76 = tpu.matmul %73, %75, %cst_44 {dimension_numbers = #tpu.dot_dimension_numbers<[1], [0], [0], [1], [0, 0, 1, 1], [], []>} : vector<144x4xbf16>, vector<4x4xbf16>, vector<144x4xf32> -> vector<144x4xf32>
    %77 = arith.addf %68, %76 : vector<144x4xf32>
    %c36_i32_45 = arith.constant 36 : i32
    %78 = arith.addi %4, %c36_i32_45 : i32
    %c2_i32_46 = arith.constant 2 : i32
    %79 = arith.addi %78, %c2_i32_46 : i32
    %80 = arith.index_cast %79 : i32 to index
    %c0_47 = arith.constant 0 : index
    %81 = vector.load %arg13[%80, %c0_47] : memref<342x4xf32, #tpu.memory_space<vmem>>, vector<144x4xf32>
    %82 = arith.truncf %81 : vector<144x4xf32> to vector<144x4xbf16>
    %c8 = arith.constant 8 : index
    %c0_48 = arith.constant 0 : index
    %c0_49 = arith.constant 0 : index
    %83 = vector.load %arg6[%c8, %c0_48, %c0_49] : memref<9x4x4xbf16, #tpu.memory_space<vmem>>, vector<1x4x4xbf16>
    %84 = vector.shape_cast %83 : vector<1x4x4xbf16> to vector<4x4xbf16>
    %cst_50 = arith.constant dense<0.000000e+00> : vector<144x4xf32>
    %85 = tpu.matmul %82, %84, %cst_50 {dimension_numbers = #tpu.dot_dimension_numbers<[1], [0], [0], [1], [0, 0, 1, 1], [], []>} : vector<144x4xbf16>, vector<4x4xbf16>, vector<144x4xf32> -> vector<144x4xf32>
    %86 = arith.addf %77, %85 : vector<144x4xf32>
    %c0_51 = arith.constant 0 : index
    %c0_52 = arith.constant 0 : index
    %87 = vector.load %arg7[%c0_51, %c0_52] : memref<1x4xf32, #tpu.memory_space<vmem>>, vector<1x4xf32>
    %88 = vector.broadcast %87 : vector<1x4xf32> to vector<144x4xf32>
    %89 = arith.mulf %86, %88 : vector<144x4xf32>
    %c0_53 = arith.constant 0 : index
    %c0_54 = arith.constant 0 : index
    %90 = vector.load %arg8[%c0_53, %c0_54] : memref<1x4xf32, #tpu.memory_space<vmem>>, vector<1x4xf32>
    %91 = vector.broadcast %90 : vector<1x4xf32> to vector<144x4xf32>
    %92 = arith.addf %89, %91 : vector<144x4xf32>
    %cst_55 = arith.constant 0.000000e+00 : f32
    %93 = vector.broadcast %cst_55 : f32 to vector<144x4xf32>
    %94 = arith.maximumf %92, %93 : vector<144x4xf32>
    %95 = arith.truncf %94 : vector<144x4xf32> to vector<144x4xbf16>
    %c0_56 = arith.constant 0 : index
    %c0_57 = arith.constant 0 : index
    %96 = vector.load %arg9[%c0_56, %c0_57] : memref<4x16xbf16, #tpu.memory_space<vmem>>, vector<4x16xbf16>
    %cst_58 = arith.constant dense<0.000000e+00> : vector<144x16xf32>
    %97 = tpu.matmul %95, %96, %cst_58 {dimension_numbers = #tpu.dot_dimension_numbers<[1], [0], [0], [1], [0, 0, 1, 1], [], []>} : vector<144x4xbf16>, vector<4x16xbf16>, vector<144x16xf32> -> vector<144x16xf32>
    %c0_59 = arith.constant 0 : index
    %c0_60 = arith.constant 0 : index
    %98 = vector.load %arg10[%c0_59, %c0_60] : memref<1x16xf32, #tpu.memory_space<vmem>>, vector<1x16xf32>
    %99 = vector.broadcast %98 : vector<1x16xf32> to vector<144x16xf32>
    %100 = arith.mulf %97, %99 : vector<144x16xf32>
    %c0_61 = arith.constant 0 : index
    %c0_62 = arith.constant 0 : index
    %101 = vector.load %arg11[%c0_61, %c0_62] : memref<1x16xf32, #tpu.memory_space<vmem>>, vector<1x16xf32>
    %102 = vector.broadcast %101 : vector<1x16xf32> to vector<144x16xf32>
    %103 = arith.addf %100, %102 : vector<144x16xf32>
    %c0_63 = arith.constant 0 : index
    %104 = arith.index_cast %4 : i32 to index
    %c0_64 = arith.constant 0 : index
    %105 = vector.load %arg2[%c0_63, %104, %c0_64] : memref<1x288x16xf32, #tpu.memory_space<vmem>>, vector<1x144x16xf32>
    %106 = vector.shape_cast %105 : vector<1x144x16xf32> to vector<144x16xf32>
    %107 = arith.addf %103, %106 : vector<144x16xf32>
    %cst_65 = arith.constant 0.000000e+00 : f32
    %108 = vector.broadcast %cst_65 : f32 to vector<144x16xf32>
    %109 = arith.maximumf %107, %108 : vector<144x16xf32>
    %c0_66 = arith.constant 0 : index
    %c0_67 = arith.constant 0 : index
    %c0_68 = arith.constant 0 : index
    %110 = vector.load %arg12[%c0_66, %c0_67, %c0_68] : memref<1x144x16xf32, #tpu.memory_space<vmem>>, vector<1x144x16xf32>
    %111 = vector.shape_cast %110 : vector<1x144x16xf32> to vector<144x16xf32>
    %112 = vector.shape_cast %109 : vector<144x16xf32> to vector<1x144x16xf32>
    tpu.vector_store %arg12[%c0_66, %c0_67, %c0_68], %112 {strides = array<i32>} : memref<1x144x16xf32, #tpu.memory_space<vmem>>, vector<1x144x16xf32>,
    return
  }
  func.func @transform_0(%arg0: i32, %arg1: i32) -> (i32, i32, i32) {
    %c0_i32 = arith.constant 0 : i32
    %c0_i32_0 = arith.constant 0 : i32
    %c0_i32_1 = arith.constant 0 : i32
    return %arg0, %c0_i32, %c0_i32_0 : i32, i32, i32
  }
  func.func @transform_1(%arg0: i32, %arg1: i32) -> (i32, i32) {
    %c0_i32 = arith.constant 0 : i32
    %c0_i32_0 = arith.constant 0 : i32
    %c0_i32_1 = arith.constant 0 : i32
    return %c0_i32, %c0_i32_0 : i32, i32
  }
  func.func @transform_2(%arg0: i32, %arg1: i32) -> (i32, i32) {
    %c0_i32 = arith.constant 0 : i32
    %c0_i32_0 = arith.constant 0 : i32
    %c0_i32_1 = arith.constant 0 : i32
    return %c0_i32, %c0_i32_0 : i32, i32
  }
  func.func @transform_3(%arg0: i32, %arg1: i32) -> (i32, i32) {
    %c0_i32 = arith.constant 0 : i32
    %c0_i32_0 = arith.constant 0 : i32
    %c0_i32_1 = arith.constant 0 : i32
    return %c0_i32, %c0_i32_0 : i32, i32
  }
  func.func @transform_4(%arg0: i32, %arg1: i32) -> (i32, i32, i32) {
    %c0_i32 = arith.constant 0 : i32
    %c0_i32_0 = arith.constant 0 : i32
    %c0_i32_1 = arith.constant 0 : i32
    %c0_i32_2 = arith.constant 0 : i32
    return %c0_i32, %c0_i32_0, %c0_i32_1 : i32, i32, i32
  }
  func.func @transform_5(%arg0: i32, %arg1: i32) -> (i32, i32) {
    %c0_i32 = arith.constant 0 : i32
    %c0_i32_0 = arith.constant 0 : i32
    %c0_i32_1 = arith.constant 0 : i32
    return %c0_i32, %c0_i32_0 : i32, i32
  }
  func.func @transform_6(%arg0: i32, %arg1: i32) -> (i32, i32) {
    %c0_i32 = arith.constant 0 : i32
    %c0_i32_0 = arith.constant 0 : i32
    %c0_i32_1 = arith.constant 0 : i32
    return %c0_i32, %c0_i32_0 : i32, i32
  }
  func.func @transform_7(%arg0: i32, %arg1: i32) -> (i32, i32) {
    %c0_i32 = arith.constant 0 : i32
    %c0_i32_0 = arith.constant 0 : i32
    %c0_i32_1 = arith.constant 0 : i32
    return %c0_i32, %c0_i32_0 : i32, i32
  }
  func.func @transform_8(%arg0: i32, %arg1: i32) -> (i32, i32) {
    %c0_i32 = arith.constant 0 : i32
    %c0_i32_0 = arith.constant 0 : i32
    %c0_i32_1 = arith.constant 0 : i32
    return %c0_i32, %c0_i32_0 : i32, i32
  }
  func.func @transform_9(%arg0: i32, %arg1: i32) -> (i32, i32) {
    %c0_i32 = arith.constant 0 : i32
    %c0_i32_0 = arith.constant 0 : i32
    %c0_i32_1 = arith.constant 0 : i32
    return %c0_i32, %c0_i32_0 : i32, i32
  }
  func.func @transform_10(%arg0: i32, %arg1: i32) -> (i32, i32, i32) {
    %c0_i32 = arith.constant 0 : i32
    %c0_i32_0 = arith.constant 0 : i32
    return %arg0, %arg1, %c0_i32 : i32, i32, i32
  }
}

</mosaic_0001>

<llo_original>
// kernel: bottleneck_forward.1
$region0: #{bottleneck_forward.1}
  #allocation0 [shape = 'u32[]', space=smem, size = 0x4, offset = 0x4, fixed_abs, tag = 'smem constant byte address 0x4 - core index']
  #allocation1 [shape = 'u32[144,128]{1,0:T(1,128)}', space=vmem, size = 0x12000, scoped, tag = 'internal scratch']
  #allocation2 [shape = 'f32[342,4]{1,0:T(8,128)}', space=vmem, size = 0x2b000, scoped, tag = 'scratch operand']
  %s0 = inlined_call_operand.hbm [shape: f32[2,288,16], index: 0, kind: input, shape index: {}]
  %s1 = inlined_call_operand.hbm [shape: bf16[16,4], index: 1, kind: input, shape index: {}]
  %s2 = inlined_call_operand.hbm [shape: f32[1,4], index: 2, kind: input, shape index: {}]
  %s3 = inlined_call_operand.hbm [shape: f32[1,4], index: 3, kind: input, shape index: {}]
  %s4 = inlined_call_operand.hbm [shape: bf16[9,4,4], index: 4, kind: input, shape index: {}]
  %s5 = inlined_call_operand.hbm [shape: f32[1,4], index: 5, kind: input, shape index: {}]
  %s6 = inlined_call_operand.hbm [shape: f32[1,4], index: 6, kind: input, shape index: {}]
  %s7 = inlined_call_operand.hbm [shape: bf16[4,16], index: 7, kind: input, shape index: {}]
  %s8 = inlined_call_operand.hbm [shape: f32[1,16], index: 8, kind: input, shape index: {}]
  %s9 = inlined_call_operand.hbm [shape: f32[1,16], index: 9, kind: input, shape index: {}]
  %s10 = inlined_call_operand.hbm [shape: f32[2,288,16], index: 10, kind: output, shape index: {}]
  %s11 = sld [smem:[#allocation0]]
  $region117: #{bottleneck_forward.1} parent=0
    _
  %s13 = ssub.s32 1, %s11
  %s14 = scalar_select 0, %s13, %s11
  $region1: #{bottleneck_forward.1} parent=0
    #allocation3 [shape = 'u8[294912]{0}', space=vmem, size = 0x48000, scoped, tag = 'input window, operand 0']
    #allocation4 [shape = 's32[2]{0}', space=sflag, size = 0x8, scoped, tag = 'scoped memory for bottleneck_forward.1']
    #allocation5 [shape = 's32[2]{0}', space=sflag, size = 0x8, scoped, tag = 'scoped memory for bottleneck_forward.1']
    #allocation6 [shape = 'u8[4096]{0}', space=vmem, size = 0x1000, scoped, tag = 'input window, operand 1, single buffered']
    #allocation7 [shape = 's32[1]{0}', space=sflag, size = 0x4, scoped, tag = 'scoped memory for bottleneck_forward.1']
    #allocation8 [shape = 'u8[512]{0}', space=vmem, size = 0x400, scoped, tag = 'input window, operand 2, single buffered']
    #allocation9 [shape = 'u8[512]{0}', space=vmem, size = 0x400, scoped, tag = 'input window, operand 3, single buffered']
    #allocation10 [shape = 's32[1]{0}', space=sflag, size = 0x4, scoped, tag = 'scoped memory for bottleneck_forward.1']
    #allocation11 [shape = 'u8[9216]{0}', space=vmem, size = 0x2400, scoped, tag = 'input window, operand 4, single buffered']
    #allocation12 [shape = 'u8[512]{0}', space=vmem, size = 0x400, scoped, tag = 'input window, operand 5, single buffered']
    #allocation13 [shape = 's32[1]{0}', space=sflag, size = 0x4, scoped, tag = 'scoped memory for bottleneck_forward.1']
    #allocation14 [shape = 'u8[512]{0}', space=vmem, size = 0x400, scoped, tag = 'input window, operand 6, single buffered']
    #allocation15 [shape = 'u8[1024]{0}', space=vmem, size = 0x400, scoped, tag = 'input window, operand 7, single buffered']
    #allocation16 [shape = 's32[1]{0}', space=sflag, size = 0x4, scoped, tag = 'scoped memory for bottleneck_forward.1']
    #allocation17 [shape = 'u8[512]{0}', space=vmem, size = 0x400, scoped, tag = 'input window, operand 8, single buffered']
    #allocation18 [shape = 'u8[512]{0}', space=vmem, size = 0x400, scoped, tag = 'input window, operand 9, single buffered']
    #allocation19 [shape = 's32[1]{0}', space=sflag, size = 0x4, scoped, tag = 'scoped memory for bottleneck_forward.1']
    #allocation20 [shape = 'u8[147456]{0}', space=vmem, size = 0x24000, scoped, tag = 'output window, operand 0']
    %15 = vsyncpa [#allocation4], 0
    %s16 = scalar_lea.sflag [#allocation4], 1
    %17 = vsyncpa %s16, 0
    %18 = vsyncpa [#allocation7], 0
    %19 = vsyncpa [#allocation10], 0
    %20 = vsyncpa [#allocation13], 0
    %21 = vsyncpa [#allocation16], 0
    %22 = vsyncpa [#allocation19], 0
    %23 = vsyncpa [#allocation5], 0
    %s24 = scalar_lea.sflag [#allocation5], 1
    %25 = vsyncpa %s24, 0
    loop: start=0, step=1, limit=6
    $region2: #{bottleneck_forward.1} parent=1 // loop_pre_header
      _
    $region3: #{bottleneck_forward.1} parent=1 // loop_header
      %s27 = sphi 0, %s31
      %p28 = scmp.ge.s32.totalorder %s27, 6
      %s34 = sphi 0, %s46
      %s35 = sphi 0, %s42
      %s36 = sphi 0, %s34
      %s37 = sphi 0, %s35
      %s38 = sphi 0, %s36
      %s39 = sphi 0, %s37
      %s49 = sphi 0, %s51
      %s52 = sphi 0, %s49
      %s53 = sphi 0, %s52
      %s69 = sphi 0, %s53
      %s73 = sphi 0, %s73
      %s75 = sphi 0, %s73
      %s76 = sphi 0, %s75
      %s90 = sphi 0, %s76
      %s94 = sphi 0, %s94
      %s96 = sphi 0, %s94
      %s97 = sphi 0, %s96
      %s111 = sphi 0, %s97
      %s115 = sphi 0, %s115
      %s117 = sphi 0, %s115
      %s118 = sphi 0, %s117
      %s132 = sphi 0, %s118
      %s136 = sphi 0, %s136
      %s138 = sphi 0, %s136
      %s139 = sphi 0, %s138
      %s153 = sphi 0, %s139
      %s157 = sphi 0, %s157
      %s159 = sphi 0, %s157
      %s160 = sphi 0, %s159
      %s174 = sphi 0, %s160
      %s178 = sphi 0, %s178
      %s180 = sphi 0, %s178
      %s181 = sphi 0, %s180
      %s195 = sphi 0, %s181
      %s199 = sphi 0, %s199
      %s201 = sphi 0, %s199
      %s202 = sphi 0, %s201
      %s216 = sphi 0, %s202
      %s220 = sphi 0, %s220
      %s222 = sphi 0, %s220
      %s223 = sphi 0, %s222
      %s237 = sphi 0, %s223
      %s241 = sphi 0, %s241
      %s243 = sphi 0, %s241
      %s244 = sphi 0, %s243
      %s258 = sphi 0, %s244
      %s266 = sphi 0, %s268
      %s269 = sphi 0, %s266
      %s270 = sphi 0, %s269
      %s286 = sphi 0, %s270
    $region4: #{bottleneck_forward.1} parent=1 // loop_header_branch
      %30 = sbr.rel (%p28) target = $region8
    $region5: #{bottleneck_forward.1} parent=1 // loop_body
      %s32 = ssub.s32 %s27, 1
      %s33 = ssub.s32 %s27, 2
      %s40 = sadd.s32 1, %s35
      %p41 = scmp.ge.s32.totalorder %s40, 2
      %s42 = scalar_select %p41, 0, %s40
      %s43 = sadd.s32 1, %s34
      %s44 = scalar_select %p41, %s43, %s34
      %p45 = scmp.ge.s32.totalorder %s44, 2
      %s46 = scalar_select %p45, 0, %s44
      %s47 = ssub.s32 %s34, %s46
      %p48 = scmp.eq.s32.totalorder %s47, 0
      %s50 = sadd.s32 %s49, 1
      %s51 = scalar_select %p48, %s49, %s50
      %p54 = pneg %p48
      %p55 = scmp.eq.s32.totalorder %s27, 3
      %p56 = por %p54, %p55
      %p57 = scmp.ne.s32.totalorder %s49, %s52
      %p58 = scmp.eq.s32.totalorder %s27, 0
      %p59 = por %p57, %p58
      %p60 = scmp.ne.s32.totalorder %s49, %s52
      %p61 = scmp.eq.s32.totalorder %s32, 3
      %p62 = por %p60, %p61
      %p63 = scmp.ne.s32.totalorder %s52, %s53
      %p64 = scmp.eq.s32.totalorder %s32, 0
      %p65 = por %p63, %p64
      %p66 = scmp.ne.s32.totalorder %s52, %s53
      %p67 = scmp.eq.s32.totalorder %s33, 3
      %p68 = por %p66, %p67
      %p70 = scmp.ne.s32.totalorder %s53, %s69
      %p71 = scmp.eq.s32.totalorder %s33, 0
      %p72 = por %p70, %p71
      %s74 = sadd.s32 %s73, 1
      %p77 = scmp.eq.s32.totalorder %s27, 3
      %p78 = scmp.ne.s32.totalorder %s73, %s75
      %p79 = scmp.eq.s32.totalorder %s27, 0
      %p80 = por %p78, %p79
      %p81 = scmp.ne.s32.totalorder %s73, %s75
      %p82 = scmp.eq.s32.totalorder %s32, 3
      %p83 = por %p81, %p82
      %p84 = scmp.ne.s32.totalorder %s75, %s76
      %p85 = scmp.eq.s32.totalorder %s32, 0
      %p86 = por %p84, %p85
      %p87 = scmp.ne.s32.totalorder %s75, %s76
      %p88 = scmp.eq.s32.totalorder %s33, 3
      %p89 = por %p87, %p88
      %p91 = scmp.ne.s32.totalorder %s76, %s90
      %p92 = scmp.eq.s32.totalorder %s33, 0
      %p93 = por %p91, %p92
      %s95 = sadd.s32 %s94, 1
      %p98 = scmp.eq.s32.totalorder %s27, 3
      %p99 = scmp.ne.s32.totalorder %s94, %s96
      %p100 = scmp.eq.s32.totalorder %s27, 0
      %p101 = por %p99, %p100
      %p102 = scmp.ne.s32.totalorder %s94, %s96
      %p103 = scmp.eq.s32.totalorder %s32, 3
      %p104 = por %p102, %p103
      %p105 = scmp.ne.s32.totalorder %s96, %s97
      %p106 = scmp.eq.s32.totalorder %s32, 0
      %p107 = por %p105, %p106
      %p108 = scmp.ne.s32.totalorder %s96, %s97
      %p109 = scmp.eq.s32.totalorder %s33, 3
      %p110 = por %p108, %p109
      %p112 = scmp.ne.s32.totalorder %s97, %s111
      %p113 = scmp.eq.s32.totalorder %s33, 0
      %p114 = por %p112, %p113
      %s116 = sadd.s32 %s115, 1
      %p119 = scmp.eq.s32.totalorder %s27, 3
      %p120 = scmp.ne.s32.totalorder %s115, %s117
      %p121 = scmp.eq.s32.totalorder %s27, 0
      %p122 = por %p120, %p121
      %p123 = scmp.ne.s32.totalorder %s115, %s117
      %p124 = scmp.eq.s32.totalorder %s32, 3
      %p125 = por %p123, %p124
      %p126 = scmp.ne.s32.totalorder %s117, %s118
      %p127 = scmp.eq.s32.totalorder %s32, 0
      %p128 = por %p126, %p127
      %p129 = scmp.ne.s32.totalorder %s117, %s118
      %p130 = scmp.eq.s32.totalorder %s33, 3
      %p131 = por %p129, %p130
      %p133 = scmp.ne.s32.totalorder %s118, %s132
      %p134 = scmp.eq.s32.totalorder %s33, 0
      %p135 = por %p133, %p134
      %s137 = sadd.s32 %s136, 1
      %p140 = scmp.eq.s32.totalorder %s27, 3
      %p141 = scmp.ne.s32.totalorder %s136, %s138
      %p142 = scmp.eq.s32.totalorder %s27, 0
      %p143 = por %p141, %p142
      %p144 = scmp.ne.s32.totalorder %s136, %s138
      %p145 = scmp.eq.s32.totalorder %s32, 3
      %p146 = por %p144, %p145
      %p147 = scmp.ne.s32.totalorder %s138, %s139
      %p148 = scmp.eq.s32.totalorder %s32, 0
      %p149 = por %p147, %p148
      %p150 = scmp.ne.s32.totalorder %s138, %s139
      %p151 = scmp.eq.s32.totalorder %s33, 3
      %p152 = por %p150, %p151
      %p154 = scmp.ne.s32.totalorder %s139, %s153
      %p155 = scmp.eq.s32.totalorder %s33, 0
      %p156 = por %p154, %p155
      %s158 = sadd.s32 %s157, 1
      %p161 = scmp.eq.s32.totalorder %s27, 3
      %p162 = scmp.ne.s32.totalorder %s157, %s159
      %p163 = scmp.eq.s32.totalorder %s27, 0
      %p164 = por %p162, %p163
      %p165 = scmp.ne.s32.totalorder %s157, %s159
      %p166 = scmp.eq.s32.totalorder %s32, 3
      %p167 = por %p165, %p166
      %p168 = scmp.ne.s32.totalorder %s159, %s160
      %p169 = scmp.eq.s32.totalorder %s32, 0
      %p170 = por %p168, %p169
      %p171 = scmp.ne.s32.totalorder %s159, %s160
      %p172 = scmp.eq.s32.totalorder %s33, 3
      %p173 = por %p171, %p172
      %p175 = scmp.ne.s32.totalorder %s160, %s174
      %p176 = scmp.eq.s32.totalorder %s33, 0
      %p177 = por %p175, %p176
      %s179 = sadd.s32 %s178, 1
      %p182 = scmp.eq.s32.totalorder %s27, 3
      %p183 = scmp.ne.s32.totalorder %s178, %s180
      %p184 = scmp.eq.s32.totalorder %s27, 0
      %p185 = por %p183, %p184
      %p186 = scmp.ne.s32.totalorder %s178, %s180
      %p187 = scmp.eq.s32.totalorder %s32, 3
      %p188 = por %p186, %p187
      %p189 = scmp.ne.s32.totalorder %s180, %s181
      %p190 = scmp.eq.s32.totalorder %s32, 0
      %p191 = por %p189, %p190
      %p192 = scmp.ne.s32.totalorder %s180, %s181
      %p193 = scmp.eq.s32.totalorder %s33, 3
      %p194 = por %p192, %p193
      %p196 = scmp.ne.s32.totalorder %s181, %s195
      %p197 = scmp.eq.s32.totalorder %s33, 0
      %p198 = por %p196, %p197
      %s200 = sadd.s32 %s199, 1
      %p203 = scmp.eq.s32.totalorder %s27, 3
      %p204 = scmp.ne.s32.totalorder %s199, %s201
      %p205 = scmp.eq.s32.totalorder %s27, 0
      %p206 = por %p204, %p205
      %p207 = scmp.ne.s32.totalorder %s199, %s201
      %p208 = scmp.eq.s32.totalorder %s32, 3
      %p209 = por %p207, %p208
      %p210 = scmp.ne.s32.totalorder %s201, %s202
      %p211 = scmp.eq.s32.totalorder %s32, 0
      %p212 = por %p210, %p211
      %p213 = scmp.ne.s32.totalorder %s201, %s202
      %p214 = scmp.eq.s32.totalorder %s33, 3
      %p215 = por %p213, %p214
      %p217 = scmp.ne.s32.totalorder %s202, %s216
      %p218 = scmp.eq.s32.totalorder %s33, 0
      %p219 = por %p217, %p218
      %s221 = sadd.s32 %s220, 1
      %p224 = scmp.eq.s32.totalorder %s27, 3
      %p225 = scmp.ne.s32.totalorder %s220, %s222
      %p226 = scmp.eq.s32.totalorder %s27, 0
      %p227 = por %p225, %p226
      %p228 = scmp.ne.s32.totalorder %s220, %s222
      %p229 = scmp.eq.s32.totalorder %s32, 3
      %p230 = por %p228, %p229
      %p231 = scmp.ne.s32.totalorder %s222, %s223
      %p232 = scmp.eq.s32.totalorder %s32, 0
      %p233 = por %p231, %p232
      %p234 = scmp.ne.s32.totalorder %s222, %s223
      %p235 = scmp.eq.s32.totalorder %s33, 3
      %p236 = por %p234, %p235
      %p238 = scmp.ne.s32.totalorder %s223, %s237
      %p239 = scmp.eq.s32.totalorder %s33, 0
      %p240 = por %p238, %p239
      %s242 = sadd.s32 %s241, 1
      %p245 = scmp.eq.s32.totalorder %s27, 3
      %p246 = scmp.ne.s32.totalorder %s241, %s243
      %p247 = scmp.eq.s32.totalorder %s27, 0
      %p248 = por %p246, %p247
      %p249 = scmp.ne.s32.totalorder %s241, %s243
      %p250 = scmp.eq.s32.totalorder %s32, 3
      %p251 = por %p249, %p250
      %p252 = scmp.ne.s32.totalorder %s243, %s244
      %p253 = scmp.eq.s32.totalorder %s32, 0
      %p254 = por %p252, %p253
      %p255 = scmp.ne.s32.totalorder %s243, %s244
      %p256 = scmp.eq.s32.totalorder %s33, 3
      %p257 = por %p255, %p256
      %p259 = scmp.ne.s32.totalorder %s244, %s258
      %p260 = scmp.eq.s32.totalorder %s33, 0
      %p261 = por %p259, %p260
      %s262 = ssub.s32 %s34, %s46
      %s263 = ssub.s32 %s35, %s42
      %s264 = sor.u32 %s262, %s263
      %p265 = scmp.eq.s32.totalorder %s264, 0
      %s267 = sadd.s32 %s266, 1
      %s268 = scalar_select %p265, %s266, %s267
      %p271 = pneg %p265
      %p272 = scmp.eq.s32.totalorder %s27, 3
      %p273 = por %p271, %p272
      %p274 = scmp.ne.s32.totalorder %s266, %s269
      %p275 = scmp.eq.s32.totalorder %s27, 0
      %p276 = por %p274, %p275
      %p277 = scmp.ne.s32.totalorder %s266, %s269
      %p278 = scmp.eq.s32.totalorder %s32, 3
      %p279 = por %p277, %p278
      %p280 = scmp.ne.s32.totalorder %s269, %s270
      %p281 = scmp.eq.s32.totalorder %s32, 0
      %p282 = por %p280, %p281
      %p283 = scmp.ne.s32.totalorder %s269, %s270
      %p284 = scmp.eq.s32.totalorder %s33, 3
      %p285 = por %p283, %p284
      %p287 = scmp.ne.s32.totalorder %s270, %s286
      %p288 = scmp.eq.s32.totalorder %s33, 0
      %p289 = por %p287, %p288
      %p290 = scmp.le.s32.totalorder 1, %s27
      %p291 = scmp.lt.s32.totalorder %s27, 5
      %p292 = pnand %p290, %p291
      %p293 = pneg %p292
      // Predicated region
      $region9: #{bottleneck_forward.1} parent=5 // pred_check
        _
      $region10: #{bottleneck_forward.1} parent=5 // pred_check_branch
        %295 = sbr.rel (%p292) target = $region12
      $region11: #{bottleneck_forward.1} parent=5 // pred_region
        %s296 = ssub.s32 %s27, 1
        // Predicated region
        $region13: #{bottleneck_forward.1} parent=11 // pred_check
          %p297 = pneg %p86
        $region14: #{bottleneck_forward.1} parent=11 // pred_check_branch
          %299 = sbr.rel (%p297) target = $region16
        $region15: #{bottleneck_forward.1} parent=11 // pred_region
          %s301 = ssub.s32 128, 128
          %302 = vsyncadd [#allocation7], %s301
          %s303 = sshll.u32 [#allocation6], 4
          %s304 = int_to_ptr.vmem [resolvable:$true] %s303
          %309 = dma.hbm_to_vmem [thread:$0]  %s1, 128, %s304, [#allocation7], 64, 64, 4
        $region16: #{bottleneck_forward.1} parent=11 // pred_fallthru
          _
        // Predicated region
        $region17: #{bottleneck_forward.1} parent=11 // pred_check
          %p310 = pneg %p107
        $region18: #{bottleneck_forward.1} parent=11 // pred_check_branch
          %312 = sbr.rel (%p310) target = $region20
        $region19: #{bottleneck_forward.1} parent=11 // pred_region
          %s314 = ssub.s32 16, 16
          %315 = vsyncadd [#allocation7], %s314
          %s317 = sshll.u32 [#allocation8], 4
          %s318 = int_to_ptr.vmem [resolvable:$true] %s317
          %320 = dma.hbm_to_vmem [thread:$0]  %s2, 16, %s318, [#allocation7]
        $region20: #{bottleneck_forward.1} parent=11 // pred_fallthru
          _
        // Predicated region
        $region21: #{bottleneck_forward.1} parent=11 // pred_check
          %p321 = pneg %p128
        $region22: #{bottleneck_forward.1} parent=11 // pred_check_branch
          %323 = sbr.rel (%p321) target = $region24
        $region23: #{bottleneck_forward.1} parent=11 // pred_region
          %s325 = ssub.s32 16, 16
          %326 = vsyncadd [#allocation10], %s325
          %s328 = sshll.u32 [#allocation9], 4
          %s329 = int_to_ptr.vmem [resolvable:$true] %s328
          %331 = dma.hbm_to_vmem [thread:$0]  %s3, 16, %s329, [#allocation10]
        $region24: #{bottleneck_forward.1} parent=11 // pred_fallthru
          _
        // Predicated region
        $region25: #{bottleneck_forward.1} parent=11 // pred_check
          %p332 = pneg %p149
        $region26: #{bottleneck_forward.1} parent=11 // pred_check_branch
          %334 = sbr.rel (%p332) target = $region28
        $region27: #{bottleneck_forward.1} parent=11 // pred_region
          %s336 = ssub.s32 288, 288
          %337 = vsyncadd [#allocation10], %s336
          %s338 = sshll.u32 [#allocation11], 4
          %s339 = int_to_ptr.vmem [resolvable:$true] %s338
          %344 = dma.hbm_to_vmem [thread:$0]  %s4, 288, %s339, [#allocation10], 32, 32, 2
        $region28: #{bottleneck_forward.1} parent=11 // pred_fallthru
          _
        // Predicated region
        $region29: #{bottleneck_forward.1} parent=11 // pred_check
          %p345 = pneg %p170
        $region30: #{bottleneck_forward.1} parent=11 // pred_check_branch
          %347 = sbr.rel (%p345) target = $region32
        $region31: #{bottleneck_forward.1} parent=11 // pred_region
          %s349 = ssub.s32 16, 16
          %350 = vsyncadd [#allocation13], %s349
          %s352 = sshll.u32 [#allocation12], 4
          %s353 = int_to_ptr.vmem [resolvable:$true] %s352
          %355 = dma.hbm_to_vmem [thread:$0]  %s5, 16, %s353, [#allocation13]
        $region32: #{bottleneck_forward.1} parent=11 // pred_fallthru
          _
        // Predicated region
        $region33: #{bottleneck_forward.1} parent=11 // pred_check
          %p356 = pneg %p191
        $region34: #{bottleneck_forward.1} parent=11 // pred_check_branch
          %358 = sbr.rel (%p356) target = $region36
        $region35: #{bottleneck_forward.1} parent=11 // pred_region
          %s360 = ssub.s32 16, 16
          %361 = vsyncadd [#allocation13], %s360
          %s363 = sshll.u32 [#allocation14], 4
          %s364 = int_to_ptr.vmem [resolvable:$true] %s363
          %366 = dma.hbm_to_vmem [thread:$0]  %s6, 16, %s364, [#allocation13]
        $region36: #{bottleneck_forward.1} parent=11 // pred_fallthru
          _
        // Predicated region
        $region37: #{bottleneck_forward.1} parent=11 // pred_check
          %p367 = pneg %p212
        $region38: #{bottleneck_forward.1} parent=11 // pred_check_branch
          %369 = sbr.rel (%p367) target = $region40
        $region39: #{bottleneck_forward.1} parent=11 // pred_region
          %s371 = ssub.s32 32, 32
          %372 = vsyncadd [#allocation16], %s371
          %s374 = sshll.u32 [#allocation15], 4
          %s375 = int_to_ptr.vmem [resolvable:$true] %s374
          %377 = dma.hbm_to_vmem [thread:$0]  %s7, 32, %s375, [#allocation16]
        $region40: #{bottleneck_forward.1} parent=11 // pred_fallthru
          _
        // Predicated region
        $region41: #{bottleneck_forward.1} parent=11 // pred_check
          %p378 = pneg %p233
        $region42: #{bottleneck_forward.1} parent=11 // pred_check_branch
          %380 = sbr.rel (%p378) target = $region44
        $region43: #{bottleneck_forward.1} parent=11 // pred_region
          %s382 = ssub.s32 16, 16
          %383 = vsyncadd [#allocation16], %s382
          %s385 = sshll.u32 [#allocation17], 4
          %s386 = int_to_ptr.vmem [resolvable:$true] %s385
          %388 = dma.hbm_to_vmem [thread:$0]  %s8, 16, %s386, [#allocation16]
        $region44: #{bottleneck_forward.1} parent=11 // pred_fallthru
          _
        // Predicated region
        $region45: #{bottleneck_forward.1} parent=11 // pred_check
          %p389 = pneg %p254
        $region46: #{bottleneck_forward.1} parent=11 // pred_check_branch
          %391 = sbr.rel (%p389) target = $region48
        $region47: #{bottleneck_forward.1} parent=11 // pred_region
          %s393 = ssub.s32 16, 16
          %394 = vsyncadd [#allocation19], %s393
          %s396 = sshll.u32 [#allocation18], 4
          %s397 = int_to_ptr.vmem [resolvable:$true] %s396
          %399 = dma.hbm_to_vmem [thread:$0]  %s9, 16, %s397, [#allocation19]
        $region48: #{bottleneck_forward.1} parent=11 // pred_fallthru
          _
      $region12: #{bottleneck_forward.1} parent=5 // pred_fallthru
        _
      %p400 = scmp.lt.s32.totalorder %s27, 4
      // Predicated region
      $region49: #{bottleneck_forward.1} parent=5 // pred_check
        %p401 = pneg %p400
      $region50: #{bottleneck_forward.1} parent=5 // pred_check_branch
        %403 = sbr.rel (%p401) target = $region52
      $region51: #{bottleneck_forward.1} parent=5 // pred_region
        // Predicated region
        $region53: #{bottleneck_forward.1} parent=51 // pred_check
          %p404 = pneg %p59
        $region54: #{bottleneck_forward.1} parent=51 // pred_check_branch
          %406 = sbr.rel (%p404) target = $region56
        $region55: #{bottleneck_forward.1} parent=51 // pred_region
          %s407 = sand.u32 %s49, 1
          %s408 = scalar_lea.sflag [#allocation4], %s407
          %s409 = sand.u32 %s49, 1
          %s410 = smul.addr %s409, 288
          %s411 = scalar_lea.vmem [#allocation3], %s410
          %s413 = ssub.s32 4608, 4608
          %414 = vsyncadd %s408, %s413
          %s415 = smul.addr %s34, 36
          %s416 = smul.addr %s415, 128
          %s417 = scalar_lea.hbm %s0, %s416
          %s418 = sshll.u32 %s411, 4
          %s419 = int_to_ptr.vmem [resolvable:$true] %s418
          %424 = dma.hbm_to_vmem [thread:$0]  %s417, 4608, %s419, %s408, 128, 128, 8
        $region56: #{bottleneck_forward.1} parent=51 // pred_fallthru
          _
      $region52: #{bottleneck_forward.1} parent=5 // pred_fallthru
        _
      %p425 = scmp.le.s32.totalorder 1, %s27
      %p426 = scmp.lt.s32.totalorder %s27, 5
      %p427 = pnand %p425, %p426
      %p428 = pneg %p427
      // Predicated region
      $region57: #{bottleneck_forward.1} parent=5 // pred_check
        _
      $region58: #{bottleneck_forward.1} parent=5 // pred_check_branch
        %430 = sbr.rel (%p427) target = $region60
      $region59: #{bottleneck_forward.1} parent=5 // pred_region
        %s431 = ssub.s32 %s27, 1
        %s432 = sand.u32 %s52, 1
        %s433 = scalar_lea.sflag [#allocation4], %s432
        %s434 = sand.u32 %s52, 1
        %s435 = smul.addr %s434, 288
        %s436 = scalar_lea.vmem [#allocation3], %s435
        // Predicated region
        $region61: #{bottleneck_forward.1} parent=59 // pred_check
          %p437 = pneg %p65
        $region62: #{bottleneck_forward.1} parent=59 // pred_check_branch
          %439 = sbr.rel (%p437) target = $region64
        $region63: #{bottleneck_forward.1} parent=59 // pred_region
          %440 = dma.done %s433, 4608
        $region64: #{bottleneck_forward.1} parent=59 // pred_fallthru
          _
        // Predicated region
        $region65: #{bottleneck_forward.1} parent=59 // pred_check
          %p441 = pneg %p86
        $region66: #{bottleneck_forward.1} parent=59 // pred_check_branch
          %443 = sbr.rel (%p441) target = $region68
        $region67: #{bottleneck_forward.1} parent=59 // pred_region
          %444 = dma.done [#allocation7], 128
        $region68: #{bottleneck_forward.1} parent=59 // pred_fallthru
          _
        // Predicated region
        $region69: #{bottleneck_forward.1} parent=59 // pred_check
          %p445 = pneg %p107
        $region70: #{bottleneck_forward.1} parent=59 // pred_check_branch
          %447 = sbr.rel (%p445) target = $region72
        $region71: #{bottleneck_forward.1} parent=59 // pred_region
          %448 = dma.done [#allocation7], 16
        $region72: #{bottleneck_forward.1} parent=59 // pred_fallthru
          _
        // Predicated region
        $region73: #{bottleneck_forward.1} parent=59 // pred_check
          %p449 = pneg %p128
        $region74: #{bottleneck_forward.1} parent=59 // pred_check_branch
          %451 = sbr.rel (%p449) target = $region76
        $region75: #{bottleneck_forward.1} parent=59 // pred_region
          %452 = dma.done [#allocation10], 16
        $region76: #{bottleneck_forward.1} parent=59 // pred_fallthru
          _
        // Predicated region
        $region77: #{bottleneck_forward.1} parent=59 // pred_check
          %p453 = pneg %p149
        $region78: #{bottleneck_forward.1} parent=59 // pred_check_branch
          %455 = sbr.rel (%p453) target = $region80
        $region79: #{bottleneck_forward.1} parent=59 // pred_region
          %456 = dma.done [#allocation10], 288
        $region80: #{bottleneck_forward.1} parent=59 // pred_fallthru
          _
        // Predicated region
        $region81: #{bottleneck_forward.1} parent=59 // pred_check
          %p457 = pneg %p170
        $region82: #{bottleneck_forward.1} parent=59 // pred_check_branch
          %459 = sbr.rel (%p457) target = $region84
        $region83: #{bottleneck_forward.1} parent=59 // pred_region
          %460 = dma.done [#allocation13], 16
        $region84: #{bottleneck_forward.1} parent=59 // pred_fallthru
          _
        // Predicated region
        $region85: #{bottleneck_forward.1} parent=59 // pred_check
          %p461 = pneg %p191
        $region86: #{bottleneck_forward.1} parent=59 // pred_check_branch
          %463 = sbr.rel (%p461) target = $region88
        $region87: #{bottleneck_forward.1} parent=59 // pred_region
          %464 = dma.done [#allocation13], 16
        $region88: #{bottleneck_forward.1} parent=59 // pred_fallthru
          _
        // Predicated region
        $region89: #{bottleneck_forward.1} parent=59 // pred_check
          %p465 = pneg %p212
        $region90: #{bottleneck_forward.1} parent=59 // pred_check_branch
          %467 = sbr.rel (%p465) target = $region92
        $region91: #{bottleneck_forward.1} parent=59 // pred_region
          %468 = dma.done [#allocation16], 32
        $region92: #{bottleneck_forward.1} parent=59 // pred_fallthru
          _
        // Predicated region
        $region93: #{bottleneck_forward.1} parent=59 // pred_check
          %p469 = pneg %p233
        $region94: #{bottleneck_forward.1} parent=59 // pred_check_branch
          %471 = sbr.rel (%p469) target = $region96
        $region95: #{bottleneck_forward.1} parent=59 // pred_region
          %472 = dma.done [#allocation16], 16
        $region96: #{bottleneck_forward.1} parent=59 // pred_fallthru
          _
        // Predicated region
        $region97: #{bottleneck_forward.1} parent=59 // pred_check
          %p473 = pneg %p254
        $region98: #{bottleneck_forward.1} parent=59 // pred_check_branch
          %475 = sbr.rel (%p473) target = $region100
        $region99: #{bottleneck_forward.1} parent=59 // pred_region
          %476 = dma.done [#allocation19], 16
        $region100: #{bottleneck_forward.1} parent=59 // pred_fallthru
          _
        %s477 = sand.u32 %s52, 1
        %s478 = scalar_lea.sflag [#allocation4], %s477
        %s479 = sand.u32 %s52, 1
        %s480 = smul.addr %s479, 288
        %s481 = scalar_lea.vmem [#allocation3], %s480
        %p482 = pneg %p65
        %p483 = pneg %p62
        %p484 = pneg %p86
        %p485 = pneg %p83
        %p486 = pneg %p107
        %p487 = pneg %p104
        %p488 = pneg %p128
        %p489 = pneg %p125
        %p490 = pneg %p149
        %p491 = pneg %p146
        %p492 = pneg %p170
        %p493 = pneg %p167
        %p494 = pneg %p191
        %p495 = pneg %p188
        %p496 = pneg %p212
        %p497 = pneg %p209
        %p498 = pneg %p233
        %p499 = pneg %p230
        %p500 = pneg %p254
        %p501 = pneg %p251
        %p502 = pneg %p282
        %p503 = pneg %p279
        %s504 = sand.u32 %s269, 1
        %s505 = scalar_lea.sflag [#allocation5], %s504
        %s506 = sand.u32 %s269, 1
        %s507 = smul.addr %s506, 144
        %s508 = scalar_lea.vmem [#allocation20], %s507
        %s509 = smul.u32 18, %s37
        %p511 = scmp.eq.s32.totalorder %s37, 0
        // Predicated region
        $region101: #{bottleneck_forward.1} parent=59 // pred_check
          %p512 = pneg %p511
        $region102: #{bottleneck_forward.1} parent=59 // pred_check_branch
          %514 = sbr.rel (%p512) target = $region104
        $region103: #{bottleneck_forward.1} parent=59 // pred_region
          %vm515 = vcmask 31744
          %516 = vst.msk [vmem:[#allocation2] sm:$0xff] %vm515, 0.0
          %517 = vst.msk [vmem:[#allocation2 + $0x8] sm:$0xff] %vm515, 0.0
          %518 = vst.msk [vmem:[#allocation2 + $0x10] sm:$0xff] %vm515, 0.0
          %519 = vst.msk [vmem:[#allocation2 + $0x18] sm:$0xff] %vm515, 0.0
          %520 = vst.msk [vmem:[#allocation2 + $0x20] sm:$0xff] %vm515, 0.0
          %521 = vst.msk [vmem:[#allocation2 + $0x28] sm:$0xff] %vm515, 0.0
          %522 = vst.msk [vmem:[#allocation2 + $0x30] sm:$0xff] %vm515, 0.0
          %523 = vst.msk [vmem:[#allocation2 + $0x38] sm:$0xff] %vm515, 0.0
          %524 = vst.msk [vmem:[#allocation2 + $0x40] sm:$0xff] %vm515, 0.0
          %525 = vst.msk [vmem:[#allocation2 + $0x48] sm:$0xff] %vm515, 0.0
          %526 = vst.msk [vmem:[#allocation2 + $0x50] sm:$0xff] %vm515, 0.0
          %527 = vst.msk [vmem:[#allocation2 + $0x58] sm:$0xff] %vm515, 0.0
          %528 = vst.msk [vmem:[#allocation2 + $0x60] sm:$0xff] %vm515, 0.0
          %529 = vst.msk [vmem:[#allocation2 + $0x68] sm:$0xff] %vm515, 0.0
          %530 = vst.msk [vmem:[#allocation2 + $0x70] sm:$0xff] %vm515, 0.0
          %531 = vst.msk [vmem:[#allocation2 + $0x78] sm:$0xff] %vm515, 0.0
          %532 = vst.msk [vmem:[#allocation2 + $0x80] sm:$0xff] %vm515, 0.0
          %533 = vst.msk [vmem:[#allocation2 + $0x88] sm:$0xff] %vm515, 0.0
          %534 = vst.msk [vmem:[#allocation2 + $0x90] sm:$0xff] %vm515, 0.0
          %535 = vst.msk [vmem:[#allocation2 + $0x98] sm:$0xff] %vm515, 0.0
          %536 = vst.msk [vmem:[#allocation2 + $0xa0] sm:$0xff] %vm515, 0.0
          %537 = vst.msk [vmem:[#allocation2 + $0xa8] sm:$0xff] %vm515, 0.0
          %538 = vst.msk [vmem:[#allocation2 + $0xb0] sm:$0xff] %vm515, 0.0
          %539 = vst.msk [vmem:[#allocation2 + $0xb8] sm:$0xff] %vm515, 0.0
          %540 = vst.msk [vmem:[#allocation2 + $0xc0] sm:$0xff] %vm515, 0.0
          %541 = vst.msk [vmem:[#allocation2 + $0xc8] sm:$0xff] %vm515, 0.0
          %542 = vst.msk [vmem:[#allocation2 + $0xd0] sm:$0xff] %vm515, 0.0
          %543 = vst.msk [vmem:[#allocation2 + $0xd8] sm:$0xff] %vm515, 0.0
          %544 = vst.msk [vmem:[#allocation2 + $0xe0] sm:$0xff] %vm515, 0.0
          %545 = vst.msk [vmem:[#allocation2 + $0xe8] sm:$0xff] %vm515, 0.0
          %546 = vst.msk [vmem:[#allocation2 + $0xf0] sm:$0xff] %vm515, 0.0
          %547 = vst.msk [vmem:[#allocation2 + $0xf8] sm:$0xff] %vm515, 0.0
          %548 = vst.msk [vmem:[#allocation2 + $0x100] sm:$0xff] %vm515, 0.0
          %549 = vst.msk [vmem:[#allocation2 + $0x108] sm:$0xff] %vm515, 0.0
          %550 = vst.msk [vmem:[#allocation2 + $0x110] sm:$0xff] %vm515, 0.0
          %551 = vst.msk [vmem:[#allocation2 + $0x118] sm:$0xff] %vm515, 0.0
          %552 = vst.msk [vmem:[#allocation2 + $0x120] sm:$0xff] %vm515, 0.0
          %553 = vst.msk [vmem:[#allocation2 + $0x128] sm:$0xff] %vm515, 0.0
          %554 = vst.msk [vmem:[#allocation2 + $0x130] sm:$0xff] %vm515, 0.0
          %555 = vst.msk [vmem:[#allocation2 + $0x138] sm:$0xff] %vm515, 0.0
          %556 = vst.msk [vmem:[#allocation2 + $0x140] sm:$0xff] %vm515, 0.0
          %557 = vst.msk [vmem:[#allocation2 + $0x148] sm:$0xff] %vm515, 0.0
          %vm558 = vcmask 29696
          %559 = vst.msk [vmem:[#allocation2 + $0x150] sm:$0x3f] %vm558, 0.0
          %v560 = vlaneseq
          %v561 = vshrl.u32 %v560, 7
          %v562 = vadd.s32 %v561, 8
          %v563 = vadd.s32 %v561, 16
          %v564 = vadd.s32 %v561, 24
          %v565 = vadd.s32 %v561, 32
          %v566 = vadd.s32 %v561, 40
          %v567 = vadd.s32 %v561, 48
          %v568 = vadd.s32 %v561, 56
          %v569 = vadd.s32 %v561, 64
          %v570 = vadd.s32 %v561, 72
          %v571 = vadd.s32 %v561, 80
          %v572 = vadd.s32 %v561, 88
          %v573 = vadd.s32 %v561, 96
          %v574 = vadd.s32 %v561, 104
          %v575 = vadd.s32 %v561, 112
          %v576 = vadd.s32 %v561, 120
          %v577 = vadd.s32 %v561, 128
          %v578 = vadd.s32 %v561, 136
          %vm579 = vcmp.lt.s32.totalorder %v561, 0
          %v580 = vsub.s32 0, %v561
          %v581 = vsel %vm579, %v580, %v561
          %v582 = vmul.u32.u64.compose %v581, 3817748708
          %v583 = vextract.low.u32 %v582
          %v584 = vextract.high.u32 %v582
          %v585 = vshrl.u32 %v584, 4
          %v586 = vmul.u32 %v585, 18
          %v587 = vsub.s32 %v581, %v586
          %v588 = vsub.s32 0, %v587
          %v589 = vsel %vm579, %v588, %v587
          %vm590 = vcmp.lt.s32.totalorder %v562, 0
          %v591 = vsub.s32 0, %v562
          %v592 = vsel %vm590, %v591, %v562
          %v593 = vmul.u32.u64.compose %v592, 3817748708
          %v594 = vextract.low.u32 %v593
          %v595 = vextract.high.u32 %v593
          %v596 = vshrl.u32 %v595, 4
          %v597 = vmul.u32 %v596, 18
          %v598 = vsub.s32 %v592, %v597
          %v599 = vsub.s32 0, %v598
          %v600 = vsel %vm590, %v599, %v598
          %vm601 = vcmp.lt.s32.totalorder %v563, 0
          %v602 = vsub.s32 0, %v563
          %v603 = vsel %vm601, %v602, %v563
          %v604 = vmul.u32.u64.compose %v603, 3817748708
          %v605 = vextract.low.u32 %v604
          %v606 = vextract.high.u32 %v604
          %v607 = vshrl.u32 %v606, 4
          %v608 = vmul.u32 %v607, 18
          %v609 = vsub.s32 %v603, %v608
          %v610 = vsub.s32 0, %v609
          %v611 = vsel %vm601, %v610, %v609
          %vm612 = vcmp.lt.s32.totalorder %v564, 0
          %v613 = vsub.s32 0, %v564
          %v614 = vsel %vm612, %v613, %v564
          %v615 = vmul.u32.u64.compose %v614, 3817748708
          %v616 = vextract.low.u32 %v615
          %v617 = vextract.high.u32 %v615
          %v618 = vshrl.u32 %v617, 4
          %v619 = vmul.u32 %v618, 18
          %v620 = vsub.s32 %v614, %v619
          %v621 = vsub.s32 0, %v620
          %v622 = vsel %vm612, %v621, %v620
          %vm623 = vcmp.lt.s32.totalorder %v565, 0
          %v624 = vsub.s32 0, %v565
          %v625 = vsel %vm623, %v624, %v565
          %v626 = vmul.u32.u64.compose %v625, 3817748708
          %v627 = vextract.low.u32 %v626
          %v628 = vextract.high.u32 %v626
          %v629 = vshrl.u32 %v628, 4
          %v630 = vmul.u32 %v629, 18
          %v631 = vsub.s32 %v625, %v630
          %v632 = vsub.s32 0, %v631
          %v633 = vsel %vm623, %v632, %v631
          %vm634 = vcmp.lt.s32.totalorder %v566, 0
          %v635 = vsub.s32 0, %v566
          %v636 = vsel %vm634, %v635, %v566
          %v637 = vmul.u32.u64.compose %v636, 3817748708
          %v638 = vextract.low.u32 %v637
          %v639 = vextract.high.u32 %v637
          %v640 = vshrl.u32 %v639, 4
          %v641 = vmul.u32 %v640, 18
          %v642 = vsub.s32 %v636, %v641
          %v643 = vsub.s32 0, %v642
          %v644 = vsel %vm634, %v643, %v642
          %vm645 = vcmp.lt.s32.totalorder %v567, 0
          %v646 = vsub.s32 0, %v567
          %v647 = vsel %vm645, %v646, %v567
          %v648 = vmul.u32.u64.compose %v647, 3817748708
          %v649 = vextract.low.u32 %v648
          %v650 = vextract.high.u32 %v648
          %v651 = vshrl.u32 %v650, 4
          %v652 = vmul.u32 %v651, 18
          %v653 = vsub.s32 %v647, %v652
          %v654 = vsub.s32 0, %v653
          %v655 = vsel %vm645, %v654, %v653
          %vm656 = vcmp.lt.s32.totalorder %v568, 0
          %v657 = vsub.s32 0, %v568
          %v658 = vsel %vm656, %v657, %v568
          %v659 = vmul.u32.u64.compose %v658, 3817748708
          %v660 = vextract.low.u32 %v659
          %v661 = vextract.high.u32 %v659
          %v662 = vshrl.u32 %v661, 4
          %v663 = vmul.u32 %v662, 18
          %v664 = vsub.s32 %v658, %v663
          %v665 = vsub.s32 0, %v664
          %v666 = vsel %vm656, %v665, %v664
          %vm667 = vcmp.lt.s32.totalorder %v569, 0
          %v668 = vsub.s32 0, %v569
          %v669 = vsel %vm667, %v668, %v569
          %v670 = vmul.u32.u64.compose %v669, 3817748708
          %v671 = vextract.low.u32 %v670
          %v672 = vextract.high.u32 %v670
          %v673 = vshrl.u32 %v672, 4
          %v674 = vmul.u32 %v673, 18
          %v675 = vsub.s32 %v669, %v674
          %v676 = vsub.s32 0, %v675
          %v677 = vsel %vm667, %v676, %v675
          %vm678 = vcmp.lt.s32.totalorder %v570, 0
          %v679 = vsub.s32 0, %v570
          %v680 = vsel %vm678, %v679, %v570
          %v681 = vmul.u32.u64.compose %v680, 3817748708
          %v682 = vextract.low.u32 %v681
          %v683 = vextract.high.u32 %v681
          %v684 = vshrl.u32 %v683, 4
          %v685 = vmul.u32 %v684, 18
          %v686 = vsub.s32 %v680, %v685
          %v687 = vsub.s32 0, %v686
          %v688 = vsel %vm678, %v687, %v686
          %vm689 = vcmp.lt.s32.totalorder %v571, 0
          %v690 = vsub.s32 0, %v571
          %v691 = vsel %vm689, %v690, %v571
          %v692 = vmul.u32.u64.compose %v691, 3817748708
          %v693 = vextract.low.u32 %v692
          %v694 = vextract.high.u32 %v692
          %v695 = vshrl.u32 %v694, 4
          %v696 = vmul.u32 %v695, 18
          %v697 = vsub.s32 %v691, %v696
          %v698 = vsub.s32 0, %v697
          %v699 = vsel %vm689, %v698, %v697
          %vm700 = vcmp.lt.s32.totalorder %v572, 0
          %v701 = vsub.s32 0, %v572
          %v702 = vsel %vm700, %v701, %v572
          %v703 = vmul.u32.u64.compose %v702, 3817748708
          %v704 = vextract.low.u32 %v703
          %v705 = vextract.high.u32 %v703
          %v706 = vshrl.u32 %v705, 4
          %v707 = vmul.u32 %v706, 18
          %v708 = vsub.s32 %v702, %v707
          %v709 = vsub.s32 0, %v708
          %v710 = vsel %vm700, %v709, %v708
          %vm711 = vcmp.lt.s32.totalorder %v573, 0
          %v712 = vsub.s32 0, %v573
          %v713 = vsel %vm711, %v712, %v573
          %v714 = vmul.u32.u64.compose %v713, 3817748708
          %v715 = vextract.low.u32 %v714
          %v716 = vextract.high.u32 %v714
          %v717 = vshrl.u32 %v716, 4
          %v718 = vmul.u32 %v717, 18
          %v719 = vsub.s32 %v713, %v718
          %v720 = vsub.s32 0, %v719
          %v721 = vsel %vm711, %v720, %v719
          %vm722 = vcmp.lt.s32.totalorder %v574, 0
          %v723 = vsub.s32 0, %v574
          %v724 = vsel %vm722, %v723, %v574
          %v725 = vmul.u32.u64.compose %v724, 3817748708
          %v726 = vextract.low.u32 %v725
          %v727 = vextract.high.u32 %v725
          %v728 = vshrl.u32 %v727, 4
          %v729 = vmul.u32 %v728, 18
          %v730 = vsub.s32 %v724, %v729
          %v731 = vsub.s32 0, %v730
          %v732 = vsel %vm722, %v731, %v730
          %vm733 = vcmp.lt.s32.totalorder %v575, 0
          %v734 = vsub.s32 0, %v575
          %v735 = vsel %vm733, %v734, %v575
          %v736 = vmul.u32.u64.compose %v735, 3817748708
          %v737 = vextract.low.u32 %v736
          %v738 = vextract.high.u32 %v736
          %v739 = vshrl.u32 %v738, 4
          %v740 = vmul.u32 %v739, 18
          %v741 = vsub.s32 %v735, %v740
          %v742 = vsub.s32 0, %v741
          %v743 = vsel %vm733, %v742, %v741
          %vm744 = vcmp.lt.s32.totalorder %v576, 0
          %v745 = vsub.s32 0, %v576
          %v746 = vsel %vm744, %v745, %v576
          %v747 = vmul.u32.u64.compose %v746, 3817748708
          %v748 = vextract.low.u32 %v747
          %v749 = vextract.high.u32 %v747
          %v750 = vshrl.u32 %v749, 4
          %v751 = vmul.u32 %v750, 18
          %v752 = vsub.s32 %v746, %v751
          %v753 = vsub.s32 0, %v752
          %v754 = vsel %vm744, %v753, %v752
          %vm755 = vcmp.lt.s32.totalorder %v577, 0
          %v756 = vsub.s32 0, %v577
          %v757 = vsel %vm755, %v756, %v577
          %v758 = vmul.u32.u64.compose %v757, 3817748708
          %v759 = vextract.low.u32 %v758
          %v760 = vextract.high.u32 %v758
          %v761 = vshrl.u32 %v760, 4
          %v762 = vmul.u32 %v761, 18
          %v763 = vsub.s32 %v757, %v762
          %v764 = vsub.s32 0, %v763
          %v765 = vsel %vm755, %v764, %v763
          %vm766 = vcmp.lt.s32.totalorder %v578, 0
          %v767 = vsub.s32 0, %v578
          %v768 = vsel %vm766, %v767, %v578
          %v769 = vmul.u32.u64.compose %v768, 3817748708
          %v770 = vextract.low.u32 %v769
          %v771 = vextract.high.u32 %v769
          %v772 = vshrl.u32 %v771, 4
          %v773 = vmul.u32 %v772, 18
          %v774 = vsub.s32 %v768, %v773
          %v775 = vsub.s32 0, %v774
          %v776 = vsel %vm766, %v775, %v774
          %vm777 = vcmp.ne.s32.totalorder %v589, 0
          %vm778 = vcmp.ne.s32.totalorder %v600, 0
          %vm779 = vcmp.ne.s32.totalorder %v611, 0
          %vm780 = vcmp.ne.s32.totalorder %v622, 0
          %vm781 = vcmp.ne.s32.totalorder %v633, 0
          %vm782 = vcmp.ne.s32.totalorder %v644, 0
          %vm783 = vcmp.ne.s32.totalorder %v655, 0
          %vm784 = vcmp.ne.s32.totalorder %v666, 0
          %vm785 = vcmp.ne.s32.totalorder %v677, 0
          %vm786 = vcmp.ne.s32.totalorder %v688, 0
          %vm787 = vcmp.ne.s32.totalorder %v699, 0
          %vm788 = vcmp.ne.s32.totalorder %v710, 0
          %vm789 = vcmp.ne.s32.totalorder %v721, 0
          %vm790 = vcmp.ne.s32.totalorder %v732, 0
          %vm791 = vcmp.ne.s32.totalorder %v743, 0
          %vm792 = vcmp.ne.s32.totalorder %v754, 0
          %vm793 = vcmp.ne.s32.totalorder %v765, 0
          %vm794 = vcmp.ne.s32.totalorder %v776, 0
          %vm795 = vcmp.lt.s32.totalorder %v589, 0
          %vm796 = vcmp.lt.s32.totalorder %v600, 0
          %vm797 = vcmp.lt.s32.totalorder %v611, 0
          %vm798 = vcmp.lt.s32.totalorder %v622, 0
          %vm799 = vcmp.lt.s32.totalorder %v633, 0
          %vm800 = vcmp.lt.s32.totalorder %v644, 0
          %vm801 = vcmp.lt.s32.totalorder %v655, 0
          %vm802 = vcmp.lt.s32.totalorder %v666, 0
          %vm803 = vcmp.lt.s32.totalorder %v677, 0
          %vm804 = vcmp.lt.s32.totalorder %v688, 0
          %vm805 = vcmp.lt.s32.totalorder %v699, 0
          %vm806 = vcmp.lt.s32.totalorder %v710, 0
          %vm807 = vcmp.lt.s32.totalorder %v721, 0
          %vm808 = vcmp.lt.s32.totalorder %v732, 0
          %vm809 = vcmp.lt.s32.totalorder %v743, 0
          %vm810 = vcmp.lt.s32.totalorder %v754, 0
          %vm811 = vcmp.lt.s32.totalorder %v765, 0
          %vm812 = vcmp.lt.s32.totalorder %v776, 0
          %vm813 = vmand %vm795, %vm777
          %vm814 = vmand %vm796, %vm778
          %vm815 = vmand %vm797, %vm779
          %vm816 = vmand %vm798, %vm780
          %vm817 = vmand %vm799, %vm781
          %vm818 = vmand %vm800, %vm782
          %vm819 = vmand %vm801, %vm783
          %vm820 = vmand %vm802, %vm784
          %vm821 = vmand %vm803, %vm785
          %vm822 = vmand %vm804, %vm786
          %vm823 = vmand %vm805, %vm787
          %vm824 = vmand %vm806, %vm788
          %vm825 = vmand %vm807, %vm789
          %vm826 = vmand %vm808, %vm790
          %vm827 = vmand %vm809, %vm791
          %vm828 = vmand %vm810, %vm792
          %vm829 = vmand %vm811, %vm793
          %vm830 = vmand %vm812, %vm794
          %v831 = vadd.s32 %v589, 18
          %v832 = vadd.s32 %v600, 18
          %v833 = vadd.s32 %v611, 18
          %v834 = vadd.s32 %v622, 18
          %v835 = vadd.s32 %v633, 18
          %v836 = vadd.s32 %v644, 18
          %v837 = vadd.s32 %v655, 18
          %v838 = vadd.s32 %v666, 18
          %v839 = vadd.s32 %v677, 18
          %v840 = vadd.s32 %v688, 18
          %v841 = vadd.s32 %v699, 18
          %v842 = vadd.s32 %v710, 18
          %v843 = vadd.s32 %v721, 18
          %v844 = vadd.s32 %v732, 18
          %v845 = vadd.s32 %v743, 18
          %v846 = vadd.s32 %v754, 18
          %v847 = vadd.s32 %v765, 18
          %v848 = vadd.s32 %v776, 18
          %v849 = vsel %vm813, %v831, %v589
          %v850 = vsel %vm814, %v832, %v600
          %v851 = vsel %vm815, %v833, %v611
          %v852 = vsel %vm816, %v834, %v622
          %v853 = vsel %vm817, %v835, %v633
          %v854 = vsel %vm818, %v836, %v644
          %v855 = vsel %vm819, %v837, %v655
          %v856 = vsel %vm820, %v838, %v666
          %v857 = vsel %vm821, %v839, %v677
          %v858 = vsel %vm822, %v840, %v688
          %v859 = vsel %vm823, %v841, %v699
          %v860 = vsel %vm824, %v842, %v710
          %v861 = vsel %vm825, %v843, %v721
          %v862 = vsel %vm826, %v844, %v732
          %v863 = vsel %vm827, %v845, %v743
          %v864 = vsel %vm828, %v846, %v754
          %v865 = vsel %vm829, %v847, %v765
          %v866 = vsel %vm830, %v848, %v776
          %vm867 = vcmp.lt.s32.totalorder %v849, 16
          %vm868 = vcmp.lt.s32.totalorder %v850, 16
          %vm869 = vcmp.lt.s32.totalorder %v851, 16
          %vm870 = vcmp.lt.s32.totalorder %v852, 16
          %vm871 = vcmp.lt.s32.totalorder %v853, 16
          %vm872 = vcmp.lt.s32.totalorder %v854, 16
          %vm873 = vcmp.lt.s32.totalorder %v855, 16
          %vm874 = vcmp.lt.s32.totalorder %v856, 16
          %vm875 = vcmp.lt.s32.totalorder %v857, 16
          %vm876 = vcmp.lt.s32.totalorder %v858, 16
          %vm877 = vcmp.lt.s32.totalorder %v859, 16
          %vm878 = vcmp.lt.s32.totalorder %v860, 16
          %vm879 = vcmp.lt.s32.totalorder %v861, 16
          %vm880 = vcmp.lt.s32.totalorder %v862, 16
          %vm881 = vcmp.lt.s32.totalorder %v863, 16
          %vm882 = vcmp.lt.s32.totalorder %v864, 16
          %vm883 = vcmp.lt.s32.totalorder %v865, 16
          %vm884 = vcmp.lt.s32.totalorder %v866, 16
          %v885 = vld [vmem:[#allocation6] sm:$0xf]
          %v886 = vld [vmem:[#allocation6 + $0x4] sm:$0xf]
          %v887 = vld [vmem:[#allocation8] sm:$0x1]
          %v888 = vld [vmem:[#allocation9] sm:$0x1]
          %v889 = vld [vmem:[%s436] sm:$0xff]
          %v890 = vld [vmem:[%s436 + $0x8] sm:$0xff]
          %v891 = vld [vmem:[%s436 + $0x10] sm:$0xff]
          %v892 = vld [vmem:[%s436 + $0x18] sm:$0xff]
          %v893 = vld [vmem:[%s436 + $0x20] sm:$0xff]
          %v894 = vld [vmem:[%s436 + $0x28] sm:$0xff]
          %v895 = vld [vmem:[%s436 + $0x30] sm:$0xff]
          %v896 = vld [vmem:[%s436 + $0x38] sm:$0xff]
          %v897 = vld [vmem:[%s436 + $0x40] sm:$0xff]
          %v898 = vld [vmem:[%s436 + $0x48] sm:$0xff]
          %v899 = vld [vmem:[%s436 + $0x50] sm:$0xff]
          %v900 = vld [vmem:[%s436 + $0x58] sm:$0xff]
          %v901 = vld [vmem:[%s436 + $0x60] sm:$0xff]
          %v902 = vld [vmem:[%s436 + $0x68] sm:$0xff]
          %v903 = vld [vmem:[%s436 + $0x70] sm:$0xff]
          %v904 = vld [vmem:[%s436 + $0x78] sm:$0xff]
          %v905 = vld [vmem:[%s436 + $0x80] sm:$0xff]
          %v906 = vld [vmem:[%s436 + $0x88] sm:$0xff]
          %v907 = vpack.c.bf16 %v890, %v889
          %v908 = vpack.c.bf16 %v892, %v891
          %v909 = vpack.c.bf16 %v894, %v893
          %v910 = vpack.c.bf16 %v896, %v895
          %v911 = vpack.c.bf16 %v898, %v897
          %v912 = vpack.c.bf16 %v900, %v899
          %v913 = vpack.c.bf16 %v902, %v901
          %v914 = vpack.c.bf16 %v904, %v903
          %v915 = vpack.c.bf16 %v906, %v905
          %v918 = vunpack.c.l.b16 %v885
          %v919 = vunpack.c.l.b16 %v886
          %v920 = vpack.c.b16 %v919, %v918
          %vm922 = vcmask 130048
          %v924 = vsel %vm922, %v907, 0
          %v927 = vsel %vm922, %v908, 0
          %v930 = vsel %vm922, %v909, 0
          %v933 = vsel %vm922, %v910, 0
          %v936 = vsel %vm922, %v911, 0
          %v939 = vsel %vm922, %v912, 0
          %v942 = vsel %vm922, %v913, 0
          %v945 = vsel %vm922, %v914, 0
          %v948 = vsel %vm922, %v915, 0
          %950 = vmatprep.subr.bf16.mxu0 0
          %951 = vmatpush1.bf16.msra.mxu0 %v920
          %952 = vmatprep.subr.bf16.mxu0 0
          %953 = vmatpush1.bf16.msra.mxu0 0
          %954 = vmatprep.subr.bf16.mxu0 0
          %955 = vmatpush1.bf16.msra.mxu0 0
          %956 = vmatprep.subr.bf16.mxu0 0
          %957 = vmatpush1.bf16.msra.mxu0 0
          %958 = vmatprep.subr.bf16.mxu0 0
          %959 = vmatpush1.bf16.msra.mxu0 0
          %960 = vmatprep.subr.bf16.mxu0 0
          %961 = vmatpush1.bf16.msra.mxu0 0
          %962 = vmatprep.subr.bf16.mxu0 0
          %963 = vmatpush1.bf16.msra.mxu0 0
          %964 = vmatprep.subr.bf16.mxu0 0
          %965 = vmatpush1.bf16.msra.mxu0 0
          %966 = vmatprep.subr.bf16.mxu0 0
          %967 = vmatpush1.bf16.msra.mxu0 0
          %968 = vmatprep.subr.bf16.mxu0 0
          %969 = vmatpush1.bf16.msra.mxu0 0
          %970 = vmatprep.subr.bf16.mxu0 0
          %971 = vmatpush1.bf16.msra.mxu0 0
          %972 = vmatprep.subr.bf16.mxu0 0
          %973 = vmatpush1.bf16.msra.mxu0 0
          %974 = vmatprep.subr.bf16.mxu0 0
          %975 = vmatpush1.bf16.msra.mxu0 0
          %976 = vmatprep.subr.bf16.mxu0 0
          %977 = vmatpush1.bf16.msra.mxu0 0
          %978 = vmatprep.subr.bf16.mxu0 0
          %979 = vmatpush1.bf16.msra.mxu0 0
          %980 = vmatprep.subr.bf16.mxu0 0
          %981 = vmatpush1.bf16.msra.mxu0 0
          %982 = vmatprep.mubr.bf16.mxu0 0
          %983 = vmatmul.mubr.bf16.gmra.mrb[0].mxu0 %v924
          %v984 = vpop.f32.mrb[0].mxu0
          %v985 = vadd.f32 0.0, %v984
          %v986 = vpop.f32.mrb[0].mxu0
          %v987 = vpop.f32.mrb[0].mxu0
          %v988 = vadd.f32 0.0, %v987
          %v989 = vpop.f32.mrb[0].mxu0
          %990 = vmatprep.mubr.bf16.mxu0 0
          %991 = vmatmul.mubr.bf16.gmra.mrb[0].mxu0 %v927
          %v992 = vpop.f32.mrb[0].mxu0
          %v993 = vadd.f32 0.0, %v992
          %v994 = vpop.f32.mrb[0].mxu0
          %v995 = vpop.f32.mrb[0].mxu0
          %v996 = vadd.f32 0.0, %v995
          %v997 = vpop.f32.mrb[0].mxu0
          %998 = vmatprep.mubr.bf16.mxu0 0
          %999 = vmatmul.mubr.bf16.gmra.mrb[0].mxu0 %v930
          %v1000 = vpop.f32.mrb[0].mxu0
          %v1001 = vadd.f32 0.0, %v1000
          %v1002 = vpop.f32.mrb[0].mxu0
          %v1003 = vpop.f32.mrb[0].mxu0
          %v1004 = vadd.f32 0.0, %v1003
          %v1005 = vpop.f32.mrb[0].mxu0
          %1006 = vmatprep.mubr.bf16.mxu0 0
          %1007 = vmatmul.mubr.bf16.gmra.mrb[0].mxu0 %v933
          %v1008 = vpop.f32.mrb[0].mxu0
          %v1009 = vadd.f32 0.0, %v1008
          %v1010 = vpop.f32.mrb[0].mxu0
          %v1011 = vpop.f32.mrb[0].mxu0
          %v1012 = vadd.f32 0.0, %v1011
          %v1013 = vpop.f32.mrb[0].mxu0
          %1014 = vmatprep.mubr.bf16.mxu0 0
          %1015 = vmatmul.mubr.bf16.gmra.mrb[0].mxu0 %v936
          %v1016 = vpop.f32.mrb[0].mxu0
          %v1017 = vadd.f32 0.0, %v1016
          %v1018 = vpop.f32.mrb[0].mxu0
          %v1019 = vpop.f32.mrb[0].mxu0
          %v1020 = vadd.f32 0.0, %v1019
          %v1021 = vpop.f32.mrb[0].mxu0
          %1022 = vmatprep.mubr.bf16.mxu0 0
          %1023 = vmatmul.mubr.bf16.gmra.mrb[0].mxu0 %v939
          %v1024 = vpop.f32.mrb[0].mxu0
          %v1025 = vadd.f32 0.0, %v1024
          %v1026 = vpop.f32.mrb[0].mxu0
          %v1027 = vpop.f32.mrb[0].mxu0
          %v1028 = vadd.f32 0.0, %v1027
          %v1029 = vpop.f32.mrb[0].mxu0
          %1030 = vmatprep.mubr.bf16.mxu0 0
          %1031 = vmatmul.mubr.bf16.gmra.mrb[0].mxu0 %v942
          %v1032 = vpop.f32.mrb[0].mxu0
          %v1033 = vadd.f32 0.0, %v1032
          %v1034 = vpop.f32.mrb[0].mxu0
          %v1035 = vpop.f32.mrb[0].mxu0
          %v1036 = vadd.f32 0.0, %v1035
          %v1037 = vpop.f32.mrb[0].mxu0
          %1038 = vmatprep.mubr.bf16.mxu0 0
          %1039 = vmatmul.mubr.bf16.gmra.mrb[0].mxu0 %v945
          %v1040 = vpop.f32.mrb[0].mxu0
          %v1041 = vadd.f32 0.0, %v1040
          %v1042 = vpop.f32.mrb[0].mxu0
          %v1043 = vpop.f32.mrb[0].mxu0
          %v1044 = vadd.f32 0.0, %v1043
          %v1045 = vpop.f32.mrb[0].mxu0
          %1046 = vmatprep.mubr.bf16.mxu0 0
          %1047 = vmatmul.mubr.bf16.gmra.mrb[0].mxu0 %v948
          %v1048 = vpop.f32.mrb[0].mxu0
          %v1049 = vadd.f32 0.0, %v1048
          %v1050 = vpop.f32.mrb[0].mxu0
          %v1051 = vpop.f32.mrb[0].mxu0
          %v1052 = vadd.f32 0.0, %v1051
          %v1053 = vpop.f32.mrb[0].mxu0
          %1054 = vdwg.mxu0
          %v1056 = vlaneseq
          %v1057 = vshrl.u32 %v1056, 7
          %v1058 = vsub.s32 0, %v1057
          %v1059 = vrot.slane %v887, %v1058
          %v1061 = vmul.f32 %v985, %v1059
          %v1062 = vmul.f32 %v988, %v1059
          %v1063 = vmul.f32 %v993, %v1059
          %v1064 = vmul.f32 %v996, %v1059
          %v1065 = vmul.f32 %v1001, %v1059
          %v1066 = vmul.f32 %v1004, %v1059
          %v1067 = vmul.f32 %v1009, %v1059
          %v1068 = vmul.f32 %v1012, %v1059
          %v1069 = vmul.f32 %v1017, %v1059
          %v1070 = vmul.f32 %v1020, %v1059
          %v1071 = vmul.f32 %v1025, %v1059
          %v1072 = vmul.f32 %v1028, %v1059
          %v1073 = vmul.f32 %v1033, %v1059
          %v1074 = vmul.f32 %v1036, %v1059
          %v1075 = vmul.f32 %v1041, %v1059
          %v1076 = vmul.f32 %v1044, %v1059
          %v1077 = vmul.f32 %v1049, %v1059
          %v1078 = vmul.f32 %v1052, %v1059
          %v1080 = vlaneseq
          %v1081 = vshrl.u32 %v1080, 7
          %v1082 = vsub.s32 0, %v1081
          %v1083 = vrot.slane %v888, %v1082
          %v1085 = vadd.f32 %v1061, %v1083
          %v1086 = vadd.f32 %v1062, %v1083
          %v1087 = vadd.f32 %v1063, %v1083
          %v1088 = vadd.f32 %v1064, %v1083
          %v1089 = vadd.f32 %v1065, %v1083
          %v1090 = vadd.f32 %v1066, %v1083
          %v1091 = vadd.f32 %v1067, %v1083
          %v1092 = vadd.f32 %v1068, %v1083
          %v1093 = vadd.f32 %v1069, %v1083
          %v1094 = vadd.f32 %v1070, %v1083
          %v1095 = vadd.f32 %v1071, %v1083
          %v1096 = vadd.f32 %v1072, %v1083
          %v1097 = vadd.f32 %v1073, %v1083
          %v1098 = vadd.f32 %v1074, %v1083
          %v1099 = vadd.f32 %v1075, %v1083
          %v1100 = vadd.f32 %v1076, %v1083
          %v1101 = vadd.f32 %v1077, %v1083
          %v1102 = vadd.f32 %v1078, %v1083
          %v1103 = vmax.f32 %v1085, 0.0
          %v1104 = vmax.f32 %v1086, 0.0
          %v1105 = vmax.f32 %v1087, 0.0
          %v1106 = vmax.f32 %v1088, 0.0
          %v1107 = vmax.f32 %v1089, 0.0
          %v1108 = vmax.f32 %v1090, 0.0
          %v1109 = vmax.f32 %v1091, 0.0
          %v1110 = vmax.f32 %v1092, 0.0
          %v1111 = vmax.f32 %v1093, 0.0
          %v1112 = vmax.f32 %v1094, 0.0
          %v1113 = vmax.f32 %v1095, 0.0
          %v1114 = vmax.f32 %v1096, 0.0
          %v1115 = vmax.f32 %v1097, 0.0
          %v1116 = vmax.f32 %v1098, 0.0
          %v1117 = vmax.f32 %v1099, 0.0
          %v1118 = vmax.f32 %v1100, 0.0
          %v1119 = vmax.f32 %v1101, 0.0
          %v1120 = vmax.f32 %v1102, 0.0
          %v1121 = vsel %vm867, 1, 0
          %v1122 = vsel %vm868, 1, 0
          %v1123 = vsel %vm869, 1, 0
          %v1124 = vsel %vm870, 1, 0
          %v1125 = vsel %vm871, 1, 0
          %v1126 = vsel %vm872, 1, 0
          %v1127 = vsel %vm873, 1, 0
          %v1128 = vsel %vm874, 1, 0
          %v1129 = vsel %vm875, 1, 0
          %v1130 = vsel %vm876, 1, 0
          %v1131 = vsel %vm877, 1, 0
          %v1132 = vsel %vm878, 1, 0
          %v1133 = vsel %vm879, 1, 0
          %v1134 = vsel %vm880, 1, 0
          %v1135 = vsel %vm881, 1, 0
          %v1136 = vsel %vm882, 1, 0
          %v1137 = vsel %vm883, 1, 0
          %v1138 = vsel %vm884, 1, 0
          %vm1139 = vcmp.eq.s32.totalorder %v1121, 1
          %vm1140 = vcmp.eq.s32.totalorder %v1122, 1
          %vm1141 = vcmp.eq.s32.totalorder %v1123, 1
          %vm1142 = vcmp.eq.s32.totalorder %v1124, 1
          %vm1143 = vcmp.eq.s32.totalorder %v1125, 1
          %vm1144 = vcmp.eq.s32.totalorder %v1126, 1
          %vm1145 = vcmp.eq.s32.totalorder %v1127, 1
          %vm1146 = vcmp.eq.s32.totalorder %v1128, 1
          %vm1147 = vcmp.eq.s32.totalorder %v1129, 1
          %vm1148 = vcmp.eq.s32.totalorder %v1130, 1
          %vm1149 = vcmp.eq.s32.totalorder %v1131, 1
          %vm1150 = vcmp.eq.s32.totalorder %v1132, 1
          %vm1151 = vcmp.eq.s32.totalorder %v1133, 1
          %vm1152 = vcmp.eq.s32.totalorder %v1134, 1
          %vm1153 = vcmp.eq.s32.totalorder %v1135, 1
          %vm1154 = vcmp.eq.s32.totalorder %v1136, 1
          %vm1155 = vcmp.eq.s32.totalorder %v1137, 1
          %vm1156 = vcmp.eq.s32.totalorder %v1138, 1
          %v1157 = vsel %vm1139, %v1103, 0.0
          %v1158 = vsel %vm1140, %v1104, 0.0
          %v1159 = vsel %vm1141, %v1105, 0.0
          %v1160 = vsel %vm1142, %v1106, 0.0
          %v1161 = vsel %vm1143, %v1107, 0.0
          %v1162 = vsel %vm1144, %v1108, 0.0
          %v1163 = vsel %vm1145, %v1109, 0.0
          %v1164 = vsel %vm1146, %v1110, 0.0
          %v1165 = vsel %vm1147, %v1111, 0.0
          %v1166 = vsel %vm1148, %v1112, 0.0
          %v1167 = vsel %vm1149, %v1113, 0.0
          %v1168 = vsel %vm1150, %v1114, 0.0
          %v1169 = vsel %vm1151, %v1115, 0.0
          %v1170 = vsel %vm1152, %v1116, 0.0
          %v1171 = vsel %vm1153, %v1117, 0.0
          %v1172 = vsel %vm1154, %v1118, 0.0
          %v1173 = vsel %vm1155, %v1119, 0.0
          %v1174 = vsel %vm1156, %v1120, 0.0
          %1175 = vst.msk [vmem:[#allocation2 + $0x13] sm:$0xff] %vm515, %v1157
          %1176 = vst.msk [vmem:[#allocation2 + $0x1b] sm:$0xff] %vm515, %v1158
          %1177 = vst.msk [vmem:[#allocation2 + $0x23] sm:$0xff] %vm515, %v1159
          %1178 = vst.msk [vmem:[#allocation2 + $0x2b] sm:$0xff] %vm515, %v1160
          %1179 = vst.msk [vmem:[#allocation2 + $0x33] sm:$0xff] %vm515, %v1161
          %1180 = vst.msk [vmem:[#allocation2 + $0x3b] sm:$0xff] %vm515, %v1162
          %1181 = vst.msk [vmem:[#allocation2 + $0x43] sm:$0xff] %vm515, %v1163
          %1182 = vst.msk [vmem:[#allocation2 + $0x4b] sm:$0xff] %vm515, %v1164
          %1183 = vst.msk [vmem:[#allocation2 + $0x53] sm:$0xff] %vm515, %v1165
          %1184 = vst.msk [vmem:[#allocation2 + $0x5b] sm:$0xff] %vm515, %v1166
          %1185 = vst.msk [vmem:[#allocation2 + $0x63] sm:$0xff] %vm515, %v1167
          %1186 = vst.msk [vmem:[#allocation2 + $0x6b] sm:$0xff] %vm515, %v1168
          %1187 = vst.msk [vmem:[#allocation2 + $0x73] sm:$0xff] %vm515, %v1169
          %1188 = vst.msk [vmem:[#allocation2 + $0x7b] sm:$0xff] %vm515, %v1170
          %1189 = vst.msk [vmem:[#allocation2 + $0x83] sm:$0xff] %vm515, %v1171
          %1190 = vst.msk [vmem:[#allocation2 + $0x8b] sm:$0xff] %vm515, %v1172
          %1191 = vst.msk [vmem:[#allocation2 + $0x93] sm:$0xff] %vm515, %v1173
          %1192 = vst.msk [vmem:[#allocation2 + $0x9b] sm:$0xff] %vm515, %v1174
          %v1193 = vld [vmem:[%s436 + $0x90] sm:$0xff]
          %v1194 = vld [vmem:[%s436 + $0x98] sm:$0xff]
          %v1195 = vld [vmem:[%s436 + $0xa0] sm:$0xff]
          %v1196 = vld [vmem:[%s436 + $0xa8] sm:$0xff]
          %v1197 = vld [vmem:[%s436 + $0xb0] sm:$0xff]
          %v1198 = vld [vmem:[%s436 + $0xb8] sm:$0xff]
          %v1199 = vld [vmem:[%s436 + $0xc0] sm:$0xff]
          %v1200 = vld [vmem:[%s436 + $0xc8] sm:$0xff]
          %v1201 = vld [vmem:[%s436 + $0xd0] sm:$0xff]
          %v1202 = vld [vmem:[%s436 + $0xd8] sm:$0xff]
          %v1203 = vld [vmem:[%s436 + $0xe0] sm:$0xff]
          %v1204 = vld [vmem:[%s436 + $0xe8] sm:$0xff]
          %v1205 = vld [vmem:[%s436 + $0xf0] sm:$0xff]
          %v1206 = vld [vmem:[%s436 + $0xf8] sm:$0xff]
          %v1207 = vld [vmem:[%s436 + $0x100] sm:$0xff]
          %v1208 = vld [vmem:[%s436 + $0x108] sm:$0xff]
          %v1209 = vld [vmem:[%s436 + $0x110] sm:$0xff]
          %v1210 = vld [vmem:[%s436 + $0x118] sm:$0xff]
          %v1211 = vpack.c.bf16 %v1194, %v1193
          %v1212 = vpack.c.bf16 %v1196, %v1195
          %v1213 = vpack.c.bf16 %v1198, %v1197
          %v1214 = vpack.c.bf16 %v1200, %v1199
          %v1215 = vpack.c.bf16 %v1202, %v1201
          %v1216 = vpack.c.bf16 %v1204, %v1203
          %v1217 = vpack.c.bf16 %v1206, %v1205
          %v1218 = vpack.c.bf16 %v1208, %v1207
          %v1219 = vpack.c.bf16 %v1210, %v1209
          %v1221 = vsel %vm922, %v1211, 0
          %v1224 = vsel %vm922, %v1212, 0
          %v1227 = vsel %vm922, %v1213, 0
          %v1230 = vsel %vm922, %v1214, 0
          %v1233 = vsel %vm922, %v1215, 0
          %v1236 = vsel %vm922, %v1216, 0
          %v1239 = vsel %vm922, %v1217, 0
          %v1242 = vsel %vm922, %v1218, 0
          %v1245 = vsel %vm922, %v1219, 0
          %1247 = vmatprep.subr.bf16.mxu0 0
          %1248 = vmatpush1.bf16.msra.mxu0 %v920
          %1249 = vmatprep.subr.bf16.mxu0 0
          %1250 = vmatpush1.bf16.msra.mxu0 0
          %1251 = vmatprep.subr.bf16.mxu0 0
          %1252 = vmatpush1.bf16.msra.mxu0 0
          %1253 = vmatprep.subr.bf16.mxu0 0
          %1254 = vmatpush1.bf16.msra.mxu0 0
          %1255 = vmatprep.subr.bf16.mxu0 0
          %1256 = vmatpush1.bf16.msra.mxu0 0
          %1257 = vmatprep.subr.bf16.mxu0 0
          %1258 = vmatpush1.bf16.msra.mxu0 0
          %1259 = vmatprep.subr.bf16.mxu0 0
          %1260 = vmatpush1.bf16.msra.mxu0 0
          %1261 = vmatprep.subr.bf16.mxu0 0
          %1262 = vmatpush1.bf16.msra.mxu0 0
          %1263 = vmatprep.subr.bf16.mxu0 0
          %1264 = vmatpush1.bf16.msra.mxu0 0
          %1265 = vmatprep.subr.bf16.mxu0 0
          %1266 = vmatpush1.bf16.msra.mxu0 0
          %1267 = vmatprep.subr.bf16.mxu0 0
          %1268 = vmatpush1.bf16.msra.mxu0 0
          %1269 = vmatprep.subr.bf16.mxu0 0
          %1270 = vmatpush1.bf16.msra.mxu0 0
          %1271 = vmatprep.subr.bf16.mxu0 0
          %1272 = vmatpush1.bf16.msra.mxu0 0
          %1273 = vmatprep.subr.bf16.mxu0 0
          %1274 = vmatpush1.bf16.msra.mxu0 0
          %1275 = vmatprep.subr.bf16.mxu0 0
          %1276 = vmatpush1.bf16.msra.mxu0 0
          %1277 = vmatprep.subr.bf16.mxu0 0
          %1278 = vmatpush1.bf16.msra.mxu0 0
          %1279 = vmatprep.mubr.bf16.mxu0 0
          %1280 = vmatmul.mubr.bf16.gmra.mrb[0].mxu0 %v1221
          %v1281 = vpop.f32.mrb[0].mxu0
          %v1282 = vadd.f32 0.0, %v1281
          %v1283 = vpop.f32.mrb[0].mxu0
          %v1284 = vpop.f32.mrb[0].mxu0
          %v1285 = vadd.f32 0.0, %v1284
          %v1286 = vpop.f32.mrb[0].mxu0
          %1287 = vmatprep.mubr.bf16.mxu0 0
          %1288 = vmatmul.mubr.bf16.gmra.mrb[0].mxu0 %v1224
          %v1289 = vpop.f32.mrb[0].mxu0
          %v1290 = vadd.f32 0.0, %v1289
          %v1291 = vpop.f32.mrb[0].mxu0
          %v1292 = vpop.f32.mrb[0].mxu0
          %v1293 = vadd.f32 0.0, %v1292
          %v1294 = vpop.f32.mrb[0].mxu0
          %1295 = vmatprep.mubr.bf16.mxu0 0
          %1296 = vmatmul.mubr.bf16.gmra.mrb[0].mxu0 %v1227
          %v1297 = vpop.f32.mrb[0].mxu0
          %v1298 = vadd.f32 0.0, %v1297
          %v1299 = vpop.f32.mrb[0].mxu0
          %v1300 = vpop.f32.mrb[0].mxu0
          %v1301 = vadd.f32 0.0, %v1300
          %v1302 = vpop.f32.mrb[0].mxu0
          %1303 = vmatprep.mubr.bf16.mxu0 0
          %1304 = vmatmul.mubr.bf16.gmra.mrb[0].mxu0 %v1230
          %v1305 = vpop.f32.mrb[0].mxu0
          %v1306 = vadd.f32 0.0, %v1305
          %v1307 = vpop.f32.mrb[0].mxu0
          %v1308 = vpop.f32.mrb[0].mxu0
          %v1309 = vadd.f32 0.0, %v1308
          %v1310 = vpop.f32.mrb[0].mxu0
          %1311 = vmatprep.mubr.bf16.mxu0 0
          %1312 = vmatmul.mubr.bf16.gmra.mrb[0].mxu0 %v1233
          %v1313 = vpop.f32.mrb[0].mxu0
          %v1314 = vadd.f32 0.0, %v1313
          %v1315 = vpop.f32.mrb[0].mxu0
          %v1316 = vpop.f32.mrb[0].mxu0
          %v1317 = vadd.f32 0.0, %v1316
          %v1318 = vpop.f32.mrb[0].mxu0
          %1319 = vmatprep.mubr.bf16.mxu0 0
          %1320 = vmatmul.mubr.bf16.gmra.mrb[0].mxu0 %v1236
          %v1321 = vpop.f32.mrb[0].mxu0
          %v1322 = vadd.f32 0.0, %v1321
          %v1323 = vpop.f32.mrb[0].mxu0
          %v1324 = vpop.f32.mrb[0].mxu0
          %v1325 = vadd.f32 0.0, %v1324
          %v1326 = vpop.f32.mrb[0].mxu0
          %1327 = vmatprep.mubr.bf16.mxu0 0
          %1328 = vmatmul.mubr.bf16.gmra.mrb[0].mxu0 %v1239
          %v1329 = vpop.f32.mrb[0].mxu0
          %v1330 = vadd.f32 0.0, %v1329
          %v1331 = vpop.f32.mrb[0].mxu0
          %v1332 = vpop.f32.mrb[0].mxu0
          %v1333 = vadd.f32 0.0, %v1332
          %v1334 = vpop.f32.mrb[0].mxu0
          %1335 = vmatprep.mubr.bf16.mxu0 0
          %1336 = vmatmul.mubr.bf16.gmra.mrb[0].mxu0 %v1242
          %v1337 = vpop.f32.mrb[0].mxu0
          %v1338 = vadd.f32 0.0, %v1337
          %v1339 = vpop.f32.mrb[0].mxu0
          %v1340 = vpop.f32.mrb[0].mxu0
          %v1341 = vadd.f32 0.0, %v1340
          %v1342 = vpop.f32.mrb[0].mxu0
          %1343 = vmatprep.mubr.bf16.mxu0 0
          %1344 = vmatmul.mubr.bf16.gmra.mrb[0].mxu0 %v1245
          %v1345 = vpop.f32.mrb[0].mxu0
          %v1346 = vadd.f32 0.0, %v1345
          %v1347 = vpop.f32.mrb[0].mxu0
          %v1348 = vpop.f32.mrb[0].mxu0
          %v1349 = vadd.f32 0.0, %v1348
          %v1350 = vpop.f32.mrb[0].mxu0
          %1351 = vdwg.mxu0
          %v1352 = vmul.f32 %v1282, %v1059
          %v1353 = vmul.f32 %v1285, %v1059
          %v1354 = vmul.f32 %v1290, %v1059
          %v1355 = vmul.f32 %v1293, %v1059
          %v1356 = vmul.f32 %v1298, %v1059
          %v1357 = vmul.f32 %v1301, %v1059
          %v1358 = vmul.f32 %v1306, %v1059
          %v1359 = vmul.f32 %v1309, %v1059
          %v1360 = vmul.f32 %v1314, %v1059
          %v1361 = vmul.f32 %v1317, %v1059
          %v1362 = vmul.f32 %v1322, %v1059
          %v1363 = vmul.f32 %v1325, %v1059
          %v1364 = vmul.f32 %v1330, %v1059
          %v1365 = vmul.f32 %v1333, %v1059
          %v1366 = vmul.f32 %v1338, %v1059
          %v1367 = vmul.f32 %v1341, %v1059
          %v1368 = vmul.f32 %v1346, %v1059
          %v1369 = vmul.f32 %v1349, %v1059
          %v1370 = vadd.f32 %v1352, %v1083
          %v1371 = vadd.f32 %v1353, %v1083
          %v1372 = vadd.f32 %v1354, %v1083
          %v1373 = vadd.f32 %v1355, %v1083
          %v1374 = vadd.f32 %v1356, %v1083
          %v1375 = vadd.f32 %v1357, %v1083
          %v1376 = vadd.f32 %v1358, %v1083
          %v1377 = vadd.f32 %v1359, %v1083
          %v1378 = vadd.f32 %v1360, %v1083
          %v1379 = vadd.f32 %v1361, %v1083
          %v1380 = vadd.f32 %v1362, %v1083
          %v1381 = vadd.f32 %v1363, %v1083
          %v1382 = vadd.f32 %v1364, %v1083
          %v1383 = vadd.f32 %v1365, %v1083
          %v1384 = vadd.f32 %v1366, %v1083
          %v1385 = vadd.f32 %v1367, %v1083
          %v1386 = vadd.f32 %v1368, %v1083
          %v1387 = vadd.f32 %v1369, %v1083
          %v1388 = vmax.f32 %v1370, 0.0
          %v1389 = vmax.f32 %v1371, 0.0
          %v1390 = vmax.f32 %v1372, 0.0
          %v1391 = vmax.f32 %v1373, 0.0
          %v1392 = vmax.f32 %v1374, 0.0
          %v1393 = vmax.f32 %v1375, 0.0
          %v1394 = vmax.f32 %v1376, 0.0
          %v1395 = vmax.f32 %v1377, 0.0
          %v1396 = vmax.f32 %v1378, 0.0
          %v1397 = vmax.f32 %v1379, 0.0
          %v1398 = vmax.f32 %v1380, 0.0
          %v1399 = vmax.f32 %v1381, 0.0
          %v1400 = vmax.f32 %v1382, 0.0
          %v1401 = vmax.f32 %v1383, 0.0
          %v1402 = vmax.f32 %v1384, 0.0
          %v1403 = vmax.f32 %v1385, 0.0
          %v1404 = vmax.f32 %v1386, 0.0
          %v1405 = vmax.f32 %v1387, 0.0
          %v1406 = vsel %vm1139, %v1388, 0.0
          %v1407 = vsel %vm1140, %v1389, 0.0
          %v1408 = vsel %vm1141, %v1390, 0.0
          %v1409 = vsel %vm1142, %v1391, 0.0
          %v1410 = vsel %vm1143, %v1392, 0.0
          %v1411 = vsel %vm1144, %v1393, 0.0
          %v1412 = vsel %vm1145, %v1394, 0.0
          %v1413 = vsel %vm1146, %v1395, 0.0
          %v1414 = vsel %vm1147, %v1396, 0.0
          %v1415 = vsel %vm1148, %v1397, 0.0
          %v1416 = vsel %vm1149, %v1398, 0.0
          %v1417 = vsel %vm1150, %v1399, 0.0
          %v1418 = vsel %vm1151, %v1400, 0.0
          %v1419 = vsel %vm1152, %v1401, 0.0
          %v1420 = vsel %vm1153, %v1402, 0.0
          %v1421 = vsel %vm1154, %v1403, 0.0
          %v1422 = vsel %vm1155, %v1404, 0.0
          %v1423 = vsel %vm1156, %v1405, 0.0
          %1424 = vst.msk [vmem:[#allocation2 + $0xa3] sm:$0xff] %vm515, %v1406
          %1425 = vst.msk [vmem:[#allocation2 + $0xab] sm:$0xff] %vm515, %v1407
          %1426 = vst.msk [vmem:[#allocation2 + $0xb3] sm:$0xff] %vm515, %v1408
          %1427 = vst.msk [vmem:[#allocation2 + $0xbb] sm:$0xff] %vm515, %v1409
          %1428 = vst.msk [vmem:[#allocation2 + $0xc3] sm:$0xff] %vm515, %v1410
          %1429 = vst.msk [vmem:[#allocation2 + $0xcb] sm:$0xff] %vm515, %v1411
          %1430 = vst.msk [vmem:[#allocation2 + $0xd3] sm:$0xff] %vm515, %v1412
          %1431 = vst.msk [vmem:[#allocation2 + $0xdb] sm:$0xff] %vm515, %v1413
          %1432 = vst.msk [vmem:[#allocation2 + $0xe3] sm:$0xff] %vm515, %v1414
          %1433 = vst.msk [vmem:[#allocation2 + $0xeb] sm:$0xff] %vm515, %v1415
          %1434 = vst.msk [vmem:[#allocation2 + $0xf3] sm:$0xff] %vm515, %v1416
          %1435 = vst.msk [vmem:[#allocation2 + $0xfb] sm:$0xff] %vm515, %v1417
          %1436 = vst.msk [vmem:[#allocation2 + $0x103] sm:$0xff] %vm515, %v1418
          %1437 = vst.msk [vmem:[#allocation2 + $0x10b] sm:$0xff] %vm515, %v1419
          %1438 = vst.msk [vmem:[#allocation2 + $0x113] sm:$0xff] %vm515, %v1420
          %1439 = vst.msk [vmem:[#allocation2 + $0x11b] sm:$0xff] %vm515, %v1421
          %1440 = vst.msk [vmem:[#allocation2 + $0x123] sm:$0xff] %vm515, %v1422
          %1441 = vst.msk [vmem:[#allocation2 + $0x12b] sm:$0xff] %vm515, %v1423
        $region104: #{bottleneck_forward.1} parent=59 // pred_fallthru
          _
        %s1442 = smul.u32 %s37, 144
        %s1443 = scalar_lea.vmem [#allocation2], %s1442
        %v1444 = vld [vmem:[%s1443] sm:$0xff]
        %v1445 = vld [vmem:[%s1443 + $0x8] sm:$0xff]
        %v1446 = vld [vmem:[%s1443 + $0x10] sm:$0xff]
        %v1447 = vld [vmem:[%s1443 + $0x18] sm:$0xff]
        %v1448 = vld [vmem:[%s1443 + $0x20] sm:$0xff]
        %v1449 = vld [vmem:[%s1443 + $0x28] sm:$0xff]
        %v1450 = vld [vmem:[%s1443 + $0x30] sm:$0xff]
        %v1451 = vld [vmem:[%s1443 + $0x38] sm:$0xff]
        %v1452 = vld [vmem:[%s1443 + $0x40] sm:$0xff]
        %v1453 = vld [vmem:[%s1443 + $0x48] sm:$0xff]
        %v1454 = vld [vmem:[%s1443 + $0x50] sm:$0xff]
        %v1455 = vld [vmem:[%s1443 + $0x58] sm:$0xff]
        %v1456 = vld [vmem:[%s1443 + $0x60] sm:$0xff]
        %v1457 = vld [vmem:[%s1443 + $0x68] sm:$0xff]
        %v1458 = vld [vmem:[%s1443 + $0x70] sm:$0xff]
        %v1459 = vld [vmem:[%s1443 + $0x78] sm:$0xff]
        %v1460 = vld [vmem:[%s1443 + $0x80] sm:$0xff]
        %v1461 = vld [vmem:[%s1443 + $0x88] sm:$0xff]
        %v1462 = vpack.c.bf16 %v1445, %v1444
        %v1463 = vpack.c.bf16 %v1447, %v1446
        %v1464 = vpack.c.bf16 %v1449, %v1448
        %v1465 = vpack.c.bf16 %v1451, %v1450
        %v1466 = vpack.c.bf16 %v1453, %v1452
        %v1467 = vpack.c.bf16 %v1455, %v1454
        %v1468 = vpack.c.bf16 %v1457, %v1456
        %v1469 = vpack.c.bf16 %v1459, %v1458
        %v1470 = vpack.c.bf16 %v1461, %v1460
        %v1471 = vld [vmem:[#allocation11] sm:$0x3]
        %s1472 = sadd.s32 %s1442, 1
        %s1473 = scalar_lea.vmem [#allocation2], %s1472
        %v1474 = vld [vmem:[%s1473] sm:$0xff]
        %v1475 = vld [vmem:[%s1473 + $0x8] sm:$0xff]
        %v1476 = vld [vmem:[%s1473 + $0x10] sm:$0xff]
        %v1477 = vld [vmem:[%s1473 + $0x18] sm:$0xff]
        %v1478 = vld [vmem:[%s1473 + $0x20] sm:$0xff]
        %v1479 = vld [vmem:[%s1473 + $0x28] sm:$0xff]
        %v1480 = vld [vmem:[%s1473 + $0x30] sm:$0xff]
        %v1481 = vld [vmem:[%s1473 + $0x38] sm:$0xff]
        %v1482 = vld [vmem:[%s1473 + $0x40] sm:$0xff]
        %v1483 = vld [vmem:[%s1473 + $0x48] sm:$0xff]
        %v1484 = vld [vmem:[%s1473 + $0x50] sm:$0xff]
        %v1485 = vld [vmem:[%s1473 + $0x58] sm:$0xff]
        %v1486 = vld [vmem:[%s1473 + $0x60] sm:$0xff]
        %v1487 = vld [vmem:[%s1473 + $0x68] sm:$0xff]
        %v1488 = vld [vmem:[%s1473 + $0x70] sm:$0xff]
        %v1489 = vld [vmem:[%s1473 + $0x78] sm:$0xff]
        %v1490 = vld [vmem:[%s1473 + $0x80] sm:$0xff]
        %v1491 = vld [vmem:[%s1473 + $0x88] sm:$0xff]
        %v1492 = vpack.c.bf16 %v1475, %v1474
        %v1493 = vpack.c.bf16 %v1477, %v1476
        %v1494 = vpack.c.bf16 %v1479, %v1478
        %v1495 = vpack.c.bf16 %v1481, %v1480
        %v1496 = vpack.c.bf16 %v1483, %v1482
        %v1497 = vpack.c.bf16 %v1485, %v1484
        %v1498 = vpack.c.bf16 %v1487, %v1486
        %v1499 = vpack.c.bf16 %v1489, %v1488
        %v1500 = vpack.c.bf16 %v1491, %v1490
        %s1501 = scalar_lea.vmem [#allocation11], 2
        %v1502 = vld [vmem:[%s1501] sm:$0x3]
        %vm1503 = vcmask 31744
        %v1505 = vsel %vm1503, %v1492, 0
        %v1508 = vsel %vm1503, %v1493, 0
        %v1511 = vsel %vm1503, %v1494, 0
        %v1514 = vsel %vm1503, %v1495, 0
        %v1517 = vsel %vm1503, %v1496, 0
        %v1520 = vsel %vm1503, %v1497, 0
        %v1523 = vsel %vm1503, %v1498, 0
        %v1526 = vsel %vm1503, %v1499, 0
        %v1529 = vsel %vm1503, %v1500, 0
        %vm1531 = vcmask 1041408
        %v1533 = vsel %vm1531, %v1502, 0
        %1535 = vmatprep.subr.bf16.mxu0 0
        %1536 = vmatpush1.bf16.msra.mxu0 %v1533
        %1537 = vmatprep.subr.bf16.mxu0 0
        %1538 = vmatpush1.bf16.msra.mxu0 0
        %1539 = vmatprep.subr.bf16.mxu0 0
        %1540 = vmatpush1.bf16.msra.mxu0 0
        %1541 = vmatprep.subr.bf16.mxu0 0
        %1542 = vmatpush1.bf16.msra.mxu0 0
        %1543 = vmatprep.subr.bf16.mxu0 0
        %1544 = vmatpush1.bf16.msra.mxu0 0
        %1545 = vmatprep.subr.bf16.mxu0 0
        %1546 = vmatpush1.bf16.msra.mxu0 0
        %1547 = vmatprep.subr.bf16.mxu0 0
        %1548 = vmatpush1.bf16.msra.mxu0 0
        %1549 = vmatprep.subr.bf16.mxu0 0
        %1550 = vmatpush1.bf16.msra.mxu0 0
        %1551 = vmatprep.subr.bf16.mxu0 0
        %1552 = vmatpush1.bf16.msra.mxu0 0
        %1553 = vmatprep.subr.bf16.mxu0 0
        %1554 = vmatpush1.bf16.msra.mxu0 0
        %1555 = vmatprep.subr.bf16.mxu0 0
        %1556 = vmatpush1.bf16.msra.mxu0 0
        %1557 = vmatprep.subr.bf16.mxu0 0
        %1558 = vmatpush1.bf16.msra.mxu0 0
        %1559 = vmatprep.subr.bf16.mxu0 0
        %1560 = vmatpush1.bf16.msra.mxu0 0
        %1561 = vmatprep.subr.bf16.mxu0 0
        %1562 = vmatpush1.bf16.msra.mxu0 0
        %1563 = vmatprep.subr.bf16.mxu0 0
        %1564 = vmatpush1.bf16.msra.mxu0 0
        %1565 = vmatprep.subr.bf16.mxu0 0
        %1566 = vmatpush1.bf16.msra.mxu0 0
        %1567 = vmatprep.mubr.bf16.mxu0 0
        %1568 = vmatmul.mubr.bf16.gmra.mrb[0].mxu0 %v1505
        %v1569 = vpop.f32.mrb[0].mxu0
        %v1570 = vadd.f32 0.0, %v1569
        %v1571 = vpop.f32.mrb[0].mxu0
        %v1572 = vpop.f32.mrb[0].mxu0
        %v1573 = vadd.f32 0.0, %v1572
        %v1574 = vpop.f32.mrb[0].mxu0
        %1575 = vmatprep.mubr.bf16.mxu0 0
        %1576 = vmatmul.mubr.bf16.gmra.mrb[0].mxu0 %v1508
        %v1577 = vpop.f32.mrb[0].mxu0
        %v1578 = vadd.f32 0.0, %v1577
        %v1579 = vpop.f32.mrb[0].mxu0
        %v1580 = vpop.f32.mrb[0].mxu0
        %v1581 = vadd.f32 0.0, %v1580
        %v1582 = vpop.f32.mrb[0].mxu0
        %1583 = vmatprep.mubr.bf16.mxu0 0
        %1584 = vmatmul.mubr.bf16.gmra.mrb[0].mxu0 %v1511
        %v1585 = vpop.f32.mrb[0].mxu0
        %v1586 = vadd.f32 0.0, %v1585
        %v1587 = vpop.f32.mrb[0].mxu0
        %v1588 = vpop.f32.mrb[0].mxu0
        %v1589 = vadd.f32 0.0, %v1588
        %v1590 = vpop.f32.mrb[0].mxu0
        %1591 = vmatprep.mubr.bf16.mxu0 0
        %1592 = vmatmul.mubr.bf16.gmra.mrb[0].mxu0 %v1514
        %v1593 = vpop.f32.mrb[0].mxu0
        %v1594 = vadd.f32 0.0, %v1593
        %v1595 = vpop.f32.mrb[0].mxu0
        %v1596 = vpop.f32.mrb[0].mxu0
        %v1597 = vadd.f32 0.0, %v1596
        %v1598 = vpop.f32.mrb[0].mxu0
        %1599 = vmatprep.mubr.bf16.mxu0 0
        %1600 = vmatmul.mubr.bf16.gmra.mrb[0].mxu0 %v1517
        %v1601 = vpop.f32.mrb[0].mxu0
        %v1602 = vadd.f32 0.0, %v1601
        %v1603 = vpop.f32.mrb[0].mxu0
        %v1604 = vpop.f32.mrb[0].mxu0
        %v1605 = vadd.f32 0.0, %v1604
        %v1606 = vpop.f32.mrb[0].mxu0
        %1607 = vmatprep.mubr.bf16.mxu0 0
        %1608 = vmatmul.mubr.bf16.gmra.mrb[0].mxu0 %v1520
        %v1609 = vpop.f32.mrb[0].mxu0
        %v1610 = vadd.f32 0.0, %v1609
        %v1611 = vpop.f32.mrb[0].mxu0
        %v1612 = vpop.f32.mrb[0].mxu0
        %v1613 = vadd.f32 0.0, %v1612
        %v1614 = vpop.f32.mrb[0].mxu0
        %1615 = vmatprep.mubr.bf16.mxu0 0
        %1616 = vmatmul.mubr.bf16.gmra.mrb[0].mxu0 %v1523
        %v1617 = vpop.f32.mrb[0].mxu0
        %v1618 = vadd.f32 0.0, %v1617
        %v1619 = vpop.f32.mrb[0].mxu0
        %v1620 = vpop.f32.mrb[0].mxu0
        %v1621 = vadd.f32 0.0, %v1620
        %v1622 = vpop.f32.mrb[0].mxu0
        %1623 = vmatprep.mubr.bf16.mxu0 0
        %1624 = vmatmul.mubr.bf16.gmra.mrb[0].mxu0 %v1526
        %v1625 = vpop.f32.mrb[0].mxu0
        %v1626 = vadd.f32 0.0, %v1625
        %v1627 = vpop.f32.mrb[0].mxu0
        %v1628 = vpop.f32.mrb[0].mxu0
        %v1629 = vadd.f32 0.0, %v1628
        %v1630 = vpop.f32.mrb[0].mxu0
        %1631 = vmatprep.mubr.bf16.mxu0 0
        %1632 = vmatmul.mubr.bf16.gmra.mrb[0].mxu0 %v1529
        %v1633 = vpop.f32.mrb[0].mxu0
        %v1634 = vadd.f32 0.0, %v1633
        %v1635 = vpop.f32.mrb[0].mxu0
        %v1636 = vpop.f32.mrb[0].mxu0
        %v1637 = vadd.f32 0.0, %v1636
        %v1638 = vpop.f32.mrb[0].mxu0
        %1639 = vdwg.mxu0
        %v1641 = vsel %vm1503, %v1462, 0
        %v1644 = vsel %vm1503, %v1463, 0
        %v1647 = vsel %vm1503, %v1464, 0
        %v1650 = vsel %vm1503, %v1465, 0
        %v1653 = vsel %vm1503, %v1466, 0
        %v1656 = vsel %vm1503, %v1467, 0
        %v1659 = vsel %vm1503, %v1468, 0
        %v1662 = vsel %vm1503, %v1469, 0
        %v1665 = vsel %vm1503, %v1470, 0
        %v1668 = vsel %vm1531, %v1471, 0
        %1670 = vmatprep.subr.bf16.mxu0 0
        %1671 = vmatpush1.bf16.msra.mxu0 %v1668
        %1672 = vmatprep.subr.bf16.mxu0 0
        %1673 = vmatpush1.bf16.msra.mxu0 0
        %1674 = vmatprep.subr.bf16.mxu0 0
        %1675 = vmatpush1.bf16.msra.mxu0 0
        %1676 = vmatprep.subr.bf16.mxu0 0
        %1677 = vmatpush1.bf16.msra.mxu0 0
        %1678 = vmatprep.subr.bf16.mxu0 0
        %1679 = vmatpush1.bf16.msra.mxu0 0
        %1680 = vmatprep.subr.bf16.mxu0 0
        %1681 = vmatpush1.bf16.msra.mxu0 0
        %1682 = vmatprep.subr.bf16.mxu0 0
        %1683 = vmatpush1.bf16.msra.mxu0 0
        %1684 = vmatprep.subr.bf16.mxu0 0
        %1685 = vmatpush1.bf16.msra.mxu0 0
        %1686 = vmatprep.subr.bf16.mxu0 0
        %1687 = vmatpush1.bf16.msra.mxu0 0
        %1688 = vmatprep.subr.bf16.mxu0 0
        %1689 = vmatpush1.bf16.msra.mxu0 0
        %1690 = vmatprep.subr.bf16.mxu0 0
        %1691 = vmatpush1.bf16.msra.mxu0 0
        %1692 = vmatprep.subr.bf16.mxu0 0
        %1693 = vmatpush1.bf16.msra.mxu0 0
        %1694 = vmatprep.subr.bf16.mxu0 0
        %1695 = vmatpush1.bf16.msra.mxu0 0
        %1696 = vmatprep.subr.bf16.mxu0 0
        %1697 = vmatpush1.bf16.msra.mxu0 0
        %1698 = vmatprep.subr.bf16.mxu0 0
        %1699 = vmatpush1.bf16.msra.mxu0 0
        %1700 = vmatprep.subr.bf16.mxu0 0
        %1701 = vmatpush1.bf16.msra.mxu0 0
        %1702 = vmatprep.mubr.bf16.mxu0 0
        %1703 = vmatmul.mubr.bf16.gmra.mrb[0].mxu0 %v1641
        %v1704 = vpop.f32.mrb[0].mxu0
        %v1705 = vadd.f32 %v1570, %v1704
        %v1706 = vpop.f32.mrb[0].mxu0
        %v1707 = vpop.f32.mrb[0].mxu0
        %v1708 = vadd.f32 %v1573, %v1707
        %v1709 = vpop.f32.mrb[0].mxu0
        %1710 = vmatprep.mubr.bf16.mxu0 0
        %1711 = vmatmul.mubr.bf16.gmra.mrb[0].mxu0 %v1644
        %v1712 = vpop.f32.mrb[0].mxu0
        %v1713 = vadd.f32 %v1578, %v1712
        %v1714 = vpop.f32.mrb[0].mxu0
        %v1715 = vpop.f32.mrb[0].mxu0
        %v1716 = vadd.f32 %v1581, %v1715
        %v1717 = vpop.f32.mrb[0].mxu0
        %1718 = vmatprep.mubr.bf16.mxu0 0
        %1719 = vmatmul.mubr.bf16.gmra.mrb[0].mxu0 %v1647
        %v1720 = vpop.f32.mrb[0].mxu0
        %v1721 = vadd.f32 %v1586, %v1720
        %v1722 = vpop.f32.mrb[0].mxu0
        %v1723 = vpop.f32.mrb[0].mxu0
        %v1724 = vadd.f32 %v1589, %v1723
        %v1725 = vpop.f32.mrb[0].mxu0
        %1726 = vmatprep.mubr.bf16.mxu0 0
        %1727 = vmatmul.mubr.bf16.gmra.mrb[0].mxu0 %v1650
        %v1728 = vpop.f32.mrb[0].mxu0
        %v1729 = vadd.f32 %v1594, %v1728
        %v1730 = vpop.f32.mrb[0].mxu0
        %v1731 = vpop.f32.mrb[0].mxu0
        %v1732 = vadd.f32 %v1597, %v1731
        %v1733 = vpop.f32.mrb[0].mxu0
        %1734 = vmatprep.mubr.bf16.mxu0 0
        %1735 = vmatmul.mubr.bf16.gmra.mrb[0].mxu0 %v1653
        %v1736 = vpop.f32.mrb[0].mxu0
        %v1737 = vadd.f32 %v1602, %v1736
        %v1738 = vpop.f32.mrb[0].mxu0
        %v1739 = vpop.f32.mrb[0].mxu0
        %v1740 = vadd.f32 %v1605, %v1739
        %v1741 = vpop.f32.mrb[0].mxu0
        %1742 = vmatprep.mubr.bf16.mxu0 0
        %1743 = vmatmul.mubr.bf16.gmra.mrb[0].mxu0 %v1656
        %v1744 = vpop.f32.mrb[0].mxu0
        %v1745 = vadd.f32 %v1610, %v1744
        %v1746 = vpop.f32.mrb[0].mxu0
        %v1747 = vpop.f32.mrb[0].mxu0
        %v1748 = vadd.f32 %v1613, %v1747
        %v1749 = vpop.f32.mrb[0].mxu0
        %1750 = vmatprep.mubr.bf16.mxu0 0
        %1751 = vmatmul.mubr.bf16.gmra.mrb[0].mxu0 %v1659
        %v1752 = vpop.f32.mrb[0].mxu0
        %v1753 = vadd.f32 %v1618, %v1752
        %v1754 = vpop.f32.mrb[0].mxu0
        %v1755 = vpop.f32.mrb[0].mxu0
        %v1756 = vadd.f32 %v1621, %v1755
        %v1757 = vpop.f32.mrb[0].mxu0
        %1758 = vmatprep.mubr.bf16.mxu0 0
        %1759 = vmatmul.mubr.bf16.gmra.mrb[0].mxu0 %v1662
        %v1760 = vpop.f32.mrb[0].mxu0
        %v1761 = vadd.f32 %v1626, %v1760
        %v1762 = vpop.f32.mrb[0].mxu0
        %v1763 = vpop.f32.mrb[0].mxu0
        %v1764 = vadd.f32 %v1629, %v1763
        %v1765 = vpop.f32.mrb[0].mxu0
        %1766 = vmatprep.mubr.bf16.mxu0 0
        %1767 = vmatmul.mubr.bf16.gmra.mrb[0].mxu0 %v1665
        %v1768 = vpop.f32.mrb[0].mxu0
        %v1769 = vadd.f32 %v1634, %v1768
        %v1770 = vpop.f32.mrb[0].mxu0
        %v1771 = vpop.f32.mrb[0].mxu0
        %v1772 = vadd.f32 %v1637, %v1771
        %v1773 = vpop.f32.mrb[0].mxu0
        %1774 = vdwg.mxu0
        %s1775 = sadd.s32 %s1442, 2
        %s1776 = scalar_lea.vmem [#allocation2], %s1775
        %v1777 = vld [vmem:[%s1776] sm:$0xff]
        %v1778 = vld [vmem:[%s1776 + $0x8] sm:$0xff]
        %v1779 = vld [vmem:[%s1776 + $0x10] sm:$0xff]
        %v1780 = vld [vmem:[%s1776 + $0x18] sm:$0xff]
        %v1781 = vld [vmem:[%s1776 + $0x20] sm:$0xff]
        %v1782 = vld [vmem:[%s1776 + $0x28] sm:$0xff]
        %v1783 = vld [vmem:[%s1776 + $0x30] sm:$0xff]
        %v1784 = vld [vmem:[%s1776 + $0x38] sm:$0xff]
        %v1785 = vld [vmem:[%s1776 + $0x40] sm:$0xff]
        %v1786 = vld [vmem:[%s1776 + $0x48] sm:$0xff]
        %v1787 = vld [vmem:[%s1776 + $0x50] sm:$0xff]
        %v1788 = vld [vmem:[%s1776 + $0x58] sm:$0xff]
        %v1789 = vld [vmem:[%s1776 + $0x60] sm:$0xff]
        %v1790 = vld [vmem:[%s1776 + $0x68] sm:$0xff]
        %v1791 = vld [vmem:[%s1776 + $0x70] sm:$0xff]
        %v1792 = vld [vmem:[%s1776 + $0x78] sm:$0xff]
        %v1793 = vld [vmem:[%s1776 + $0x80] sm:$0xff]
        %v1794 = vld [vmem:[%s1776 + $0x88] sm:$0xff]
        %v1795 = vpack.c.bf16 %v1778, %v1777
        %v1796 = vpack.c.bf16 %v1780, %v1779
        %v1797 = vpack.c.bf16 %v1782, %v1781
        %v1798 = vpack.c.bf16 %v1784, %v1783
        %v1799 = vpack.c.bf16 %v1786, %v1785
        %v1800 = vpack.c.bf16 %v1788, %v1787
        %v1801 = vpack.c.bf16 %v1790, %v1789
        %v1802 = vpack.c.bf16 %v1792, %v1791
        %v1803 = vpack.c.bf16 %v1794, %v1793
        %s1804 = scalar_lea.vmem [#allocation11], 4
        %v1805 = vld [vmem:[%s1804] sm:$0x3]
        %v1807 = vsel %vm1503, %v1795, 0
        %v1810 = vsel %vm1503, %v1796, 0
        %v1813 = vsel %vm1503, %v1797, 0
        %v1816 = vsel %vm1503, %v1798, 0
        %v1819 = vsel %vm1503, %v1799, 0
        %v1822 = vsel %vm1503, %v1800, 0
        %v1825 = vsel %vm1503, %v1801, 0
        %v1828 = vsel %vm1503, %v1802, 0
        %v1831 = vsel %vm1503, %v1803, 0
        %v1834 = vsel %vm1531, %v1805, 0
        %1836 = vmatprep.subr.bf16.mxu0 0
        %1837 = vmatpush1.bf16.msra.mxu0 %v1834
        %1838 = vmatprep.subr.bf16.mxu0 0
        %1839 = vmatpush1.bf16.msra.mxu0 0
        %1840 = vmatprep.subr.bf16.mxu0 0
        %1841 = vmatpush1.bf16.msra.mxu0 0
        %1842 = vmatprep.subr.bf16.mxu0 0
        %1843 = vmatpush1.bf16.msra.mxu0 0
        %1844 = vmatprep.subr.bf16.mxu0 0
        %1845 = vmatpush1.bf16.msra.mxu0 0
        %1846 = vmatprep.subr.bf16.mxu0 0
        %1847 = vmatpush1.bf16.msra.mxu0 0
        %1848 = vmatprep.subr.bf16.mxu0 0
        %1849 = vmatpush1.bf16.msra.mxu0 0
        %1850 = vmatprep.subr.bf16.mxu0 0
        %1851 = vmatpush1.bf16.msra.mxu0 0
        %1852 = vmatprep.subr.bf16.mxu0 0
        %1853 = vmatpush1.bf16.msra.mxu0 0
        %1854 = vmatprep.subr.bf16.mxu0 0
        %1855 = vmatpush1.bf16.msra.mxu0 0
        %1856 = vmatprep.subr.bf16.mxu0 0
        %1857 = vmatpush1.bf16.msra.mxu0 0
        %1858 = vmatprep.subr.bf16.mxu0 0
        %1859 = vmatpush1.bf16.msra.mxu0 0
        %1860 = vmatprep.subr.bf16.mxu0 0
        %1861 = vmatpush1.bf16.msra.mxu0 0
        %1862 = vmatprep.subr.bf16.mxu0 0
        %1863 = vmatpush1.bf16.msra.mxu0 0
        %1864 = vmatprep.subr.bf16.mxu0 0
        %1865 = vmatpush1.bf16.msra.mxu0 0
        %1866 = vmatprep.subr.bf16.mxu0 0
        %1867 = vmatpush1.bf16.msra.mxu0 0
        %1868 = vmatprep.mubr.bf16.mxu0 0
        %1869 = vmatmul.mubr.bf16.gmra.mrb[0].mxu0 %v1807
        %v1870 = vpop.f32.mrb[0].mxu0
        %v1871 = vadd.f32 0.0, %v1870
        %v1872 = vpop.f32.mrb[0].mxu0
        %v1873 = vpop.f32.mrb[0].mxu0
        %v1874 = vadd.f32 0.0, %v1873
        %v1875 = vpop.f32.mrb[0].mxu0
        %1876 = vmatprep.mubr.bf16.mxu0 0
        %1877 = vmatmul.mubr.bf16.gmra.mrb[0].mxu0 %v1810
        %v1878 = vpop.f32.mrb[0].mxu0
        %v1879 = vadd.f32 0.0, %v1878
        %v1880 = vpop.f32.mrb[0].mxu0
        %v1881 = vpop.f32.mrb[0].mxu0
        %v1882 = vadd.f32 0.0, %v1881
        %v1883 = vpop.f32.mrb[0].mxu0
        %1884 = vmatprep.mubr.bf16.mxu0 0
        %1885 = vmatmul.mubr.bf16.gmra.mrb[0].mxu0 %v1813
        %v1886 = vpop.f32.mrb[0].mxu0
        %v1887 = vadd.f32 0.0, %v1886
        %v1888 = vpop.f32.mrb[0].mxu0
        %v1889 = vpop.f32.mrb[0].mxu0
        %v1890 = vadd.f32 0.0, %v1889
        %v1891 = vpop.f32.mrb[0].mxu0
        %1892 = vmatprep.mubr.bf16.mxu0 0
        %1893 = vmatmul.mubr.bf16.gmra.mrb[0].mxu0 %v1816
        %v1894 = vpop.f32.mrb[0].mxu0
        %v1895 = vadd.f32 0.0, %v1894
        %v1896 = vpop.f32.mrb[0].mxu0
        %v1897 = vpop.f32.mrb[0].mxu0
        %v1898 = vadd.f32 0.0, %v1897
        %v1899 = vpop.f32.mrb[0].mxu0
        %1900 = vmatprep.mubr.bf16.mxu0 0
        %1901 = vmatmul.mubr.bf16.gmra.mrb[0].mxu0 %v1819
        %v1902 = vpop.f32.mrb[0].mxu0
        %v1903 = vadd.f32 0.0, %v1902
        %v1904 = vpop.f32.mrb[0].mxu0
        %v1905 = vpop.f32.mrb[0].mxu0
        %v1906 = vadd.f32 0.0, %v1905
        %v1907 = vpop.f32.mrb[0].mxu0
        %1908 = vmatprep.mubr.bf16.mxu0 0
        %1909 = vmatmul.mubr.bf16.gmra.mrb[0].mxu0 %v1822
        %v1910 = vpop.f32.mrb[0].mxu0
        %v1911 = vadd.f32 0.0, %v1910
        %v1912 = vpop.f32.mrb[0].mxu0
        %v1913 = vpop.f32.mrb[0].mxu0
        %v1914 = vadd.f32 0.0, %v1913
        %v1915 = vpop.f32.mrb[0].mxu0
        %1916 = vmatprep.mubr.bf16.mxu0 0
        %1917 = vmatmul.mubr.bf16.gmra.mrb[0].mxu0 %v1825
        %v1918 = vpop.f32.mrb[0].mxu0
        %v1919 = vadd.f32 0.0, %v1918
        %v1920 = vpop.f32.mrb[0].mxu0
        %v1921 = vpop.f32.mrb[0].mxu0
        %v1922 = vadd.f32 0.0, %v1921
        %v1923 = vpop.f32.mrb[0].mxu0
        %1924 = vmatprep.mubr.bf16.mxu0 0
        %1925 = vmatmul.mubr.bf16.gmra.mrb[0].mxu0 %v1828
        %v1926 = vpop.f32.mrb[0].mxu0
        %v1927 = vadd.f32 0.0, %v1926
        %v1928 = vpop.f32.mrb[0].mxu0
        %v1929 = vpop.f32.mrb[0].mxu0
        %v1930 = vadd.f32 0.0, %v1929
        %v1931 = vpop.f32.mrb[0].mxu0
        %1932 = vmatprep.mubr.bf16.mxu0 0
        %1933 = vmatmul.mubr.bf16.gmra.mrb[0].mxu0 %v1831
        %v1934 = vpop.f32.mrb[0].mxu0
        %v1935 = vadd.f32 0.0, %v1934
        %v1936 = vpop.f32.mrb[0].mxu0
        %v1937 = vpop.f32.mrb[0].mxu0
        %v1938 = vadd.f32 0.0, %v1937
        %v1939 = vpop.f32.mrb[0].mxu0
        %1940 = vdwg.mxu0
        %v1941 = vadd.f32 %v1705, %v1871
        %v1942 = vadd.f32 %v1708, %v1874
        %v1943 = vadd.f32 %v1713, %v1879
        %v1944 = vadd.f32 %v1716, %v1882
        %v1945 = vadd.f32 %v1721, %v1887
        %v1946 = vadd.f32 %v1724, %v1890
        %v1947 = vadd.f32 %v1729, %v1895
        %v1948 = vadd.f32 %v1732, %v1898
        %v1949 = vadd.f32 %v1737, %v1903
        %v1950 = vadd.f32 %v1740, %v1906
        %v1951 = vadd.f32 %v1745, %v1911
        %v1952 = vadd.f32 %v1748, %v1914
        %v1953 = vadd.f32 %v1753, %v1919
        %v1954 = vadd.f32 %v1756, %v1922
        %v1955 = vadd.f32 %v1761, %v1927
        %v1956 = vadd.f32 %v1764, %v1930
        %v1957 = vadd.f32 %v1769, %v1935
        %v1958 = vadd.f32 %v1772, %v1938
        %s1959 = sadd.s32 %s1442, 18
        %s1960 = scalar_lea.vmem [#allocation2], %s1959
        %v1961 = vld [vmem:[%s1960] sm:$0xff]
        %v1962 = vld [vmem:[%s1960 + $0x8] sm:$0xff]
        %v1963 = vld [vmem:[%s1960 + $0x10] sm:$0xff]
        %v1964 = vld [vmem:[%s1960 + $0x18] sm:$0xff]
        %v1965 = vld [vmem:[%s1960 + $0x20] sm:$0xff]
        %v1966 = vld [vmem:[%s1960 + $0x28] sm:$0xff]
        %v1967 = vld [vmem:[%s1960 + $0x30] sm:$0xff]
        %v1968 = vld [vmem:[%s1960 + $0x38] sm:$0xff]
        %v1969 = vld [vmem:[%s1960 + $0x40] sm:$0xff]
        %v1970 = vld [vmem:[%s1960 + $0x48] sm:$0xff]
        %v1971 = vld [vmem:[%s1960 + $0x50] sm:$0xff]
        %v1972 = vld [vmem:[%s1960 + $0x58] sm:$0xff]
        %v1973 = vld [vmem:[%s1960 + $0x60] sm:$0xff]
        %v1974 = vld [vmem:[%s1960 + $0x68] sm:$0xff]
        %v1975 = vld [vmem:[%s1960 + $0x70] sm:$0xff]
        %v1976 = vld [vmem:[%s1960 + $0x78] sm:$0xff]
        %v1977 = vld [vmem:[%s1960 + $0x80] sm:$0xff]
        %v1978 = vld [vmem:[%s1960 + $0x88] sm:$0xff]
        %v1979 = vpack.c.bf16 %v1962, %v1961
        %v1980 = vpack.c.bf16 %v1964, %v1963
        %v1981 = vpack.c.bf16 %v1966, %v1965
        %v1982 = vpack.c.bf16 %v1968, %v1967
        %v1983 = vpack.c.bf16 %v1970, %v1969
        %v1984 = vpack.c.bf16 %v1972, %v1971
        %v1985 = vpack.c.bf16 %v1974, %v1973
        %v1986 = vpack.c.bf16 %v1976, %v1975
        %v1987 = vpack.c.bf16 %v1978, %v1977
        %s1988 = scalar_lea.vmem [#allocation11], 6
        %v1989 = vld [vmem:[%s1988] sm:$0x3]
        %v1991 = vsel %vm1503, %v1979, 0
        %v1994 = vsel %vm1503, %v1980, 0
        %v1997 = vsel %vm1503, %v1981, 0
        %v2000 = vsel %vm1503, %v1982, 0
        %v2003 = vsel %vm1503, %v1983, 0
        %v2006 = vsel %vm1503, %v1984, 0
        %v2009 = vsel %vm1503, %v1985, 0
        %v2012 = vsel %vm1503, %v1986, 0
        %v2015 = vsel %vm1503, %v1987, 0
        %v2018 = vsel %vm1531, %v1989, 0
        %2020 = vmatprep.subr.bf16.mxu0 0
        %2021 = vmatpush1.bf16.msra.mxu0 %v2018
        %2022 = vmatprep.subr.bf16.mxu0 0
        %2023 = vmatpush1.bf16.msra.mxu0 0
        %2024 = vmatprep.subr.bf16.mxu0 0
        %2025 = vmatpush1.bf16.msra.mxu0 0
        %2026 = vmatprep.subr.bf16.mxu0 0
        %2027 = vmatpush1.bf16.msra.mxu0 0
        %2028 = vmatprep.subr.bf16.mxu0 0
        %2029 = vmatpush1.bf16.msra.mxu0 0
        %2030 = vmatprep.subr.bf16.mxu0 0
        %2031 = vmatpush1.bf16.msra.mxu0 0
        %2032 = vmatprep.subr.bf16.mxu0 0
        %2033 = vmatpush1.bf16.msra.mxu0 0
        %2034 = vmatprep.subr.bf16.mxu0 0
        %2035 = vmatpush1.bf16.msra.mxu0 0
        %2036 = vmatprep.subr.bf16.mxu0 0
        %2037 = vmatpush1.bf16.msra.mxu0 0
        %2038 = vmatprep.subr.bf16.mxu0 0
        %2039 = vmatpush1.bf16.msra.mxu0 0
        %2040 = vmatprep.subr.bf16.mxu0 0
        %2041 = vmatpush1.bf16.msra.mxu0 0
        %2042 = vmatprep.subr.bf16.mxu0 0
        %2043 = vmatpush1.bf16.msra.mxu0 0
        %2044 = vmatprep.subr.bf16.mxu0 0
        %2045 = vmatpush1.bf16.msra.mxu0 0
        %2046 = vmatprep.subr.bf16.mxu0 0
        %2047 = vmatpush1.bf16.msra.mxu0 0
        %2048 = vmatprep.subr.bf16.mxu0 0
        %2049 = vmatpush1.bf16.msra.mxu0 0
        %2050 = vmatprep.subr.bf16.mxu0 0
        %2051 = vmatpush1.bf16.msra.mxu0 0
        %2052 = vmatprep.mubr.bf16.mxu0 0
        %2053 = vmatmul.mubr.bf16.gmra.mrb[0].mxu0 %v1991
        %v2054 = vpop.f32.mrb[0].mxu0
        %v2055 = vadd.f32 0.0, %v2054
        %v2056 = vpop.f32.mrb[0].mxu0
        %v2057 = vpop.f32.mrb[0].mxu0
        %v2058 = vadd.f32 0.0, %v2057
        %v2059 = vpop.f32.mrb[0].mxu0
        %2060 = vmatprep.mubr.bf16.mxu0 0
        %2061 = vmatmul.mubr.bf16.gmra.mrb[0].mxu0 %v1994
        %v2062 = vpop.f32.mrb[0].mxu0
        %v2063 = vadd.f32 0.0, %v2062
        %v2064 = vpop.f32.mrb[0].mxu0
        %v2065 = vpop.f32.mrb[0].mxu0
        %v2066 = vadd.f32 0.0, %v2065
        %v2067 = vpop.f32.mrb[0].mxu0
        %2068 = vmatprep.mubr.bf16.mxu0 0
        %2069 = vmatmul.mubr.bf16.gmra.mrb[0].mxu0 %v1997
        %v2070 = vpop.f32.mrb[0].mxu0
        %v2071 = vadd.f32 0.0, %v2070
        %v2072 = vpop.f32.mrb[0].mxu0
        %v2073 = vpop.f32.mrb[0].mxu0
        %v2074 = vadd.f32 0.0, %v2073
        %v2075 = vpop.f32.mrb[0].mxu0
        %2076 = vmatprep.mubr.bf16.mxu0 0
        %2077 = vmatmul.mubr.bf16.gmra.mrb[0].mxu0 %v2000
        %v2078 = vpop.f32.mrb[0].mxu0
        %v2079 = vadd.f32 0.0, %v2078
        %v2080 = vpop.f32.mrb[0].mxu0
        %v2081 = vpop.f32.mrb[0].mxu0
        %v2082 = vadd.f32 0.0, %v2081
        %v2083 = vpop.f32.mrb[0].mxu0
        %2084 = vmatprep.mubr.bf16.mxu0 0
        %2085 = vmatmul.mubr.bf16.gmra.mrb[0].mxu0 %v2003
        %v2086 = vpop.f32.mrb[0].mxu0
        %v2087 = vadd.f32 0.0, %v2086
        %v2088 = vpop.f32.mrb[0].mxu0
        %v2089 = vpop.f32.mrb[0].mxu0
        %v2090 = vadd.f32 0.0, %v2089
        %v2091 = vpop.f32.mrb[0].mxu0
        %2092 = vmatprep.mubr.bf16.mxu0 0
        %2093 = vmatmul.mubr.bf16.gmra.mrb[0].mxu0 %v2006
        %v2094 = vpop.f32.mrb[0].mxu0
        %v2095 = vadd.f32 0.0, %v2094
        %v2096 = vpop.f32.mrb[0].mxu0
        %v2097 = vpop.f32.mrb[0].mxu0
        %v2098 = vadd.f32 0.0, %v2097
        %v2099 = vpop.f32.mrb[0].mxu0
        %2100 = vmatprep.mubr.bf16.mxu0 0
        %2101 = vmatmul.mubr.bf16.gmra.mrb[0].mxu0 %v2009
        %v2102 = vpop.f32.mrb[0].mxu0
        %v2103 = vadd.f32 0.0, %v2102
        %v2104 = vpop.f32.mrb[0].mxu0
        %v2105 = vpop.f32.mrb[0].mxu0
        %v2106 = vadd.f32 0.0, %v2105
        %v2107 = vpop.f32.mrb[0].mxu0
        %2108 = vmatprep.mubr.bf16.mxu0 0
        %2109 = vmatmul.mubr.bf16.gmra.mrb[0].mxu0 %v2012
        %v2110 = vpop.f32.mrb[0].mxu0
        %v2111 = vadd.f32 0.0, %v2110
        %v2112 = vpop.f32.mrb[0].mxu0
        %v2113 = vpop.f32.mrb[0].mxu0
        %v2114 = vadd.f32 0.0, %v2113
        %v2115 = vpop.f32.mrb[0].mxu0
        %2116 = vmatprep.mubr.bf16.mxu0 0
        %2117 = vmatmul.mubr.bf16.gmra.mrb[0].mxu0 %v2015
        %v2118 = vpop.f32.mrb[0].mxu0
        %v2119 = vadd.f32 0.0, %v2118
        %v2120 = vpop.f32.mrb[0].mxu0
        %v2121 = vpop.f32.mrb[0].mxu0
        %v2122 = vadd.f32 0.0, %v2121
        %v2123 = vpop.f32.mrb[0].mxu0
        %2124 = vdwg.mxu0
        %v2125 = vadd.f32 %v1941, %v2055
        %v2126 = vadd.f32 %v1942, %v2058
        %v2127 = vadd.f32 %v1943, %v2063
        %v2128 = vadd.f32 %v1944, %v2066
        %v2129 = vadd.f32 %v1945, %v2071
        %v2130 = vadd.f32 %v1946, %v2074
        %v2131 = vadd.f32 %v1947, %v2079
        %v2132 = vadd.f32 %v1948, %v2082
        %v2133 = vadd.f32 %v1949, %v2087
        %v2134 = vadd.f32 %v1950, %v2090
        %v2135 = vadd.f32 %v1951, %v2095
        %v2136 = vadd.f32 %v1952, %v2098
        %v2137 = vadd.f32 %v1953, %v2103
        %v2138 = vadd.f32 %v1954, %v2106
        %v2139 = vadd.f32 %v1955, %v2111
        %v2140 = vadd.f32 %v1956, %v2114
        %v2141 = vadd.f32 %v1957, %v2119
        %v2142 = vadd.f32 %v1958, %v2122
        %s2143 = sadd.s32 %s1442, 19
        %s2144 = scalar_lea.vmem [#allocation2], %s2143
        %v2145 = vld [vmem:[%s2144] sm:$0xff]
        %v2146 = vld [vmem:[%s2144 + $0x8] sm:$0xff]
        %v2147 = vld [vmem:[%s2144 + $0x10] sm:$0xff]
        %v2148 = vld [vmem:[%s2144 + $0x18] sm:$0xff]
        %v2149 = vld [vmem:[%s2144 + $0x20] sm:$0xff]
        %v2150 = vld [vmem:[%s2144 + $0x28] sm:$0xff]
        %v2151 = vld [vmem:[%s2144 + $0x30] sm:$0xff]
        %v2152 = vld [vmem:[%s2144 + $0x38] sm:$0xff]
        %v2153 = vld [vmem:[%s2144 + $0x40] sm:$0xff]
        %v2154 = vld [vmem:[%s2144 + $0x48] sm:$0xff]
        %v2155 = vld [vmem:[%s2144 + $0x50] sm:$0xff]
        %v2156 = vld [vmem:[%s2144 + $0x58] sm:$0xff]
        %v2157 = vld [vmem:[%s2144 + $0x60] sm:$0xff]
        %v2158 = vld [vmem:[%s2144 + $0x68] sm:$0xff]
        %v2159 = vld [vmem:[%s2144 + $0x70] sm:$0xff]
        %v2160 = vld [vmem:[%s2144 + $0x78] sm:$0xff]
        %v2161 = vld [vmem:[%s2144 + $0x80] sm:$0xff]
        %v2162 = vld [vmem:[%s2144 + $0x88] sm:$0xff]
        %v2163 = vpack.c.bf16 %v2146, %v2145
        %v2164 = vpack.c.bf16 %v2148, %v2147
        %v2165 = vpack.c.bf16 %v2150, %v2149
        %v2166 = vpack.c.bf16 %v2152, %v2151
        %v2167 = vpack.c.bf16 %v2154, %v2153
        %v2168 = vpack.c.bf16 %v2156, %v2155
        %v2169 = vpack.c.bf16 %v2158, %v2157
        %v2170 = vpack.c.bf16 %v2160, %v2159
        %v2171 = vpack.c.bf16 %v2162, %v2161
        %s2172 = scalar_lea.vmem [#allocation11], 8
        %v2173 = vld [vmem:[%s2172] sm:$0x3]
        %v2175 = vsel %vm1503, %v2163, 0
        %v2178 = vsel %vm1503, %v2164, 0
        %v2181 = vsel %vm1503, %v2165, 0
        %v2184 = vsel %vm1503, %v2166, 0
        %v2187 = vsel %vm1503, %v2167, 0
        %v2190 = vsel %vm1503, %v2168, 0
        %v2193 = vsel %vm1503, %v2169, 0
        %v2196 = vsel %vm1503, %v2170, 0
        %v2199 = vsel %vm1503, %v2171, 0
        %v2202 = vsel %vm1531, %v2173, 0
        %2204 = vmatprep.subr.bf16.mxu0 0
        %2205 = vmatpush1.bf16.msra.mxu0 %v2202
        %2206 = vmatprep.subr.bf16.mxu0 0
        %2207 = vmatpush1.bf16.msra.mxu0 0
        %2208 = vmatprep.subr.bf16.mxu0 0
        %2209 = vmatpush1.bf16.msra.mxu0 0
        %2210 = vmatprep.subr.bf16.mxu0 0
        %2211 = vmatpush1.bf16.msra.mxu0 0
        %2212 = vmatprep.subr.bf16.mxu0 0
        %2213 = vmatpush1.bf16.msra.mxu0 0
        %2214 = vmatprep.subr.bf16.mxu0 0
        %2215 = vmatpush1.bf16.msra.mxu0 0
        %2216 = vmatprep.subr.bf16.mxu0 0
        %2217 = vmatpush1.bf16.msra.mxu0 0
        %2218 = vmatprep.subr.bf16.mxu0 0
        %2219 = vmatpush1.bf16.msra.mxu0 0
        %2220 = vmatprep.subr.bf16.mxu0 0
        %2221 = vmatpush1.bf16.msra.mxu0 0
        %2222 = vmatprep.subr.bf16.mxu0 0
        %2223 = vmatpush1.bf16.msra.mxu0 0
        %2224 = vmatprep.subr.bf16.mxu0 0
        %2225 = vmatpush1.bf16.msra.mxu0 0
        %2226 = vmatprep.subr.bf16.mxu0 0
        %2227 = vmatpush1.bf16.msra.mxu0 0
        %2228 = vmatprep.subr.bf16.mxu0 0
        %2229 = vmatpush1.bf16.msra.mxu0 0
        %2230 = vmatprep.subr.bf16.mxu0 0
        %2231 = vmatpush1.bf16.msra.mxu0 0
        %2232 = vmatprep.subr.bf16.mxu0 0
        %2233 = vmatpush1.bf16.msra.mxu0 0
        %2234 = vmatprep.subr.bf16.mxu0 0
        %2235 = vmatpush1.bf16.msra.mxu0 0
        %2236 = vmatprep.mubr.bf16.mxu0 0
        %2237 = vmatmul.mubr.bf16.gmra.mrb[0].mxu0 %v2175
        %v2238 = vpop.f32.mrb[0].mxu0
        %v2239 = vadd.f32 0.0, %v2238
        %v2240 = vpop.f32.mrb[0].mxu0
        %v2241 = vpop.f32.mrb[0].mxu0
        %v2242 = vadd.f32 0.0, %v2241
        %v2243 = vpop.f32.mrb[0].mxu0
        %2244 = vmatprep.mubr.bf16.mxu0 0
        %2245 = vmatmul.mubr.bf16.gmra.mrb[0].mxu0 %v2178
        %v2246 = vpop.f32.mrb[0].mxu0
        %v2247 = vadd.f32 0.0, %v2246
        %v2248 = vpop.f32.mrb[0].mxu0
        %v2249 = vpop.f32.mrb[0].mxu0
        %v2250 = vadd.f32 0.0, %v2249
        %v2251 = vpop.f32.mrb[0].mxu0
        %2252 = vmatprep.mubr.bf16.mxu0 0
        %2253 = vmatmul.mubr.bf16.gmra.mrb[0].mxu0 %v2181
        %v2254 = vpop.f32.mrb[0].mxu0
        %v2255 = vadd.f32 0.0, %v2254
        %v2256 = vpop.f32.mrb[0].mxu0
        %v2257 = vpop.f32.mrb[0].mxu0
        %v2258 = vadd.f32 0.0, %v2257
        %v2259 = vpop.f32.mrb[0].mxu0
        %2260 = vmatprep.mubr.bf16.mxu0 0
        %2261 = vmatmul.mubr.bf16.gmra.mrb[0].mxu0 %v2184
        %v2262 = vpop.f32.mrb[0].mxu0
        %v2263 = vadd.f32 0.0, %v2262
        %v2264 = vpop.f32.mrb[0].mxu0
        %v2265 = vpop.f32.mrb[0].mxu0
        %v2266 = vadd.f32 0.0, %v2265
        %v2267 = vpop.f32.mrb[0].mxu0
        %2268 = vmatprep.mubr.bf16.mxu0 0
        %2269 = vmatmul.mubr.bf16.gmra.mrb[0].mxu0 %v2187
        %v2270 = vpop.f32.mrb[0].mxu0
        %v2271 = vadd.f32 0.0, %v2270
        %v2272 = vpop.f32.mrb[0].mxu0
        %v2273 = vpop.f32.mrb[0].mxu0
        %v2274 = vadd.f32 0.0, %v2273
        %v2275 = vpop.f32.mrb[0].mxu0
        %2276 = vmatprep.mubr.bf16.mxu0 0
        %2277 = vmatmul.mubr.bf16.gmra.mrb[0].mxu0 %v2190
        %v2278 = vpop.f32.mrb[0].mxu0
        %v2279 = vadd.f32 0.0, %v2278
        %v2280 = vpop.f32.mrb[0].mxu0
        %v2281 = vpop.f32.mrb[0].mxu0
        %v2282 = vadd.f32 0.0, %v2281
        %v2283 = vpop.f32.mrb[0].mxu0
        %2284 = vmatprep.mubr.bf16.mxu0 0
        %2285 = vmatmul.mubr.bf16.gmra.mrb[0].mxu0 %v2193
        %v2286 = vpop.f32.mrb[0].mxu0
        %v2287 = vadd.f32 0.0, %v2286
        %v2288 = vpop.f32.mrb[0].mxu0
        %v2289 = vpop.f32.mrb[0].mxu0
        %v2290 = vadd.f32 0.0, %v2289
        %v2291 = vpop.f32.mrb[0].mxu0
        %2292 = vmatprep.mubr.bf16.mxu0 0
        %2293 = vmatmul.mubr.bf16.gmra.mrb[0].mxu0 %v2196
        %v2294 = vpop.f32.mrb[0].mxu0
        %v2295 = vadd.f32 0.0, %v2294
        %v2296 = vpop.f32.mrb[0].mxu0
        %v2297 = vpop.f32.mrb[0].mxu0
        %v2298 = vadd.f32 0.0, %v2297
        %v2299 = vpop.f32.mrb[0].mxu0
        %2300 = vmatprep.mubr.bf16.mxu0 0
        %2301 = vmatmul.mubr.bf16.gmra.mrb[0].mxu0 %v2199
        %v2302 = vpop.f32.mrb[0].mxu0
        %v2303 = vadd.f32 0.0, %v2302
        %v2304 = vpop.f32.mrb[0].mxu0
        %v2305 = vpop.f32.mrb[0].mxu0
        %v2306 = vadd.f32 0.0, %v2305
        %v2307 = vpop.f32.mrb[0].mxu0
        %2308 = vdwg.mxu0
        %v2309 = vadd.f32 %v2125, %v2239
        %v2310 = vadd.f32 %v2126, %v2242
        %v2311 = vadd.f32 %v2127, %v2247
        %v2312 = vadd.f32 %v2128, %v2250
        %v2313 = vadd.f32 %v2129, %v2255
        %v2314 = vadd.f32 %v2130, %v2258
        %v2315 = vadd.f32 %v2131, %v2263
        %v2316 = vadd.f32 %v2132, %v2266
        %v2317 = vadd.f32 %v2133, %v2271
        %v2318 = vadd.f32 %v2134, %v2274
        %v2319 = vadd.f32 %v2135, %v2279
        %v2320 = vadd.f32 %v2136, %v2282
        %v2321 = vadd.f32 %v2137, %v2287
        %v2322 = vadd.f32 %v2138, %v2290
        %v2323 = vadd.f32 %v2139, %v2295
        %v2324 = vadd.f32 %v2140, %v2298
        %v2325 = vadd.f32 %v2141, %v2303
        %v2326 = vadd.f32 %v2142, %v2306
        %s2327 = sadd.s32 %s1442, 20
        %s2328 = scalar_lea.vmem [#allocation2], %s2327
        %v2329 = vld [vmem:[%s2328] sm:$0xff]
        %v2330 = vld [vmem:[%s2328 + $0x8] sm:$0xff]
        %v2331 = vld [vmem:[%s2328 + $0x10] sm:$0xff]
        %v2332 = vld [vmem:[%s2328 + $0x18] sm:$0xff]
        %v2333 = vld [vmem:[%s2328 + $0x20] sm:$0xff]
        %v2334 = vld [vmem:[%s2328 + $0x28] sm:$0xff]
        %v2335 = vld [vmem:[%s2328 + $0x30] sm:$0xff]
        %v2336 = vld [vmem:[%s2328 + $0x38] sm:$0xff]
        %v2337 = vld [vmem:[%s2328 + $0x40] sm:$0xff]
        %v2338 = vld [vmem:[%s2328 + $0x48] sm:$0xff]
        %v2339 = vld [vmem:[%s2328 + $0x50] sm:$0xff]
        %v2340 = vld [vmem:[%s2328 + $0x58] sm:$0xff]
        %v2341 = vld [vmem:[%s2328 + $0x60] sm:$0xff]
        %v2342 = vld [vmem:[%s2328 + $0x68] sm:$0xff]
        %v2343 = vld [vmem:[%s2328 + $0x70] sm:$0xff]
        %v2344 = vld [vmem:[%s2328 + $0x78] sm:$0xff]
        %v2345 = vld [vmem:[%s2328 + $0x80] sm:$0xff]
        %v2346 = vld [vmem:[%s2328 + $0x88] sm:$0xff]
        %v2347 = vpack.c.bf16 %v2330, %v2329
        %v2348 = vpack.c.bf16 %v2332, %v2331
        %v2349 = vpack.c.bf16 %v2334, %v2333
        %v2350 = vpack.c.bf16 %v2336, %v2335
        %v2351 = vpack.c.bf16 %v2338, %v2337
        %v2352 = vpack.c.bf16 %v2340, %v2339
        %v2353 = vpack.c.bf16 %v2342, %v2341
        %v2354 = vpack.c.bf16 %v2344, %v2343
        %v2355 = vpack.c.bf16 %v2346, %v2345
        %s2356 = scalar_lea.vmem [#allocation11], 10
        %v2357 = vld [vmem:[%s2356] sm:$0x3]
        %v2359 = vsel %vm1503, %v2347, 0
        %v2362 = vsel %vm1503, %v2348, 0
        %v2365 = vsel %vm1503, %v2349, 0
        %v2368 = vsel %vm1503, %v2350, 0
        %v2371 = vsel %vm1503, %v2351, 0
        %v2374 = vsel %vm1503, %v2352, 0
        %v2377 = vsel %vm1503, %v2353, 0
        %v2380 = vsel %vm1503, %v2354, 0
        %v2383 = vsel %vm1503, %v2355, 0
        %v2386 = vsel %vm1531, %v2357, 0
        %2388 = vmatprep.subr.bf16.mxu0 0
        %2389 = vmatpush1.bf16.msra.mxu0 %v2386
        %2390 = vmatprep.subr.bf16.mxu0 0
        %2391 = vmatpush1.bf16.msra.mxu0 0
        %2392 = vmatprep.subr.bf16.mxu0 0
        %2393 = vmatpush1.bf16.msra.mxu0 0
        %2394 = vmatprep.subr.bf16.mxu0 0
        %2395 = vmatpush1.bf16.msra.mxu0 0
        %2396 = vmatprep.subr.bf16.mxu0 0
        %2397 = vmatpush1.bf16.msra.mxu0 0
        %2398 = vmatprep.subr.bf16.mxu0 0
        %2399 = vmatpush1.bf16.msra.mxu0 0
        %2400 = vmatprep.subr.bf16.mxu0 0
        %2401 = vmatpush1.bf16.msra.mxu0 0
        %2402 = vmatprep.subr.bf16.mxu0 0
        %2403 = vmatpush1.bf16.msra.mxu0 0
        %2404 = vmatprep.subr.bf16.mxu0 0
        %2405 = vmatpush1.bf16.msra.mxu0 0
        %2406 = vmatprep.subr.bf16.mxu0 0
        %2407 = vmatpush1.bf16.msra.mxu0 0
        %2408 = vmatprep.subr.bf16.mxu0 0
        %2409 = vmatpush1.bf16.msra.mxu0 0
        %2410 = vmatprep.subr.bf16.mxu0 0
        %2411 = vmatpush1.bf16.msra.mxu0 0
        %2412 = vmatprep.subr.bf16.mxu0 0
        %2413 = vmatpush1.bf16.msra.mxu0 0
        %2414 = vmatprep.subr.bf16.mxu0 0
        %2415 = vmatpush1.bf16.msra.mxu0 0
        %2416 = vmatprep.subr.bf16.mxu0 0
        %2417 = vmatpush1.bf16.msra.mxu0 0
        %2418 = vmatprep.subr.bf16.mxu0 0
        %2419 = vmatpush1.bf16.msra.mxu0 0
        %2420 = vmatprep.mubr.bf16.mxu0 0
        %2421 = vmatmul.mubr.bf16.gmra.mrb[0].mxu0 %v2359
        %v2422 = vpop.f32.mrb[0].mxu0
        %v2423 = vadd.f32 0.0, %v2422
        %v2424 = vpop.f32.mrb[0].mxu0
        %v2425 = vpop.f32.mrb[0].mxu0
        %v2426 = vadd.f32 0.0, %v2425
        %v2427 = vpop.f32.mrb[0].mxu0
        %2428 = vmatprep.mubr.bf16.mxu0 0
        %2429 = vmatmul.mubr.bf16.gmra.mrb[0].mxu0 %v2362
        %v2430 = vpop.f32.mrb[0].mxu0
        %v2431 = vadd.f32 0.0, %v2430
        %v2432 = vpop.f32.mrb[0].mxu0
        %v2433 = vpop.f32.mrb[0].mxu0
        %v2434 = vadd.f32 0.0, %v2433
        %v2435 = vpop.f32.mrb[0].mxu0
        %2436 = vmatprep.mubr.bf16.mxu0 0
        %2437 = vmatmul.mubr.bf16.gmra.mrb[0].mxu0 %v2365
        %v2438 = vpop.f32.mrb[0].mxu0
        %v2439 = vadd.f32 0.0, %v2438
        %v2440 = vpop.f32.mrb[0].mxu0
        %v2441 = vpop.f32.mrb[0].mxu0
        %v2442 = vadd.f32 0.0, %v2441
        %v2443 = vpop.f32.mrb[0].mxu0
        %2444 = vmatprep.mubr.bf16.mxu0 0
        %2445 = vmatmul.mubr.bf16.gmra.mrb[0].mxu0 %v2368
        %v2446 = vpop.f32.mrb[0].mxu0
        %v2447 = vadd.f32 0.0, %v2446
        %v2448 = vpop.f32.mrb[0].mxu0
        %v2449 = vpop.f32.mrb[0].mxu0
        %v2450 = vadd.f32 0.0, %v2449
        %v2451 = vpop.f32.mrb[0].mxu0
        %2452 = vmatprep.mubr.bf16.mxu0 0
        %2453 = vmatmul.mubr.bf16.gmra.mrb[0].mxu0 %v2371
        %v2454 = vpop.f32.mrb[0].mxu0
        %v2455 = vadd.f32 0.0, %v2454
        %v2456 = vpop.f32.mrb[0].mxu0
        %v2457 = vpop.f32.mrb[0].mxu0
        %v2458 = vadd.f32 0.0, %v2457
        %v2459 = vpop.f32.mrb[0].mxu0
        %2460 = vmatprep.mubr.bf16.mxu0 0
        %2461 = vmatmul.mubr.bf16.gmra.mrb[0].mxu0 %v2374
        %v2462 = vpop.f32.mrb[0].mxu0
        %v2463 = vadd.f32 0.0, %v2462
        %v2464 = vpop.f32.mrb[0].mxu0
        %v2465 = vpop.f32.mrb[0].mxu0
        %v2466 = vadd.f32 0.0, %v2465
        %v2467 = vpop.f32.mrb[0].mxu0
        %2468 = vmatprep.mubr.bf16.mxu0 0
        %2469 = vmatmul.mubr.bf16.gmra.mrb[0].mxu0 %v2377
        %v2470 = vpop.f32.mrb[0].mxu0
        %v2471 = vadd.f32 0.0, %v2470
        %v2472 = vpop.f32.mrb[0].mxu0
        %v2473 = vpop.f32.mrb[0].mxu0
        %v2474 = vadd.f32 0.0, %v2473
        %v2475 = vpop.f32.mrb[0].mxu0
        %2476 = vmatprep.mubr.bf16.mxu0 0
        %2477 = vmatmul.mubr.bf16.gmra.mrb[0].mxu0 %v2380
        %v2478 = vpop.f32.mrb[0].mxu0
        %v2479 = vadd.f32 0.0, %v2478
        %v2480 = vpop.f32.mrb[0].mxu0
        %v2481 = vpop.f32.mrb[0].mxu0
        %v2482 = vadd.f32 0.0, %v2481
        %v2483 = vpop.f32.mrb[0].mxu0
        %2484 = vmatprep.mubr.bf16.mxu0 0
        %2485 = vmatmul.mubr.bf16.gmra.mrb[0].mxu0 %v2383
        %v2486 = vpop.f32.mrb[0].mxu0
        %v2487 = vadd.f32 0.0, %v2486
        %v2488 = vpop.f32.mrb[0].mxu0
        %v2489 = vpop.f32.mrb[0].mxu0
        %v2490 = vadd.f32 0.0, %v2489
        %v2491 = vpop.f32.mrb[0].mxu0
        %2492 = vdwg.mxu0
        %v2493 = vadd.f32 %v2309, %v2423
        %v2494 = vadd.f32 %v2310, %v2426
        %v2495 = vadd.f32 %v2311, %v2431
        %v2496 = vadd.f32 %v2312, %v2434
        %v2497 = vadd.f32 %v2313, %v2439
        %v2498 = vadd.f32 %v2314, %v2442
        %v2499 = vadd.f32 %v2315, %v2447
        %v2500 = vadd.f32 %v2316, %v2450
        %v2501 = vadd.f32 %v2317, %v2455
        %v2502 = vadd.f32 %v2318, %v2458
        %v2503 = vadd.f32 %v2319, %v2463
        %v2504 = vadd.f32 %v2320, %v2466
        %v2505 = vadd.f32 %v2321, %v2471
        %v2506 = vadd.f32 %v2322, %v2474
        %v2507 = vadd.f32 %v2323, %v2479
        %v2508 = vadd.f32 %v2324, %v2482
        %v2509 = vadd.f32 %v2325, %v2487
        %v2510 = vadd.f32 %v2326, %v2490
        %s2511 = sadd.s32 %s1442, 36
        %s2512 = scalar_lea.vmem [#allocation2], %s2511
        %v2513 = vld [vmem:[%s2512] sm:$0xff]
        %v2514 = vld [vmem:[%s2512 + $0x8] sm:$0xff]
        %v2515 = vld [vmem:[%s2512 + $0x10] sm:$0xff]
        %v2516 = vld [vmem:[%s2512 + $0x18] sm:$0xff]
        %v2517 = vld [vmem:[%s2512 + $0x20] sm:$0xff]
        %v2518 = vld [vmem:[%s2512 + $0x28] sm:$0xff]
        %v2519 = vld [vmem:[%s2512 + $0x30] sm:$0xff]
        %v2520 = vld [vmem:[%s2512 + $0x38] sm:$0xff]
        %v2521 = vld [vmem:[%s2512 + $0x40] sm:$0xff]
        %v2522 = vld [vmem:[%s2512 + $0x48] sm:$0xff]
        %v2523 = vld [vmem:[%s2512 + $0x50] sm:$0xff]
        %v2524 = vld [vmem:[%s2512 + $0x58] sm:$0xff]
        %v2525 = vld [vmem:[%s2512 + $0x60] sm:$0xff]
        %v2526 = vld [vmem:[%s2512 + $0x68] sm:$0xff]
        %v2527 = vld [vmem:[%s2512 + $0x70] sm:$0xff]
        %v2528 = vld [vmem:[%s2512 + $0x78] sm:$0xff]
        %v2529 = vld [vmem:[%s2512 + $0x80] sm:$0xff]
        %v2530 = vld [vmem:[%s2512 + $0x88] sm:$0xff]
        %v2531 = vpack.c.bf16 %v2514, %v2513
        %v2532 = vpack.c.bf16 %v2516, %v2515
        %v2533 = vpack.c.bf16 %v2518, %v2517
        %v2534 = vpack.c.bf16 %v2520, %v2519
        %v2535 = vpack.c.bf16 %v2522, %v2521
        %v2536 = vpack.c.bf16 %v2524, %v2523
        %v2537 = vpack.c.bf16 %v2526, %v2525
        %v2538 = vpack.c.bf16 %v2528, %v2527
        %v2539 = vpack.c.bf16 %v2530, %v2529
        %s2540 = scalar_lea.vmem [#allocation11], 12
        %v2541 = vld [vmem:[%s2540] sm:$0x3]
        %v2543 = vsel %vm1503, %v2531, 0
        %v2546 = vsel %vm1503, %v2532, 0
        %v2549 = vsel %vm1503, %v2533, 0
        %v2552 = vsel %vm1503, %v2534, 0
        %v2555 = vsel %vm1503, %v2535, 0
        %v2558 = vsel %vm1503, %v2536, 0
        %v2561 = vsel %vm1503, %v2537, 0
        %v2564 = vsel %vm1503, %v2538, 0
        %v2567 = vsel %vm1503, %v2539, 0
        %v2570 = vsel %vm1531, %v2541, 0
        %2572 = vmatprep.subr.bf16.mxu0 0
        %2573 = vmatpush1.bf16.msra.mxu0 %v2570
        %2574 = vmatprep.subr.bf16.mxu0 0
        %2575 = vmatpush1.bf16.msra.mxu0 0
        %2576 = vmatprep.subr.bf16.mxu0 0
        %2577 = vmatpush1.bf16.msra.mxu0 0
        %2578 = vmatprep.subr.bf16.mxu0 0
        %2579 = vmatpush1.bf16.msra.mxu0 0
        %2580 = vmatprep.subr.bf16.mxu0 0
        %2581 = vmatpush1.bf16.msra.mxu0 0
        %2582 = vmatprep.subr.bf16.mxu0 0
        %2583 = vmatpush1.bf16.msra.mxu0 0
        %2584 = vmatprep.subr.bf16.mxu0 0
        %2585 = vmatpush1.bf16.msra.mxu0 0
        %2586 = vmatprep.subr.bf16.mxu0 0
        %2587 = vmatpush1.bf16.msra.mxu0 0
        %2588 = vmatprep.subr.bf16.mxu0 0
        %2589 = vmatpush1.bf16.msra.mxu0 0
        %2590 = vmatprep.subr.bf16.mxu0 0
        %2591 = vmatpush1.bf16.msra.mxu0 0
        %2592 = vmatprep.subr.bf16.mxu0 0
        %2593 = vmatpush1.bf16.msra.mxu0 0
        %2594 = vmatprep.subr.bf16.mxu0 0
        %2595 = vmatpush1.bf16.msra.mxu0 0
        %2596 = vmatprep.subr.bf16.mxu0 0
        %2597 = vmatpush1.bf16.msra.mxu0 0
        %2598 = vmatprep.subr.bf16.mxu0 0
        %2599 = vmatpush1.bf16.msra.mxu0 0
        %2600 = vmatprep.subr.bf16.mxu0 0
        %2601 = vmatpush1.bf16.msra.mxu0 0
        %2602 = vmatprep.subr.bf16.mxu0 0
        %2603 = vmatpush1.bf16.msra.mxu0 0
        %2604 = vmatprep.mubr.bf16.mxu0 0
        %2605 = vmatmul.mubr.bf16.gmra.mrb[0].mxu0 %v2543
        %v2606 = vpop.f32.mrb[0].mxu0
        %v2607 = vadd.f32 0.0, %v2606
        %v2608 = vpop.f32.mrb[0].mxu0
        %v2609 = vpop.f32.mrb[0].mxu0
        %v2610 = vadd.f32 0.0, %v2609
        %v2611 = vpop.f32.mrb[0].mxu0
        %2612 = vmatprep.mubr.bf16.mxu0 0
        %2613 = vmatmul.mubr.bf16.gmra.mrb[0].mxu0 %v2546
        %v2614 = vpop.f32.mrb[0].mxu0
        %v2615 = vadd.f32 0.0, %v2614
        %v2616 = vpop.f32.mrb[0].mxu0
        %v2617 = vpop.f32.mrb[0].mxu0
        %v2618 = vadd.f32 0.0, %v2617
        %v2619 = vpop.f32.mrb[0].mxu0
        %2620 = vmatprep.mubr.bf16.mxu0 0
        %2621 = vmatmul.mubr.bf16.gmra.mrb[0].mxu0 %v2549
        %v2622 = vpop.f32.mrb[0].mxu0
        %v2623 = vadd.f32 0.0, %v2622
        %v2624 = vpop.f32.mrb[0].mxu0
        %v2625 = vpop.f32.mrb[0].mxu0
        %v2626 = vadd.f32 0.0, %v2625
        %v2627 = vpop.f32.mrb[0].mxu0
        %2628 = vmatprep.mubr.bf16.mxu0 0
        %2629 = vmatmul.mubr.bf16.gmra.mrb[0].mxu0 %v2552
        %v2630 = vpop.f32.mrb[0].mxu0
        %v2631 = vadd.f32 0.0, %v2630
        %v2632 = vpop.f32.mrb[0].mxu0
        %v2633 = vpop.f32.mrb[0].mxu0
        %v2634 = vadd.f32 0.0, %v2633
        %v2635 = vpop.f32.mrb[0].mxu0
        %2636 = vmatprep.mubr.bf16.mxu0 0
        %2637 = vmatmul.mubr.bf16.gmra.mrb[0].mxu0 %v2555
        %v2638 = vpop.f32.mrb[0].mxu0
        %v2639 = vadd.f32 0.0, %v2638
        %v2640 = vpop.f32.mrb[0].mxu0
        %v2641 = vpop.f32.mrb[0].mxu0
        %v2642 = vadd.f32 0.0, %v2641
        %v2643 = vpop.f32.mrb[0].mxu0
        %2644 = vmatprep.mubr.bf16.mxu0 0
        %2645 = vmatmul.mubr.bf16.gmra.mrb[0].mxu0 %v2558
        %v2646 = vpop.f32.mrb[0].mxu0
        %v2647 = vadd.f32 0.0, %v2646
        %v2648 = vpop.f32.mrb[0].mxu0
        %v2649 = vpop.f32.mrb[0].mxu0
        %v2650 = vadd.f32 0.0, %v2649
        %v2651 = vpop.f32.mrb[0].mxu0
        %2652 = vmatprep.mubr.bf16.mxu0 0
        %2653 = vmatmul.mubr.bf16.gmra.mrb[0].mxu0 %v2561
        %v2654 = vpop.f32.mrb[0].mxu0
        %v2655 = vadd.f32 0.0, %v2654
        %v2656 = vpop.f32.mrb[0].mxu0
        %v2657 = vpop.f32.mrb[0].mxu0
        %v2658 = vadd.f32 0.0, %v2657
        %v2659 = vpop.f32.mrb[0].mxu0
        %2660 = vmatprep.mubr.bf16.mxu0 0
        %2661 = vmatmul.mubr.bf16.gmra.mrb[0].mxu0 %v2564
        %v2662 = vpop.f32.mrb[0].mxu0
        %v2663 = vadd.f32 0.0, %v2662
        %v2664 = vpop.f32.mrb[0].mxu0
        %v2665 = vpop.f32.mrb[0].mxu0
        %v2666 = vadd.f32 0.0, %v2665
        %v2667 = vpop.f32.mrb[0].mxu0
        %2668 = vmatprep.mubr.bf16.mxu0 0
        %2669 = vmatmul.mubr.bf16.gmra.mrb[0].mxu0 %v2567
        %v2670 = vpop.f32.mrb[0].mxu0
        %v2671 = vadd.f32 0.0, %v2670
        %v2672 = vpop.f32.mrb[0].mxu0
        %v2673 = vpop.f32.mrb[0].mxu0
        %v2674 = vadd.f32 0.0, %v2673
        %v2675 = vpop.f32.mrb[0].mxu0
        %2676 = vdwg.mxu0
        %v2677 = vadd.f32 %v2493, %v2607
        %v2678 = vadd.f32 %v2494, %v2610
        %v2679 = vadd.f32 %v2495, %v2615
        %v2680 = vadd.f32 %v2496, %v2618
        %v2681 = vadd.f32 %v2497, %v2623
        %v2682 = vadd.f32 %v2498, %v2626
        %v2683 = vadd.f32 %v2499, %v2631
        %v2684 = vadd.f32 %v2500, %v2634
        %v2685 = vadd.f32 %v2501, %v2639
        %v2686 = vadd.f32 %v2502, %v2642
        %v2687 = vadd.f32 %v2503, %v2647
        %v2688 = vadd.f32 %v2504, %v2650
        %v2689 = vadd.f32 %v2505, %v2655
        %v2690 = vadd.f32 %v2506, %v2658
        %v2691 = vadd.f32 %v2507, %v2663
        %v2692 = vadd.f32 %v2508, %v2666
        %v2693 = vadd.f32 %v2509, %v2671
        %v2694 = vadd.f32 %v2510, %v2674
        %s2695 = sadd.s32 %s1442, 37
        %s2696 = scalar_lea.vmem [#allocation2], %s2695
        %v2697 = vld [vmem:[%s2696] sm:$0xff]
        %v2698 = vld [vmem:[%s2696 + $0x8] sm:$0xff]
        %v2699 = vld [vmem:[%s2696 + $0x10] sm:$0xff]
        %v2700 = vld [vmem:[%s2696 + $0x18] sm:$0xff]
        %v2701 = vld [vmem:[%s2696 + $0x20] sm:$0xff]
        %v2702 = vld [vmem:[%s2696 + $0x28] sm:$0xff]
        %v2703 = vld [vmem:[%s2696 + $0x30] sm:$0xff]
        %v2704 = vld [vmem:[%s2696 + $0x38] sm:$0xff]
        %v2705 = vld [vmem:[%s2696 + $0x40] sm:$0xff]
        %v2706 = vld [vmem:[%s2696 + $0x48] sm:$0xff]
        %v2707 = vld [vmem:[%s2696 + $0x50] sm:$0xff]
        %v2708 = vld [vmem:[%s2696 + $0x58] sm:$0xff]
        %v2709 = vld [vmem:[%s2696 + $0x60] sm:$0xff]
        %v2710 = vld [vmem:[%s2696 + $0x68] sm:$0xff]
        %v2711 = vld [vmem:[%s2696 + $0x70] sm:$0xff]
        %v2712 = vld [vmem:[%s2696 + $0x78] sm:$0xff]
        %v2713 = vld [vmem:[%s2696 + $0x80] sm:$0xff]
        %v2714 = vld [vmem:[%s2696 + $0x88] sm:$0xff]
        %v2715 = vpack.c.bf16 %v2698, %v2697
        %v2716 = vpack.c.bf16 %v2700, %v2699
        %v2717 = vpack.c.bf16 %v2702, %v2701
        %v2718 = vpack.c.bf16 %v2704, %v2703
        %v2719 = vpack.c.bf16 %v2706, %v2705
        %v2720 = vpack.c.bf16 %v2708, %v2707
        %v2721 = vpack.c.bf16 %v2710, %v2709
        %v2722 = vpack.c.bf16 %v2712, %v2711
        %v2723 = vpack.c.bf16 %v2714, %v2713
        %s2724 = scalar_lea.vmem [#allocation11], 14
        %v2725 = vld [vmem:[%s2724] sm:$0x3]
        %v2727 = vsel %vm1503, %v2715, 0
        %v2730 = vsel %vm1503, %v2716, 0
        %v2733 = vsel %vm1503, %v2717, 0
        %v2736 = vsel %vm1503, %v2718, 0
        %v2739 = vsel %vm1503, %v2719, 0
        %v2742 = vsel %vm1503, %v2720, 0
        %v2745 = vsel %vm1503, %v2721, 0
        %v2748 = vsel %vm1503, %v2722, 0
        %v2751 = vsel %vm1503, %v2723, 0
        %v2754 = vsel %vm1531, %v2725, 0
        %2756 = vmatprep.subr.bf16.mxu0 0
        %2757 = vmatpush1.bf16.msra.mxu0 %v2754
        %2758 = vmatprep.subr.bf16.mxu0 0
        %2759 = vmatpush1.bf16.msra.mxu0 0
        %2760 = vmatprep.subr.bf16.mxu0 0
        %2761 = vmatpush1.bf16.msra.mxu0 0
        %2762 = vmatprep.subr.bf16.mxu0 0
        %2763 = vmatpush1.bf16.msra.mxu0 0
        %2764 = vmatprep.subr.bf16.mxu0 0
        %2765 = vmatpush1.bf16.msra.mxu0 0
        %2766 = vmatprep.subr.bf16.mxu0 0
        %2767 = vmatpush1.bf16.msra.mxu0 0
        %2768 = vmatprep.subr.bf16.mxu0 0
        %2769 = vmatpush1.bf16.msra.mxu0 0
        %2770 = vmatprep.subr.bf16.mxu0 0
        %2771 = vmatpush1.bf16.msra.mxu0 0
        %2772 = vmatprep.subr.bf16.mxu0 0
        %2773 = vmatpush1.bf16.msra.mxu0 0
        %2774 = vmatprep.subr.bf16.mxu0 0
        %2775 = vmatpush1.bf16.msra.mxu0 0
        %2776 = vmatprep.subr.bf16.mxu0 0
        %2777 = vmatpush1.bf16.msra.mxu0 0
        %2778 = vmatprep.subr.bf16.mxu0 0
        %2779 = vmatpush1.bf16.msra.mxu0 0
        %2780 = vmatprep.subr.bf16.mxu0 0
        %2781 = vmatpush1.bf16.msra.mxu0 0
        %2782 = vmatprep.subr.bf16.mxu0 0
        %2783 = vmatpush1.bf16.msra.mxu0 0
        %2784 = vmatprep.subr.bf16.mxu0 0
        %2785 = vmatpush1.bf16.msra.mxu0 0
        %2786 = vmatprep.subr.bf16.mxu0 0
        %2787 = vmatpush1.bf16.msra.mxu0 0
        %2788 = vmatprep.mubr.bf16.mxu0 0
        %2789 = vmatmul.mubr.bf16.gmra.mrb[0].mxu0 %v2727
        %v2790 = vpop.f32.mrb[0].mxu0
        %v2791 = vadd.f32 0.0, %v2790
        %v2792 = vpop.f32.mrb[0].mxu0
        %v2793 = vpop.f32.mrb[0].mxu0
        %v2794 = vadd.f32 0.0, %v2793
        %v2795 = vpop.f32.mrb[0].mxu0
        %2796 = vmatprep.mubr.bf16.mxu0 0
        %2797 = vmatmul.mubr.bf16.gmra.mrb[0].mxu0 %v2730
        %v2798 = vpop.f32.mrb[0].mxu0
        %v2799 = vadd.f32 0.0, %v2798
        %v2800 = vpop.f32.mrb[0].mxu0
        %v2801 = vpop.f32.mrb[0].mxu0
        %v2802 = vadd.f32 0.0, %v2801
        %v2803 = vpop.f32.mrb[0].mxu0
        %2804 = vmatprep.mubr.bf16.mxu0 0
        %2805 = vmatmul.mubr.bf16.gmra.mrb[0].mxu0 %v2733
        %v2806 = vpop.f32.mrb[0].mxu0
        %v2807 = vadd.f32 0.0, %v2806
        %v2808 = vpop.f32.mrb[0].mxu0
        %v2809 = vpop.f32.mrb[0].mxu0
        %v2810 = vadd.f32 0.0, %v2809
        %v2811 = vpop.f32.mrb[0].mxu0
        %2812 = vmatprep.mubr.bf16.mxu0 0
        %2813 = vmatmul.mubr.bf16.gmra.mrb[0].mxu0 %v2736
        %v2814 = vpop.f32.mrb[0].mxu0
        %v2815 = vadd.f32 0.0, %v2814
        %v2816 = vpop.f32.mrb[0].mxu0
        %v2817 = vpop.f32.mrb[0].mxu0
        %v2818 = vadd.f32 0.0, %v2817
        %v2819 = vpop.f32.mrb[0].mxu0
        %2820 = vmatprep.mubr.bf16.mxu0 0
        %2821 = vmatmul.mubr.bf16.gmra.mrb[0].mxu0 %v2739
        %v2822 = vpop.f32.mrb[0].mxu0
        %v2823 = vadd.f32 0.0, %v2822
        %v2824 = vpop.f32.mrb[0].mxu0
        %v2825 = vpop.f32.mrb[0].mxu0
        %v2826 = vadd.f32 0.0, %v2825
        %v2827 = vpop.f32.mrb[0].mxu0
        %2828 = vmatprep.mubr.bf16.mxu0 0
        %2829 = vmatmul.mubr.bf16.gmra.mrb[0].mxu0 %v2742
        %v2830 = vpop.f32.mrb[0].mxu0
        %v2831 = vadd.f32 0.0, %v2830
        %v2832 = vpop.f32.mrb[0].mxu0
        %v2833 = vpop.f32.mrb[0].mxu0
        %v2834 = vadd.f32 0.0, %v2833
        %v2835 = vpop.f32.mrb[0].mxu0
        %2836 = vmatprep.mubr.bf16.mxu0 0
        %2837 = vmatmul.mubr.bf16.gmra.mrb[0].mxu0 %v2745
        %v2838 = vpop.f32.mrb[0].mxu0
        %v2839 = vadd.f32 0.0, %v2838
        %v2840 = vpop.f32.mrb[0].mxu0
        %v2841 = vpop.f32.mrb[0].mxu0
        %v2842 = vadd.f32 0.0, %v2841
        %v2843 = vpop.f32.mrb[0].mxu0
        %2844 = vmatprep.mubr.bf16.mxu0 0
        %2845 = vmatmul.mubr.bf16.gmra.mrb[0].mxu0 %v2748
        %v2846 = vpop.f32.mrb[0].mxu0
        %v2847 = vadd.f32 0.0, %v2846
        %v2848 = vpop.f32.mrb[0].mxu0
        %v2849 = vpop.f32.mrb[0].mxu0
        %v2850 = vadd.f32 0.0, %v2849
        %v2851 = vpop.f32.mrb[0].mxu0
        %2852 = vmatprep.mubr.bf16.mxu0 0
        %2853 = vmatmul.mubr.bf16.gmra.mrb[0].mxu0 %v2751
        %v2854 = vpop.f32.mrb[0].mxu0
        %v2855 = vadd.f32 0.0, %v2854
        %v2856 = vpop.f32.mrb[0].mxu0
        %v2857 = vpop.f32.mrb[0].mxu0
        %v2858 = vadd.f32 0.0, %v2857
        %v2859 = vpop.f32.mrb[0].mxu0
        %2860 = vdwg.mxu0
        %v2861 = vadd.f32 %v2677, %v2791
        %v2862 = vadd.f32 %v2678, %v2794
        %v2863 = vadd.f32 %v2679, %v2799
        %v2864 = vadd.f32 %v2680, %v2802
        %v2865 = vadd.f32 %v2681, %v2807
        %v2866 = vadd.f32 %v2682, %v2810
        %v2867 = vadd.f32 %v2683, %v2815
        %v2868 = vadd.f32 %v2684, %v2818
        %v2869 = vadd.f32 %v2685, %v2823
        %v2870 = vadd.f32 %v2686, %v2826
        %v2871 = vadd.f32 %v2687, %v2831
        %v2872 = vadd.f32 %v2688, %v2834
        %v2873 = vadd.f32 %v2689, %v2839
        %v2874 = vadd.f32 %v2690, %v2842
        %v2875 = vadd.f32 %v2691, %v2847
        %v2876 = vadd.f32 %v2692, %v2850
        %v2877 = vadd.f32 %v2693, %v2855
        %v2878 = vadd.f32 %v2694, %v2858
        %s2879 = sadd.s32 %s1442, 38
        %s2880 = scalar_lea.vmem [#allocation2], %s2879
        %v2881 = vld [vmem:[%s2880] sm:$0xff]
        %v2882 = vld [vmem:[%s2880 + $0x8] sm:$0xff]
        %v2883 = vld [vmem:[%s2880 + $0x10] sm:$0xff]
        %v2884 = vld [vmem:[%s2880 + $0x18] sm:$0xff]
        %v2885 = vld [vmem:[%s2880 + $0x20] sm:$0xff]
        %v2886 = vld [vmem:[%s2880 + $0x28] sm:$0xff]
        %v2887 = vld [vmem:[%s2880 + $0x30] sm:$0xff]
        %v2888 = vld [vmem:[%s2880 + $0x38] sm:$0xff]
        %v2889 = vld [vmem:[%s2880 + $0x40] sm:$0xff]
        %v2890 = vld [vmem:[%s2880 + $0x48] sm:$0xff]
        %v2891 = vld [vmem:[%s2880 + $0x50] sm:$0xff]
        %v2892 = vld [vmem:[%s2880 + $0x58] sm:$0xff]
        %v2893 = vld [vmem:[%s2880 + $0x60] sm:$0xff]
        %v2894 = vld [vmem:[%s2880 + $0x68] sm:$0xff]
        %v2895 = vld [vmem:[%s2880 + $0x70] sm:$0xff]
        %v2896 = vld [vmem:[%s2880 + $0x78] sm:$0xff]
        %v2897 = vld [vmem:[%s2880 + $0x80] sm:$0xff]
        %v2898 = vld [vmem:[%s2880 + $0x88] sm:$0xff]
        %v2899 = vpack.c.bf16 %v2882, %v2881
        %v2900 = vpack.c.bf16 %v2884, %v2883
        %v2901 = vpack.c.bf16 %v2886, %v2885
        %v2902 = vpack.c.bf16 %v2888, %v2887
        %v2903 = vpack.c.bf16 %v2890, %v2889
        %v2904 = vpack.c.bf16 %v2892, %v2891
        %v2905 = vpack.c.bf16 %v2894, %v2893
        %v2906 = vpack.c.bf16 %v2896, %v2895
        %v2907 = vpack.c.bf16 %v2898, %v2897
        %s2908 = scalar_lea.vmem [#allocation11], 16
        %v2909 = vld [vmem:[%s2908] sm:$0x3]
        %v2911 = vsel %vm1503, %v2899, 0
        %v2914 = vsel %vm1503, %v2900, 0
        %v2917 = vsel %vm1503, %v2901, 0
        %v2920 = vsel %vm1503, %v2902, 0
        %v2923 = vsel %vm1503, %v2903, 0
        %v2926 = vsel %vm1503, %v2904, 0
        %v2929 = vsel %vm1503, %v2905, 0
        %v2932 = vsel %vm1503, %v2906, 0
        %v2935 = vsel %vm1503, %v2907, 0
        %v2938 = vsel %vm1531, %v2909, 0
        %2940 = vmatprep.subr.bf16.mxu0 0
        %2941 = vmatpush1.bf16.msra.mxu0 %v2938
        %2942 = vmatprep.subr.bf16.mxu0 0
        %2943 = vmatpush1.bf16.msra.mxu0 0
        %2944 = vmatprep.subr.bf16.mxu0 0
        %2945 = vmatpush1.bf16.msra.mxu0 0
        %2946 = vmatprep.subr.bf16.mxu0 0
        %2947 = vmatpush1.bf16.msra.mxu0 0
        %2948 = vmatprep.subr.bf16.mxu0 0
        %2949 = vmatpush1.bf16.msra.mxu0 0
        %2950 = vmatprep.subr.bf16.mxu0 0
        %2951 = vmatpush1.bf16.msra.mxu0 0
        %2952 = vmatprep.subr.bf16.mxu0 0
        %2953 = vmatpush1.bf16.msra.mxu0 0
        %2954 = vmatprep.subr.bf16.mxu0 0
        %2955 = vmatpush1.bf16.msra.mxu0 0
        %2956 = vmatprep.subr.bf16.mxu0 0
        %2957 = vmatpush1.bf16.msra.mxu0 0
        %2958 = vmatprep.subr.bf16.mxu0 0
        %2959 = vmatpush1.bf16.msra.mxu0 0
        %2960 = vmatprep.subr.bf16.mxu0 0
        %2961 = vmatpush1.bf16.msra.mxu0 0
        %2962 = vmatprep.subr.bf16.mxu0 0
        %2963 = vmatpush1.bf16.msra.mxu0 0
        %2964 = vmatprep.subr.bf16.mxu0 0
        %2965 = vmatpush1.bf16.msra.mxu0 0
        %2966 = vmatprep.subr.bf16.mxu0 0
        %2967 = vmatpush1.bf16.msra.mxu0 0
        %2968 = vmatprep.subr.bf16.mxu0 0
        %2969 = vmatpush1.bf16.msra.mxu0 0
        %2970 = vmatprep.subr.bf16.mxu0 0
        %2971 = vmatpush1.bf16.msra.mxu0 0
        %2972 = vmatprep.mubr.bf16.mxu0 0
        %2973 = vmatmul.mubr.bf16.gmra.mrb[0].mxu0 %v2911
        %v2974 = vpop.f32.mrb[0].mxu0
        %v2975 = vadd.f32 0.0, %v2974
        %v2976 = vpop.f32.mrb[0].mxu0
        %v2977 = vpop.f32.mrb[0].mxu0
        %v2978 = vadd.f32 0.0, %v2977
        %v2979 = vpop.f32.mrb[0].mxu0
        %2980 = vmatprep.mubr.bf16.mxu0 0
        %2981 = vmatmul.mubr.bf16.gmra.mrb[0].mxu0 %v2914
        %v2982 = vpop.f32.mrb[0].mxu0
        %v2983 = vadd.f32 0.0, %v2982
        %v2984 = vpop.f32.mrb[0].mxu0
        %v2985 = vpop.f32.mrb[0].mxu0
        %v2986 = vadd.f32 0.0, %v2985
        %v2987 = vpop.f32.mrb[0].mxu0
        %2988 = vmatprep.mubr.bf16.mxu0 0
        %2989 = vmatmul.mubr.bf16.gmra.mrb[0].mxu0 %v2917
        %v2990 = vpop.f32.mrb[0].mxu0
        %v2991 = vadd.f32 0.0, %v2990
        %v2992 = vpop.f32.mrb[0].mxu0
        %v2993 = vpop.f32.mrb[0].mxu0
        %v2994 = vadd.f32 0.0, %v2993
        %v2995 = vpop.f32.mrb[0].mxu0
        %2996 = vmatprep.mubr.bf16.mxu0 0
        %2997 = vmatmul.mubr.bf16.gmra.mrb[0].mxu0 %v2920
        %v2998 = vpop.f32.mrb[0].mxu0
        %v2999 = vadd.f32 0.0, %v2998
        %v3000 = vpop.f32.mrb[0].mxu0
        %v3001 = vpop.f32.mrb[0].mxu0
        %v3002 = vadd.f32 0.0, %v3001
        %v3003 = vpop.f32.mrb[0].mxu0
        %3004 = vmatprep.mubr.bf16.mxu0 0
        %3005 = vmatmul.mubr.bf16.gmra.mrb[0].mxu0 %v2923
        %v3006 = vpop.f32.mrb[0].mxu0
        %v3007 = vadd.f32 0.0, %v3006
        %v3008 = vpop.f32.mrb[0].mxu0
        %v3009 = vpop.f32.mrb[0].mxu0
        %v3010 = vadd.f32 0.0, %v3009
        %v3011 = vpop.f32.mrb[0].mxu0
        %3012 = vmatprep.mubr.bf16.mxu0 0
        %3013 = vmatmul.mubr.bf16.gmra.mrb[0].mxu0 %v2926
        %v3014 = vpop.f32.mrb[0].mxu0
        %v3015 = vadd.f32 0.0, %v3014
        %v3016 = vpop.f32.mrb[0].mxu0
        %v3017 = vpop.f32.mrb[0].mxu0
        %v3018 = vadd.f32 0.0, %v3017
        %v3019 = vpop.f32.mrb[0].mxu0
        %3020 = vmatprep.mubr.bf16.mxu0 0
        %3021 = vmatmul.mubr.bf16.gmra.mrb[0].mxu0 %v2929
        %v3022 = vpop.f32.mrb[0].mxu0
        %v3023 = vadd.f32 0.0, %v3022
        %v3024 = vpop.f32.mrb[0].mxu0
        %v3025 = vpop.f32.mrb[0].mxu0
        %v3026 = vadd.f32 0.0, %v3025
        %v3027 = vpop.f32.mrb[0].mxu0
        %3028 = vmatprep.mubr.bf16.mxu0 0
        %3029 = vmatmul.mubr.bf16.gmra.mrb[0].mxu0 %v2932
        %v3030 = vpop.f32.mrb[0].mxu0
        %v3031 = vadd.f32 0.0, %v3030
        %v3032 = vpop.f32.mrb[0].mxu0
        %v3033 = vpop.f32.mrb[0].mxu0
        %v3034 = vadd.f32 0.0, %v3033
        %v3035 = vpop.f32.mrb[0].mxu0
        %3036 = vmatprep.mubr.bf16.mxu0 0
        %3037 = vmatmul.mubr.bf16.gmra.mrb[0].mxu0 %v2935
        %v3038 = vpop.f32.mrb[0].mxu0
        %v3039 = vadd.f32 0.0, %v3038
        %v3040 = vpop.f32.mrb[0].mxu0
        %v3041 = vpop.f32.mrb[0].mxu0
        %v3042 = vadd.f32 0.0, %v3041
        %v3043 = vpop.f32.mrb[0].mxu0
        %3044 = vdwg.mxu0
        %v3045 = vadd.f32 %v2861, %v2975
        %v3046 = vadd.f32 %v2862, %v2978
        %v3047 = vadd.f32 %v2863, %v2983
        %v3048 = vadd.f32 %v2864, %v2986
        %v3049 = vadd.f32 %v2865, %v2991
        %v3050 = vadd.f32 %v2866, %v2994
        %v3051 = vadd.f32 %v2867, %v2999
        %v3052 = vadd.f32 %v2868, %v3002
        %v3053 = vadd.f32 %v2869, %v3007
        %v3054 = vadd.f32 %v2870, %v3010
        %v3055 = vadd.f32 %v2871, %v3015
        %v3056 = vadd.f32 %v2872, %v3018
        %v3057 = vadd.f32 %v2873, %v3023
        %v3058 = vadd.f32 %v2874, %v3026
        %v3059 = vadd.f32 %v2875, %v3031
        %v3060 = vadd.f32 %v2876, %v3034
        %v3061 = vadd.f32 %v2877, %v3039
        %v3062 = vadd.f32 %v2878, %v3042
        %v3063 = vld [vmem:[#allocation12] sm:$0x1]
        %v3065 = vlaneseq
        %v3066 = vshrl.u32 %v3065, 7
        %v3067 = vsub.s32 0, %v3066
        %v3068 = vrot.slane %v3063, %v3067
        %v3070 = vmul.f32 %v3045, %v3068
        %v3071 = vmul.f32 %v3046, %v3068
        %v3072 = vmul.f32 %v3047, %v3068
        %v3073 = vmul.f32 %v3048, %v3068
        %v3074 = vmul.f32 %v3049, %v3068
        %v3075 = vmul.f32 %v3050, %v3068
        %v3076 = vmul.f32 %v3051, %v3068
        %v3077 = vmul.f32 %v3052, %v3068
        %v3078 = vmul.f32 %v3053, %v3068
        %v3079 = vmul.f32 %v3054, %v3068
        %v3080 = vmul.f32 %v3055, %v3068
        %v3081 = vmul.f32 %v3056, %v3068
        %v3082 = vmul.f32 %v3057, %v3068
        %v3083 = vmul.f32 %v3058, %v3068
        %v3084 = vmul.f32 %v3059, %v3068
        %v3085 = vmul.f32 %v3060, %v3068
        %v3086 = vmul.f32 %v3061, %v3068
        %v3087 = vmul.f32 %v3062, %v3068
        %v3088 = vld [vmem:[#allocation14] sm:$0x1]
        %v3090 = vlaneseq
        %v3091 = vshrl.u32 %v3090, 7
        %v3092 = vsub.s32 0, %v3091
        %v3093 = vrot.slane %v3088, %v3092
        %v3095 = vadd.f32 %v3070, %v3093
        %v3096 = vadd.f32 %v3071, %v3093
        %v3097 = vadd.f32 %v3072, %v3093
        %v3098 = vadd.f32 %v3073, %v3093
        %v3099 = vadd.f32 %v3074, %v3093
        %v3100 = vadd.f32 %v3075, %v3093
        %v3101 = vadd.f32 %v3076, %v3093
        %v3102 = vadd.f32 %v3077, %v3093
        %v3103 = vadd.f32 %v3078, %v3093
        %v3104 = vadd.f32 %v3079, %v3093
        %v3105 = vadd.f32 %v3080, %v3093
        %v3106 = vadd.f32 %v3081, %v3093
        %v3107 = vadd.f32 %v3082, %v3093
        %v3108 = vadd.f32 %v3083, %v3093
        %v3109 = vadd.f32 %v3084, %v3093
        %v3110 = vadd.f32 %v3085, %v3093
        %v3111 = vadd.f32 %v3086, %v3093
        %v3112 = vadd.f32 %v3087, %v3093
        %v3113 = vmax.f32 %v3095, 0.0
        %v3114 = vmax.f32 %v3096, 0.0
        %v3115 = vmax.f32 %v3097, 0.0
        %v3116 = vmax.f32 %v3098, 0.0
        %v3117 = vmax.f32 %v3099, 0.0
        %v3118 = vmax.f32 %v3100, 0.0
        %v3119 = vmax.f32 %v3101, 0.0
        %v3120 = vmax.f32 %v3102, 0.0
        %v3121 = vmax.f32 %v3103, 0.0
        %v3122 = vmax.f32 %v3104, 0.0
        %v3123 = vmax.f32 %v3105, 0.0
        %v3124 = vmax.f32 %v3106, 0.0
        %v3125 = vmax.f32 %v3107, 0.0
        %v3126 = vmax.f32 %v3108, 0.0
        %v3127 = vmax.f32 %v3109, 0.0
        %v3128 = vmax.f32 %v3110, 0.0
        %v3129 = vmax.f32 %v3111, 0.0
        %v3130 = vmax.f32 %v3112, 0.0
        %v3131 = vpack.c.bf16 %v3114, %v3113
        %v3132 = vpack.c.bf16 %v3116, %v3115
        %v3133 = vpack.c.bf16 %v3118, %v3117
        %v3134 = vpack.c.bf16 %v3120, %v3119
        %v3135 = vpack.c.bf16 %v3122, %v3121
        %v3136 = vpack.c.bf16 %v3124, %v3123
        %v3137 = vpack.c.bf16 %v3126, %v3125
        %v3138 = vpack.c.bf16 %v3128, %v3127
        %v3139 = vpack.c.bf16 %v3130, %v3129
        %v3140 = vld [vmem:[#allocation15] sm:$0x3]
        %v3142 = vsel %vm1503, %v3131, 0
        %v3145 = vsel %vm1503, %v3132, 0
        %v3148 = vsel %vm1503, %v3133, 0
        %v3151 = vsel %vm1503, %v3134, 0
        %v3154 = vsel %vm1503, %v3135, 0
        %v3157 = vsel %vm1503, %v3136, 0
        %v3160 = vsel %vm1503, %v3137, 0
        %v3163 = vsel %vm1503, %v3138, 0
        %v3166 = vsel %vm1503, %v3139, 0
        %v3169 = vsel %vm1531, %v3140, 0
        %3171 = vmatprep.subr.bf16.mxu0 0
        %3172 = vmatpush1.bf16.msra.mxu0 %v3169
        %3173 = vmatprep.subr.bf16.mxu0 0
        %3174 = vmatpush1.bf16.msra.mxu0 0
        %3175 = vmatprep.subr.bf16.mxu0 0
        %3176 = vmatpush1.bf16.msra.mxu0 0
        %3177 = vmatprep.subr.bf16.mxu0 0
        %3178 = vmatpush1.bf16.msra.mxu0 0
        %3179 = vmatprep.subr.bf16.mxu0 0
        %3180 = vmatpush1.bf16.msra.mxu0 0
        %3181 = vmatprep.subr.bf16.mxu0 0
        %3182 = vmatpush1.bf16.msra.mxu0 0
        %3183 = vmatprep.subr.bf16.mxu0 0
        %3184 = vmatpush1.bf16.msra.mxu0 0
        %3185 = vmatprep.subr.bf16.mxu0 0
        %3186 = vmatpush1.bf16.msra.mxu0 0
        %3187 = vmatprep.subr.bf16.mxu0 0
        %3188 = vmatpush1.bf16.msra.mxu0 0
        %3189 = vmatprep.subr.bf16.mxu0 0
        %3190 = vmatpush1.bf16.msra.mxu0 0
        %3191 = vmatprep.subr.bf16.mxu0 0
        %3192 = vmatpush1.bf16.msra.mxu0 0
        %3193 = vmatprep.subr.bf16.mxu0 0
        %3194 = vmatpush1.bf16.msra.mxu0 0
        %3195 = vmatprep.subr.bf16.mxu0 0
        %3196 = vmatpush1.bf16.msra.mxu0 0
        %3197 = vmatprep.subr.bf16.mxu0 0
        %3198 = vmatpush1.bf16.msra.mxu0 0
        %3199 = vmatprep.subr.bf16.mxu0 0
        %3200 = vmatpush1.bf16.msra.mxu0 0
        %3201 = vmatprep.subr.bf16.mxu0 0
        %3202 = vmatpush1.bf16.msra.mxu0 0
        %3203 = vmatprep.mubr.bf16.mxu0 0
        %3204 = vmatmul.mubr.bf16.gmra.mrb[0].mxu0 %v3142
        %v3205 = vpop.f32.mrb[0].mxu0
        %v3206 = vadd.f32 0.0, %v3205
        %v3207 = vpop.f32.mrb[0].mxu0
        %v3208 = vpop.f32.mrb[0].mxu0
        %v3209 = vadd.f32 0.0, %v3208
        %v3210 = vpop.f32.mrb[0].mxu0
        %3211 = vmatprep.mubr.bf16.mxu0 0
        %3212 = vmatmul.mubr.bf16.gmra.mrb[0].mxu0 %v3145
        %v3213 = vpop.f32.mrb[0].mxu0
        %v3214 = vadd.f32 0.0, %v3213
        %v3215 = vpop.f32.mrb[0].mxu0
        %v3216 = vpop.f32.mrb[0].mxu0
        %v3217 = vadd.f32 0.0, %v3216
        %v3218 = vpop.f32.mrb[0].mxu0
        %3219 = vmatprep.mubr.bf16.mxu0 0
        %3220 = vmatmul.mubr.bf16.gmra.mrb[0].mxu0 %v3148
        %v3221 = vpop.f32.mrb[0].mxu0
        %v3222 = vadd.f32 0.0, %v3221
        %v3223 = vpop.f32.mrb[0].mxu0
        %v3224 = vpop.f32.mrb[0].mxu0
        %v3225 = vadd.f32 0.0, %v3224
        %v3226 = vpop.f32.mrb[0].mxu0
        %3227 = vmatprep.mubr.bf16.mxu0 0
        %3228 = vmatmul.mubr.bf16.gmra.mrb[0].mxu0 %v3151
        %v3229 = vpop.f32.mrb[0].mxu0
        %v3230 = vadd.f32 0.0, %v3229
        %v3231 = vpop.f32.mrb[0].mxu0
        %v3232 = vpop.f32.mrb[0].mxu0
        %v3233 = vadd.f32 0.0, %v3232
        %v3234 = vpop.f32.mrb[0].mxu0
        %3235 = vmatprep.mubr.bf16.mxu0 0
        %3236 = vmatmul.mubr.bf16.gmra.mrb[0].mxu0 %v3154
        %v3237 = vpop.f32.mrb[0].mxu0
        %v3238 = vadd.f32 0.0, %v3237
        %v3239 = vpop.f32.mrb[0].mxu0
        %v3240 = vpop.f32.mrb[0].mxu0
        %v3241 = vadd.f32 0.0, %v3240
        %v3242 = vpop.f32.mrb[0].mxu0
        %3243 = vmatprep.mubr.bf16.mxu0 0
        %3244 = vmatmul.mubr.bf16.gmra.mrb[0].mxu0 %v3157
        %v3245 = vpop.f32.mrb[0].mxu0
        %v3246 = vadd.f32 0.0, %v3245
        %v3247 = vpop.f32.mrb[0].mxu0
        %v3248 = vpop.f32.mrb[0].mxu0
        %v3249 = vadd.f32 0.0, %v3248
        %v3250 = vpop.f32.mrb[0].mxu0
        %3251 = vmatprep.mubr.bf16.mxu0 0
        %3252 = vmatmul.mubr.bf16.gmra.mrb[0].mxu0 %v3160
        %v3253 = vpop.f32.mrb[0].mxu0
        %v3254 = vadd.f32 0.0, %v3253
        %v3255 = vpop.f32.mrb[0].mxu0
        %v3256 = vpop.f32.mrb[0].mxu0
        %v3257 = vadd.f32 0.0, %v3256
        %v3258 = vpop.f32.mrb[0].mxu0
        %3259 = vmatprep.mubr.bf16.mxu0 0
        %3260 = vmatmul.mubr.bf16.gmra.mrb[0].mxu0 %v3163
        %v3261 = vpop.f32.mrb[0].mxu0
        %v3262 = vadd.f32 0.0, %v3261
        %v3263 = vpop.f32.mrb[0].mxu0
        %v3264 = vpop.f32.mrb[0].mxu0
        %v3265 = vadd.f32 0.0, %v3264
        %v3266 = vpop.f32.mrb[0].mxu0
        %3267 = vmatprep.mubr.bf16.mxu0 0
        %3268 = vmatmul.mubr.bf16.gmra.mrb[0].mxu0 %v3166
        %v3269 = vpop.f32.mrb[0].mxu0
        %v3270 = vadd.f32 0.0, %v3269
        %v3271 = vpop.f32.mrb[0].mxu0
        %v3272 = vpop.f32.mrb[0].mxu0
        %v3273 = vadd.f32 0.0, %v3272
        %v3274 = vpop.f32.mrb[0].mxu0
        %3275 = vdwg.mxu0
        %v3276 = vld [vmem:[#allocation17] sm:$0x1]
        %v3278 = vlaneseq
        %v3279 = vshrl.u32 %v3278, 7
        %v3280 = vsub.s32 0, %v3279
        %v3281 = vrot.slane %v3276, %v3280
        %v3283 = vmul.f32 %v3206, %v3281
        %v3284 = vmul.f32 %v3209, %v3281
        %v3285 = vmul.f32 %v3214, %v3281
        %v3286 = vmul.f32 %v3217, %v3281
        %v3287 = vmul.f32 %v3222, %v3281
        %v3288 = vmul.f32 %v3225, %v3281
        %v3289 = vmul.f32 %v3230, %v3281
        %v3290 = vmul.f32 %v3233, %v3281
        %v3291 = vmul.f32 %v3238, %v3281
        %v3292 = vmul.f32 %v3241, %v3281
        %v3293 = vmul.f32 %v3246, %v3281
        %v3294 = vmul.f32 %v3249, %v3281
        %v3295 = vmul.f32 %v3254, %v3281
        %v3296 = vmul.f32 %v3257, %v3281
        %v3297 = vmul.f32 %v3262, %v3281
        %v3298 = vmul.f32 %v3265, %v3281
        %v3299 = vmul.f32 %v3270, %v3281
        %v3300 = vmul.f32 %v3273, %v3281
        %v3301 = vld [vmem:[#allocation18] sm:$0x1]
        %v3303 = vlaneseq
        %v3304 = vshrl.u32 %v3303, 7
        %v3305 = vsub.s32 0, %v3304
        %v3306 = vrot.slane %v3301, %v3305
        %v3308 = vadd.f32 %v3283, %v3306
        %v3309 = vadd.f32 %v3284, %v3306
        %v3310 = vadd.f32 %v3285, %v3306
        %v3311 = vadd.f32 %v3286, %v3306
        %v3312 = vadd.f32 %v3287, %v3306
        %v3313 = vadd.f32 %v3288, %v3306
        %v3314 = vadd.f32 %v3289, %v3306
        %v3315 = vadd.f32 %v3290, %v3306
        %v3316 = vadd.f32 %v3291, %v3306
        %v3317 = vadd.f32 %v3292, %v3306
        %v3318 = vadd.f32 %v3293, %v3306
        %v3319 = vadd.f32 %v3294, %v3306
        %v3320 = vadd.f32 %v3295, %v3306
        %v3321 = vadd.f32 %v3296, %v3306
        %v3322 = vadd.f32 %v3297, %v3306
        %v3323 = vadd.f32 %v3298, %v3306
        %v3324 = vadd.f32 %v3299, %v3306
        %v3325 = vadd.f32 %v3300, %v3306
        %s3326 = scalar_lea.vmem %s436, %s1442 [#allocation3]
        %v3327 = vld [vmem:[%s3326] sm:$0xff]
        %v3328 = vld [vmem:[%s3326 + $0x8] sm:$0xff]
        %v3329 = vld [vmem:[%s3326 + $0x10] sm:$0xff]
        %v3330 = vld [vmem:[%s3326 + $0x18] sm:$0xff]
        %v3331 = vld [vmem:[%s3326 + $0x20] sm:$0xff]
        %v3332 = vld [vmem:[%s3326 + $0x28] sm:$0xff]
        %v3333 = vld [vmem:[%s3326 + $0x30] sm:$0xff]
        %v3334 = vld [vmem:[%s3326 + $0x38] sm:$0xff]
        %v3335 = vld [vmem:[%s3326 + $0x40] sm:$0xff]
        %v3336 = vld [vmem:[%s3326 + $0x48] sm:$0xff]
        %v3337 = vld [vmem:[%s3326 + $0x50] sm:$0xff]
        %v3338 = vld [vmem:[%s3326 + $0x58] sm:$0xff]
        %v3339 = vld [vmem:[%s3326 + $0x60] sm:$0xff]
        %v3340 = vld [vmem:[%s3326 + $0x68] sm:$0xff]
        %v3341 = vld [vmem:[%s3326 + $0x70] sm:$0xff]
        %v3342 = vld [vmem:[%s3326 + $0x78] sm:$0xff]
        %v3343 = vld [vmem:[%s3326 + $0x80] sm:$0xff]
        %v3344 = vld [vmem:[%s3326 + $0x88] sm:$0xff]
        %v3345 = vadd.f32 %v3308, %v3327
        %v3346 = vadd.f32 %v3309, %v3328
        %v3347 = vadd.f32 %v3310, %v3329
        %v3348 = vadd.f32 %v3311, %v3330
        %v3349 = vadd.f32 %v3312, %v3331
        %v3350 = vadd.f32 %v3313, %v3332
        %v3351 = vadd.f32 %v3314, %v3333
        %v3352 = vadd.f32 %v3315, %v3334
        %v3353 = vadd.f32 %v3316, %v3335
        %v3354 = vadd.f32 %v3317, %v3336
        %v3355 = vadd.f32 %v3318, %v3337
        %v3356 = vadd.f32 %v3319, %v3338
        %v3357 = vadd.f32 %v3320, %v3339
        %v3358 = vadd.f32 %v3321, %v3340
        %v3359 = vadd.f32 %v3322, %v3341
        %v3360 = vadd.f32 %v3323, %v3342
        %v3361 = vadd.f32 %v3324, %v3343
        %v3362 = vadd.f32 %v3325, %v3344
        %v3363 = vmax.f32 %v3345, 0.0
        %v3364 = vmax.f32 %v3346, 0.0
        %v3365 = vmax.f32 %v3347, 0.0
        %v3366 = vmax.f32 %v3348, 0.0
        %v3367 = vmax.f32 %v3349, 0.0
        %v3368 = vmax.f32 %v3350, 0.0
        %v3369 = vmax.f32 %v3351, 0.0
        %v3370 = vmax.f32 %v3352, 0.0
        %v3371 = vmax.f32 %v3353, 0.0
        %v3372 = vmax.f32 %v3354, 0.0
        %v3373 = vmax.f32 %v3355, 0.0
        %v3374 = vmax.f32 %v3356, 0.0
        %v3375 = vmax.f32 %v3357, 0.0
        %v3376 = vmax.f32 %v3358, 0.0
        %v3377 = vmax.f32 %v3359, 0.0
        %v3378 = vmax.f32 %v3360, 0.0
        %v3379 = vmax.f32 %v3361, 0.0
        %v3380 = vmax.f32 %v3362, 0.0
        %vm3381 = vcmask 130048
        %3382 = vst.msk [vmem:[%s508] sm:$0xff] %vm3381, %v3363
        %3383 = vst.msk [vmem:[%s508 + $0x8] sm:$0xff] %vm3381, %v3364
        %3384 = vst.msk [vmem:[%s508 + $0x10] sm:$0xff] %vm3381, %v3365
        %3385 = vst.msk [vmem:[%s508 + $0x18] sm:$0xff] %vm3381, %v3366
        %3386 = vst.msk [vmem:[%s508 + $0x20] sm:$0xff] %vm3381, %v3367
        %3387 = vst.msk [vmem:[%s508 + $0x28] sm:$0xff] %vm3381, %v3368
        %3388 = vst.msk [vmem:[%s508 + $0x30] sm:$0xff] %vm3381, %v3369
        %3389 = vst.msk [vmem:[%s508 + $0x38] sm:$0xff] %vm3381, %v3370
        %3390 = vst.msk [vmem:[%s508 + $0x40] sm:$0xff] %vm3381, %v3371
        %3391 = vst.msk [vmem:[%s508 + $0x48] sm:$0xff] %vm3381, %v3372
        %3392 = vst.msk [vmem:[%s508 + $0x50] sm:$0xff] %vm3381, %v3373
        %3393 = vst.msk [vmem:[%s508 + $0x58] sm:$0xff] %vm3381, %v3374
        %3394 = vst.msk [vmem:[%s508 + $0x60] sm:$0xff] %vm3381, %v3375
        %3395 = vst.msk [vmem:[%s508 + $0x68] sm:$0xff] %vm3381, %v3376
        %3396 = vst.msk [vmem:[%s508 + $0x70] sm:$0xff] %vm3381, %v3377
        %3397 = vst.msk [vmem:[%s508 + $0x78] sm:$0xff] %vm3381, %v3378
        %3398 = vst.msk [vmem:[%s508 + $0x80] sm:$0xff] %vm3381, %v3379
        %3399 = vst.msk [vmem:[%s508 + $0x88] sm:$0xff] %vm3381, %v3380
        %s3400 = sand.u32 %s269, 1
        %s3401 = scalar_lea.sflag [#allocation5], %s3400
        %s3402 = sand.u32 %s269, 1
        %s3403 = smul.addr %s3402, 144
        %s3404 = scalar_lea.vmem [#allocation20], %s3403
        // Predicated region
        $region105: #{bottleneck_forward.1} parent=59 // pred_check
          %p3405 = pneg %p279
        $region106: #{bottleneck_forward.1} parent=59 // pred_check_branch
          %3407 = sbr.rel (%p3405) target = $region108
        $region107: #{bottleneck_forward.1} parent=59 // pred_region
          %s3408 = smul.u32 18, %s37
          %s3410 = ssub.s32 2304, 2304
          %3411 = vsyncadd %s3401, %s3410
          %s3412 = smul.addr %s36, 36
          %s3413 = sadd.s32 %s3408, %s3412
          %s3414 = smul.addr %s3413, 128
          %s3415 = scalar_lea.hbm %s10, %s3414
          %s3416 = sshll.u32 %s3404, 4
          %s3417 = int_to_ptr.vmem [resolvable:$true] %s3416
          %3422 = dma.vmem_to_hbm [thread:$0]  %s3417, 2304, %s3415, %s3401, 128, 128, 8
        $region108: #{bottleneck_forward.1} parent=59 // pred_fallthru
          _
      $region60: #{bottleneck_forward.1} parent=5 // pred_fallthru
        _
      %p3423 = scmp.le.s32.totalorder 2, %s27
      // Predicated region
      $region109: #{bottleneck_forward.1} parent=5 // pred_check
        %p3424 = pneg %p3423
      $region110: #{bottleneck_forward.1} parent=5 // pred_check_branch
        %3426 = sbr.rel (%p3424) target = $region112
      $region111: #{bottleneck_forward.1} parent=5 // pred_region
        %s3427 = ssub.s32 %s27, 2
        // Predicated region
        $region113: #{bottleneck_forward.1} parent=111 // pred_check
          %p3428 = pneg %p285
        $region114: #{bottleneck_forward.1} parent=111 // pred_check_branch
          %3430 = sbr.rel (%p3428) target = $region116
        $region115: #{bottleneck_forward.1} parent=111 // pred_region
          %s3431 = sand.u32 %s270, 1
          %s3432 = scalar_lea.sflag [#allocation5], %s3431
          %s3433 = sand.u32 %s270, 1
          %s3434 = smul.addr %s3433, 144
          %s3435 = scalar_lea.vmem [#allocation20], %s3434
          %3436 = dma.done %s3432, 2304
        $region116: #{bottleneck_forward.1} parent=111 // pred_fallthru
          _
      $region112: #{bottleneck_forward.1} parent=5 // pred_fallthru
        _
    $region6: #{bottleneck_forward.1} parent=1 // loop_footer
      %s31 = sadd.s32 1, %s27
    $region7: #{bottleneck_forward.1} parent=1 // loop_footer_branch
      %26 = sbr.rel target = $region3
    $region8: #{bottleneck_forward.1} parent=1 // loop_exit
      _
    %3437 = vsyncpa [#allocation4], 1
    %s3438 = scalar_lea.sflag [#allocation4], 1
    %3439 = vsyncpa %s3438, 1
    %3440 = vsyncpa [#allocation7], 1
    %3441 = vsyncpa [#allocation10], 1
    %3442 = vsyncpa [#allocation13], 1
    %3443 = vsyncpa [#allocation16], 1
    %3444 = vsyncpa [#allocation19], 1
    %3445 = vsyncpa [#allocation5], 1
    %s3446 = scalar_lea.sflag [#allocation5], 1
    %3447 = vsyncpa %s3446, 1

</llo_original>
